<compile_context>
chip_gen: v5e
topology: v5e:2x2
jax: 0.10.0
libtpu: 0.0.40
codegen_flags: <defaults>
</compile_context>

<pallas_src>
import jax
import jax.numpy as jnp
from jax import lax
from jax.experimental import pallas as pl
from jax.experimental.pallas import tpu as pltpu

BLK = 32  # hard-coded in the PyTorch module (stride=32, PixelShuffle(32))


# --------------------------------------------------------------------------
# helpers: tile-size selection
# --------------------------------------------------------------------------
def _pick_tile_nb(nb):
    # prefer MXU-friendly streaming tiles (multiples of 256/128), bounded VMEM
    for t in (512, 256, 128, 64, 32, 16, 8):
        if nb % t == 0:
            return t
    return nb  # small / odd NB: single tile (equal-to-full-dim block)


def _pick_th(H, n_ch, Wp, budget_bytes=6 << 20):
    # largest multiple-of-8 divisor of H whose input strip fits the budget
    max_rows = max(8, budget_bytes // (n_ch * Wp * 4))
    best = None
    for t in range(8, H + 1, 8):
        if H % t == 0 and t <= max_rows:
            best = t
    return best if best is not None else H


# --------------------------------------------------------------------------
# Kernel 1: conv1  (3x3, dim -> 1 channel, pad=1), grid = (N, H-tiles)
# --------------------------------------------------------------------------
def _conv1_kernel(w_ref, b_ref, xm_ref, xh_ref, o_ref, xtile):
    # w_ref : SMEM (dim*9,)  flattened as [c, dh, dw]
    # b_ref : SMEM (1,)
    # xm_ref: VMEM (1, dim, tH, Wp)   main padded row strip
    # xh_ref: VMEM (1, dim, 8,  Wp)   halo rows (next 8 padded rows)
    # o_ref : VMEM (1, 1, tH, W)
    # xtile : VMEM scratch (dim, tH+8, Wp)
    dim = xm_ref.shape[1]
    tH, W = o_ref.shape[2], o_ref.shape[3]

    xtile[:, 0:tH, :] = xm_ref[0]
    xtile[:, tH:tH + 8, :] = xh_ref[0]

    # hoist scalar weight / bias loads out of the tap loops
    ws = [w_ref[i] for i in range(dim * 9)]
    acc = jnp.full((tH, W), b_ref[0], dtype=jnp.float32)
    for c in range(dim):
        for dh in range(3):
            for dw in range(3):
                acc = acc + xtile[c, dh:dh + tH, dw:dw + W] * ws[c * 9 + dh * 3 + dw]
    o_ref[0, 0] = acc.astype(o_ref.dtype)


def conv1_pallas(x, w_flat, b):
    N, dim, H, W = x.shape
    # pad: 1 row top / 7 rows bottom (so the 8-row halo block never runs OOB),
    # 1 column left / right.  TODO(synk): handle padding inside the kernel.
    x_pad = jnp.pad(x, ((0, 0), (0, 0), (1, 7), (1, 1)))
    Hp, Wp = H + 8, W + 2
    tH = _pick_th(H, dim, Wp)
    n_h = H // tH

    cost = pl.CostEstimate(flops=2 * N * dim * 9 * H * W,
                           transcendentals=0,
                           bytes_accessed=4 * (N * dim * Hp * Wp + N * H * W))
    return pl.pallas_call(
        _conv1_kernel,
        out_shape=jax.ShapeDtypeStruct((N, 1, H, W), jnp.float32),
        grid=(N, n_h),
        in_specs=[
            pl.BlockSpec(memory_space=pltpu.MemorySpace.SMEM),
            pl.BlockSpec(memory_space=pltpu.MemorySpace.SMEM),
            pl.BlockSpec((1, dim, tH, Wp), lambda n, i: (n, 0, i, 0)),
            pl.BlockSpec((1, dim, 8, Wp),
                         lambda n, i: (n, 0, (i + 1) * (tH // 8), 0)),
        ],
        out_specs=pl.BlockSpec((1, 1, tH, W), lambda n, i: (n, 0, i, 0)),
        scratch_shapes=[pltpu.VMEM((dim, tH + 8, Wp), jnp.float32)],
        compiler_params=pltpu.CompilerParams(
            dimension_semantics=("parallel", "parallel"),
            vmem_limit_bytes=64 << 20),
        cost_estimate=cost,
    )(w_flat, b, x_pad, x_pad)


# --------------------------------------------------------------------------
# Kernel 2: fused sensing + reconstruction (folded operator), MXU hot path
#   recon = y @ PhiT^T - blocks @ A ,   A = Phi^T @ PhiT^T  (1024 x 1024)
# --------------------------------------------------------------------------
def _sense_kernel(y_ref, blocks_ref, byt_ref, a_ref, o_ref):
    # y      : (TILE, M)
    # blocks : (TILE, 1024)  flattened 32x32 blocks (k = 32*p + q)
    # byt    : (M, 1024)     PhiT^T
    # a      : (1024, 1024)  folded Phi^T @ PhiT^T  (resident, fetched once)
    # o      : (TILE, 1024)  reconstructed block vectors
    yb = jnp.dot(y_ref[...], byt_ref[...], preferred_element_type=jnp.float32)
    xa = jnp.dot(blocks_ref[...], a_ref[...], preferred_element_type=jnp.float32)
    o_ref[...] = (yb - xa).astype(o_ref.dtype)


def sense_pallas(blocks, y_vec, byt, a_mat):
    NB, K = blocks.shape          # K = 1024
    M = y_vec.shape[1]
    tile_nb = _pick_tile_nb(NB)

    cost = pl.CostEstimate(flops=2 * NB * K * K + 2 * NB * M * K,
                           transcendentals=0,
                           bytes_accessed=4 * (2 * NB * K + NB * M + K * K + M * K))
    # TODO(synk): optional bf16 cast of blocks/A (f32 accumulation) for
    # v6e/v7x MXU throughput — changes tolerances, kept f32 here.
    return pl.pallas_call(
        _sense_kernel,
        out_shape=jax.ShapeDtypeStruct((NB, K), jnp.float32),
        grid=(NB // tile_nb,),
        in_specs=[
            pl.BlockSpec((tile_nb, M), lambda i: (i, 0)),
            pl.BlockSpec((tile_nb, K), lambda i: (i, 0)),
            pl.BlockSpec((M, K), lambda i: (0, 0)),
            pl.BlockSpec((K, K), lambda i: (0, 0)),
        ],
        out_specs=pl.BlockSpec((tile_nb, K), lambda i: (i, 0)),
        compiler_params=pltpu.CompilerParams(
            dimension_semantics=("parallel",),
            vmem_limit_bytes=64 << 20),
        cost_estimate=cost,
    )(y_vec, blocks, byt, a_mat)


# --------------------------------------------------------------------------
# Kernel 3: conv2  (3x3, 1 -> dim channels, pad=1), grid = (N, H-tiles)
# --------------------------------------------------------------------------
def _conv2_kernel(w_ref, b_ref, xm_ref, xh_ref, o_ref, xtile):
    # w_ref : SMEM (dim*9,)   flattened as [c, dh, dw]
    # b_ref : SMEM (dim,)
    # xm_ref: VMEM (1, 1, tH, Wp)
    # xh_ref: VMEM (1, 1, 8,  Wp)
    # o_ref : VMEM (1, dim, tH, W)
    # xtile : VMEM scratch (tH+8, Wp)
    dim = o_ref.shape[1]
    tH, W = o_ref.shape[2], o_ref.shape[3]

    xtile[0:tH, :] = xm_ref[0, 0]
    xtile[tH:tH + 8, :] = xh_ref[0, 0]

    # the single input channel gives only 9 tap slabs -> compute once, reuse
    # for every output channel; weight scalars hoisted out of the loop.
    taps = [xtile[dh:dh + tH, dw:dw + W] for dh in range(3) for dw in range(3)]
    ws = [w_ref[i] for i in range(dim * 9)]
    for c in range(dim):
        acc = jnp.full((tH, W), b_ref[c], dtype=jnp.float32)
        for k in range(9):
            acc = acc + taps[k] * ws[c * 9 + k]
        o_ref[0, c] = acc.astype(o_ref.dtype)


def conv2_pallas(x, w_flat, b):
    N, _, H, W = x.shape
    dim = b.shape[0]
    x_pad = jnp.pad(x, ((0, 0), (0, 0), (1, 7), (1, 1)))
    Hp, Wp = H + 8, W + 2
    tH = _pick_th(H, 1, Wp)
    n_h = H // tH

    cost = pl.CostEstimate(flops=2 * N * dim * 9 * H * W,
                           transcendentals=0,
                           bytes_accessed=4 * (N * Hp * Wp + N * dim * H * W))
    return pl.pallas_call(
        _conv2_kernel,
        out_shape=jax.ShapeDtypeStruct((N, dim, H, W), jnp.float32),
        grid=(N, n_h),
        in_specs=[
            pl.BlockSpec(memory_space=pltpu.MemorySpace.SMEM),
            pl.BlockSpec(memory_space=pltpu.MemorySpace.SMEM),
            pl.BlockSpec((1, 1, tH, Wp), lambda n, i: (n, 0, i, 0)),
            pl.BlockSpec((1, 1, 8, Wp),
                         lambda n, i: (n, 0, (i + 1) * (tH // 8), 0)),
        ],
        out_specs=pl.BlockSpec((1, dim, tH, W), lambda n, i: (n, 0, i, 0)),
        scratch_shapes=[pltpu.VMEM((tH + 8, Wp), jnp.float32)],
        compiler_params=pltpu.CompilerParams(
            dimension_semantics=("parallel", "parallel"),
            vmem_limit_bytes=64 << 20),
        cost_estimate=cost,
    )(w_flat, b, x_pad, x_pad)


# --------------------------------------------------------------------------
# PDEM forward
# --------------------------------------------------------------------------
def pdem_forward(x, y, Phi, PhiT, params):
    w1, b1, w2, b2 = params
    N, dim, H, W = x.shape
    M = Phi.shape[0]
    assert H % BLK == 0 and W % BLK == 0, "PDEM requires H, W multiples of 32"
    nbh, nbw = H // BLK, W // BLK

    # conv1: (N, dim, H, W) -> (N, 1, H, W)
    x_pixel = conv1_pallas(x, w1.reshape(-1), b1)

    # block extraction: (N,1,H,W) -> (N*nbh*nbw, 1024), k = 32*p + q per block
    blocks = (x_pixel.reshape(N, nbh, BLK, nbw, BLK)
              .transpose(0, 1, 3, 2, 4)
              .reshape(N * nbh * nbw, BLK * BLK))
    phi_mat = Phi.reshape(M, BLK * BLK)       # (M, 1024)
    phit_mat = PhiT.reshape(BLK * BLK, M)     # (1024, M)
    y_vec = y.transpose(0, 2, 3, 1).reshape(N * nbh * nbw, M)

    # folded operator: recon = y @ PhiT^T - blocks @ (Phi^T @ PhiT^T)
    a_mat = phi_mat.T @ phit_mat.T            # (1024, 1024)
    byt = phit_mat.T                          # (M, 1024)
    recon = sense_pallas(blocks, y_vec, byt, a_mat)

    # PixelShuffle(32): block vectors back to (N, 1, H, W)
    x_pixel2 = (recon.reshape(N, nbh, nbw, BLK, BLK)
                .transpose(0, 1, 3, 2, 4)
                .reshape(N, 1, H, W))

    # conv2: (N, 1, H, W) -> (N, dim, H, W)
    x_delta = conv2_pallas(x_pixel2, w2.reshape(-1), b2)
    return x_delta


# --------------------------------------------------------------------------
# Pure-JAX reference (mirrors the PyTorch forward) for correctness checking
# --------------------------------------------------------------------------
def pdem_reference(x, y, Phi, PhiT, params):
    w1, b1, w2, b2 = params
    dn = ('NCHW', 'OIHW', 'NCHW')
    x_pixel = lax.conv_general_dilated(x, w1, (1, 1), ((1, 1), (1, 1)),
                                       dimension_numbers=dn) + b1.reshape(1, -1, 1, 1)
    phix = lax.conv_general_dilated(x_pixel, Phi, (BLK, BLK), 'VALID',
                                    dimension_numbers=dn)
    delta = y - phix
    xp = lax.conv_general_dilated(delta, PhiT, (1, 1), 'VALID', dimension_numbers=dn)
    N, _, Hn, Wn = xp.shape
    xp = (xp.reshape(N, 1, BLK, BLK, Hn, Wn)
          .transpose(0, 1, 4, 2, 5, 3)
          .reshape(N, 1, Hn * BLK, Wn * BLK))
    out = lax.conv_general_dilated(xp, w2, (1, 1), ((1, 1), (1, 1)),
                                   dimension_numbers=dn) + b2.reshape(1, -1, 1, 1)
    return out


if __name__ == "__main__":
    key = jax.random.PRNGKey(0)
    N, dim, H, W, M = 2, 4, 32, 32, 8   # H, W must be multiples of 32
    ks = jax.random.split(key, 8)

    x = jax.random.normal(ks[0], (N, dim, H, W), jnp.float32)
    y = jax.random.normal(ks[1], (N, M, H // BLK, W // BLK), jnp.float32)
    Phi = jax.random.normal(ks[2], (M, 1, BLK, BLK), jnp.float32) * 0.05
    PhiT = jax.random.normal(ks[3], (BLK * BLK, M, 1, 1), jnp.float32) * 0.05

    w1 = jax.random.normal(ks[4], (1, dim, 3, 3), jnp.float32) * 0.1
    b1 = jax.random.normal(ks[5], (1,), jnp.float32) * 0.1
    w2 = jax.random.normal(ks[6], (dim, 1, 3, 3), jnp.float32) * 0.1
    b2 = jax.random.normal(ks[7], (dim,), jnp.float32) * 0.1
    params = (w1, b1, w2, b2)

    fwd = jax.jit(pdem_forward)
    out = jax.block_until_ready(fwd(x, y, Phi, PhiT, params))
    ref = pdem_reference(x, y, Phi, PhiT, params)

    assert out.shape == (N, dim, H, W), out.shape
    max_err = float(jnp.max(jnp.abs(out - ref)))
    assert jnp.allclose(out, ref, atol=2e-4, rtol=2e-4), max_err
    print("KERNEL_OK")
</pallas_src>

<mosaic_0001>
module attributes {stable_mosaic.version = 11 : i64} {
  func.func @_conv1_kernel(%arg0: i32, %arg1: i32, %arg2: memref<36xf32, #tpu.memory_space<smem>>, %arg3: memref<1xf32, #tpu.memory_space<smem>>, %arg4: memref<1x4x32x34xf32, #tpu.memory_space<vmem>>, %arg5: memref<1x4x8x34xf32, #tpu.memory_space<vmem>>, %arg6: memref<1x1x32x32xf32, #tpu.memory_space<vmem>>, %arg7: memref<4x40x34xf32, #tpu.memory_space<vmem>>) attributes {dimension_semantics = [#tpu.dimension_semantics<parallel>, #tpu.dimension_semantics<parallel>], iteration_bounds = array<i64: 2, 1>, scalar_prefetch = 0 : i64, scratch_operands = 1 : i64, tpu.core_type = #tpu.core_type<tc>, window_params = [{transform_indices = @transform_0, window_bounds = array<i64: 36>}, {transform_indices = @transform_1, window_bounds = array<i64: 1>}, {transform_indices = @transform_2, window_bounds = array<i64: 1, 4, 32, 34>}, {transform_indices = @transform_3, window_bounds = array<i64: 1, 4, 8, 34>}, {transform_indices = @transform_4, window_bounds = array<i64: 1, 1, 32, 32>}]} {
    %c0 = arith.constant 0 : index
    %c0_0 = arith.constant 0 : index
    %c0_1 = arith.constant 0 : index
    %c0_2 = arith.constant 0 : index
    %0 = vector.load %arg4[%c0, %c0_0, %c0_1, %c0_2] : memref<1x4x32x34xf32, #tpu.memory_space<vmem>>, vector<1x4x32x34xf32>
    %1 = vector.shape_cast %0 : vector<1x4x32x34xf32> to vector<4x32x34xf32>
    %c0_3 = arith.constant 0 : index
    %c0_4 = arith.constant 0 : index
    %c0_5 = arith.constant 0 : index
    %2 = vector.load %arg7[%c0_3, %c0_4, %c0_5] : memref<4x40x34xf32, #tpu.memory_space<vmem>>, vector<4x32x34xf32>
    tpu.vector_store %arg7[%c0_3, %c0_4, %c0_5], %1 {strides = array<i32>} : memref<4x40x34xf32, #tpu.memory_space<vmem>>, vector<4x32x34xf32>,
    %c0_6 = arith.constant 0 : index
    %c0_7 = arith.constant 0 : index
    %c0_8 = arith.constant 0 : index
    %c0_9 = arith.constant 0 : index
    %3 = vector.load %arg5[%c0_6, %c0_7, %c0_8, %c0_9] : memref<1x4x8x34xf32, #tpu.memory_space<vmem>>, vector<1x4x8x34xf32>
    %4 = vector.shape_cast %3 : vector<1x4x8x34xf32> to vector<4x8x34xf32>
    %c0_10 = arith.constant 0 : index
    %c32 = arith.constant 32 : index
    %c0_11 = arith.constant 0 : index
    %5 = vector.load %arg7[%c0_10, %c32, %c0_11] : memref<4x40x34xf32, #tpu.memory_space<vmem>>, vector<4x8x34xf32>
    tpu.vector_store %arg7[%c0_10, %c32, %c0_11], %4 {strides = array<i32>} : memref<4x40x34xf32, #tpu.memory_space<vmem>>, vector<4x8x34xf32>,
    %c0_12 = arith.constant 0 : index
    %6 = memref.load %arg2[%c0_12] : memref<36xf32, #tpu.memory_space<smem>>
    %c1 = arith.constant 1 : index
    %7 = memref.load %arg2[%c1] : memref<36xf32, #tpu.memory_space<smem>>
    %c2 = arith.constant 2 : index
    %8 = memref.load %arg2[%c2] : memref<36xf32, #tpu.memory_space<smem>>
    %c3 = arith.constant 3 : index
    %9 = memref.load %arg2[%c3] : memref<36xf32, #tpu.memory_space<smem>>
    %c4 = arith.constant 4 : index
    %10 = memref.load %arg2[%c4] : memref<36xf32, #tpu.memory_space<smem>>
    %c5 = arith.constant 5 : index
    %11 = memref.load %arg2[%c5] : memref<36xf32, #tpu.memory_space<smem>>
    %c6 = arith.constant 6 : index
    %12 = memref.load %arg2[%c6] : memref<36xf32, #tpu.memory_space<smem>>
    %c7 = arith.constant 7 : index
    %13 = memref.load %arg2[%c7] : memref<36xf32, #tpu.memory_space<smem>>
    %c8 = arith.constant 8 : index
    %14 = memref.load %arg2[%c8] : memref<36xf32, #tpu.memory_space<smem>>
    %c9 = arith.constant 9 : index
    %15 = memref.load %arg2[%c9] : memref<36xf32, #tpu.memory_space<smem>>
    %c10 = arith.constant 10 : index
    %16 = memref.load %arg2[%c10] : memref<36xf32, #tpu.memory_space<smem>>
    %c11 = arith.constant 11 : index
    %17 = memref.load %arg2[%c11] : memref<36xf32, #tpu.memory_space<smem>>
    %c12 = arith.constant 12 : index
    %18 = memref.load %arg2[%c12] : memref<36xf32, #tpu.memory_space<smem>>
    %c13 = arith.constant 13 : index
    %19 = memref.load %arg2[%c13] : memref<36xf32, #tpu.memory_space<smem>>
    %c14 = arith.constant 14 : index
    %20 = memref.load %arg2[%c14] : memref<36xf32, #tpu.memory_space<smem>>
    %c15 = arith.constant 15 : index
    %21 = memref.load %arg2[%c15] : memref<36xf32, #tpu.memory_space<smem>>
    %c16 = arith.constant 16 : index
    %22 = memref.load %arg2[%c16] : memref<36xf32, #tpu.memory_space<smem>>
    %c17 = arith.constant 17 : index
    %23 = memref.load %arg2[%c17] : memref<36xf32, #tpu.memory_space<smem>>
    %c18 = arith.constant 18 : index
    %24 = memref.load %arg2[%c18] : memref<36xf32, #tpu.memory_space<smem>>
    %c19 = arith.constant 19 : index
    %25 = memref.load %arg2[%c19] : memref<36xf32, #tpu.memory_space<smem>>
    %c20 = arith.constant 20 : index
    %26 = memref.load %arg2[%c20] : memref<36xf32, #tpu.memory_space<smem>>
    %c21 = arith.constant 21 : index
    %27 = memref.load %arg2[%c21] : memref<36xf32, #tpu.memory_space<smem>>
    %c22 = arith.constant 22 : index
    %28 = memref.load %arg2[%c22] : memref<36xf32, #tpu.memory_space<smem>>
    %c23 = arith.constant 23 : index
    %29 = memref.load %arg2[%c23] : memref<36xf32, #tpu.memory_space<smem>>
    %c24 = arith.constant 24 : index
    %30 = memref.load %arg2[%c24] : memref<36xf32, #tpu.memory_space<smem>>
    %c25 = arith.constant 25 : index
    %31 = memref.load %arg2[%c25] : memref<36xf32, #tpu.memory_space<smem>>
    %c26 = arith.constant 26 : index
    %32 = memref.load %arg2[%c26] : memref<36xf32, #tpu.memory_space<smem>>
    %c27 = arith.constant 27 : index
    %33 = memref.load %arg2[%c27] : memref<36xf32, #tpu.memory_space<smem>>
    %c28 = arith.constant 28 : index
    %34 = memref.load %arg2[%c28] : memref<36xf32, #tpu.memory_space<smem>>
    %c29 = arith.constant 29 : index
    %35 = memref.load %arg2[%c29] : memref<36xf32, #tpu.memory_space<smem>>
    %c30 = arith.constant 30 : index
    %36 = memref.load %arg2[%c30] : memref<36xf32, #tpu.memory_space<smem>>
    %c31 = arith.constant 31 : index
    %37 = memref.load %arg2[%c31] : memref<36xf32, #tpu.memory_space<smem>>
    %c32_13 = arith.constant 32 : index
    %38 = memref.load %arg2[%c32_13] : memref<36xf32, #tpu.memory_space<smem>>
    %c33 = arith.constant 33 : index
    %39 = memref.load %arg2[%c33] : memref<36xf32, #tpu.memory_space<smem>>
    %c34 = arith.constant 34 : index
    %40 = memref.load %arg2[%c34] : memref<36xf32, #tpu.memory_space<smem>>
    %c35 = arith.constant 35 : index
    %41 = memref.load %arg2[%c35] : memref<36xf32, #tpu.memory_space<smem>>
    %c0_14 = arith.constant 0 : index
    %42 = memref.load %arg3[%c0_14] : memref<1xf32, #tpu.memory_space<smem>>
    %43 = vector.broadcast %42 : f32 to vector<32x32xf32>
    %c0_15 = arith.constant 0 : index
    %c0_16 = arith.constant 0 : index
    %c0_17 = arith.constant 0 : index
    %44 = vector.load %arg7[%c0_15, %c0_16, %c0_17] : memref<4x40x34xf32, #tpu.memory_space<vmem>>, vector<1x32x32xf32>
    %45 = vector.shape_cast %44 : vector<1x32x32xf32> to vector<32x32xf32>
    %46 = vector.broadcast %6 : f32 to vector<32x32xf32>
    %47 = arith.mulf %45, %46 : vector<32x32xf32>
    %48 = arith.addf %43, %47 : vector<32x32xf32>
    %c0_18 = arith.constant 0 : index
    %c0_19 = arith.constant 0 : index
    %c1_20 = arith.constant 1 : index
    %49 = vector.load %arg7[%c0_18, %c0_19, %c1_20] : memref<4x40x34xf32, #tpu.memory_space<vmem>>, vector<1x32x32xf32>
    %50 = vector.shape_cast %49 : vector<1x32x32xf32> to vector<32x32xf32>
    %51 = vector.broadcast %7 : f32 to vector<32x32xf32>
    %52 = arith.mulf %50, %51 : vector<32x32xf32>
    %53 = arith.addf %48, %52 : vector<32x32xf32>
    %c0_21 = arith.constant 0 : index
    %c0_22 = arith.constant 0 : index
    %c2_23 = arith.constant 2 : index
    %54 = vector.load %arg7[%c0_21, %c0_22, %c2_23] : memref<4x40x34xf32, #tpu.memory_space<vmem>>, vector<1x32x32xf32>
    %55 = vector.shape_cast %54 : vector<1x32x32xf32> to vector<32x32xf32>
    %56 = vector.broadcast %8 : f32 to vector<32x32xf32>
    %57 = arith.mulf %55, %56 : vector<32x32xf32>
    %58 = arith.addf %53, %57 : vector<32x32xf32>
    %c0_24 = arith.constant 0 : index
    %c1_25 = arith.constant 1 : index
    %c0_26 = arith.constant 0 : index
    %59 = vector.load %arg7[%c0_24, %c1_25, %c0_26] : memref<4x40x34xf32, #tpu.memory_space<vmem>>, vector<1x32x32xf32>
    %60 = vector.shape_cast %59 : vector<1x32x32xf32> to vector<32x32xf32>
    %61 = vector.broadcast %9 : f32 to vector<32x32xf32>
    %62 = arith.mulf %60, %61 : vector<32x32xf32>
    %63 = arith.addf %58, %62 : vector<32x32xf32>
    %c0_27 = arith.constant 0 : index
    %c1_28 = arith.constant 1 : index
    %c1_29 = arith.constant 1 : index
    %64 = vector.load %arg7[%c0_27, %c1_28, %c1_29] : memref<4x40x34xf32, #tpu.memory_space<vmem>>, vector<1x32x32xf32>
    %65 = vector.shape_cast %64 : vector<1x32x32xf32> to vector<32x32xf32>
    %66 = vector.broadcast %10 : f32 to vector<32x32xf32>
    %67 = arith.mulf %65, %66 : vector<32x32xf32>
    %68 = arith.addf %63, %67 : vector<32x32xf32>
    %c0_30 = arith.constant 0 : index
    %c1_31 = arith.constant 1 : index
    %c2_32 = arith.constant 2 : index
    %69 = vector.load %arg7[%c0_30, %c1_31, %c2_32] : memref<4x40x34xf32, #tpu.memory_space<vmem>>, vector<1x32x32xf32>
    %70 = vector.shape_cast %69 : vector<1x32x32xf32> to vector<32x32xf32>
    %71 = vector.broadcast %11 : f32 to vector<32x32xf32>
    %72 = arith.mulf %70, %71 : vector<32x32xf32>
    %73 = arith.addf %68, %72 : vector<32x32xf32>
    %c0_33 = arith.constant 0 : index
    %c2_34 = arith.constant 2 : index
    %c0_35 = arith.constant 0 : index
    %74 = vector.load %arg7[%c0_33, %c2_34, %c0_35] : memref<4x40x34xf32, #tpu.memory_space<vmem>>, vector<1x32x32xf32>
    %75 = vector.shape_cast %74 : vector<1x32x32xf32> to vector<32x32xf32>
    %76 = vector.broadcast %12 : f32 to vector<32x32xf32>
    %77 = arith.mulf %75, %76 : vector<32x32xf32>
    %78 = arith.addf %73, %77 : vector<32x32xf32>
    %c0_36 = arith.constant 0 : index
    %c2_37 = arith.constant 2 : index
    %c1_38 = arith.constant 1 : index
    %79 = vector.load %arg7[%c0_36, %c2_37, %c1_38] : memref<4x40x34xf32, #tpu.memory_space<vmem>>, vector<1x32x32xf32>
    %80 = vector.shape_cast %79 : vector<1x32x32xf32> to vector<32x32xf32>
    %81 = vector.broadcast %13 : f32 to vector<32x32xf32>
    %82 = arith.mulf %80, %81 : vector<32x32xf32>
    %83 = arith.addf %78, %82 : vector<32x32xf32>
    %c0_39 = arith.constant 0 : index
    %c2_40 = arith.constant 2 : index
    %c2_41 = arith.constant 2 : index
    %84 = vector.load %arg7[%c0_39, %c2_40, %c2_41] : memref<4x40x34xf32, #tpu.memory_space<vmem>>, vector<1x32x32xf32>
    %85 = vector.shape_cast %84 : vector<1x32x32xf32> to vector<32x32xf32>
    %86 = vector.broadcast %14 : f32 to vector<32x32xf32>
    %87 = arith.mulf %85, %86 : vector<32x32xf32>
    %88 = arith.addf %83, %87 : vector<32x32xf32>
    %c1_42 = arith.constant 1 : index
    %c0_43 = arith.constant 0 : index
    %c0_44 = arith.constant 0 : index
    %89 = vector.load %arg7[%c1_42, %c0_43, %c0_44] : memref<4x40x34xf32, #tpu.memory_space<vmem>>, vector<1x32x32xf32>
    %90 = vector.shape_cast %89 : vector<1x32x32xf32> to vector<32x32xf32>
    %91 = vector.broadcast %15 : f32 to vector<32x32xf32>
    %92 = arith.mulf %90, %91 : vector<32x32xf32>
    %93 = arith.addf %88, %92 : vector<32x32xf32>
    %c1_45 = arith.constant 1 : index
    %c0_46 = arith.constant 0 : index
    %c1_47 = arith.constant 1 : index
    %94 = vector.load %arg7[%c1_45, %c0_46, %c1_47] : memref<4x40x34xf32, #tpu.memory_space<vmem>>, vector<1x32x32xf32>
    %95 = vector.shape_cast %94 : vector<1x32x32xf32> to vector<32x32xf32>
    %96 = vector.broadcast %16 : f32 to vector<32x32xf32>
    %97 = arith.mulf %95, %96 : vector<32x32xf32>
    %98 = arith.addf %93, %97 : vector<32x32xf32>
    %c1_48 = arith.constant 1 : index
    %c0_49 = arith.constant 0 : index
    %c2_50 = arith.constant 2 : index
    %99 = vector.load %arg7[%c1_48, %c0_49, %c2_50] : memref<4x40x34xf32, #tpu.memory_space<vmem>>, vector<1x32x32xf32>
    %100 = vector.shape_cast %99 : vector<1x32x32xf32> to vector<32x32xf32>
    %101 = vector.broadcast %17 : f32 to vector<32x32xf32>
    %102 = arith.mulf %100, %101 : vector<32x32xf32>
    %103 = arith.addf %98, %102 : vector<32x32xf32>
    %c1_51 = arith.constant 1 : index
    %c1_52 = arith.constant 1 : index
    %c0_53 = arith.constant 0 : index
    %104 = vector.load %arg7[%c1_51, %c1_52, %c0_53] : memref<4x40x34xf32, #tpu.memory_space<vmem>>, vector<1x32x32xf32>
    %105 = vector.shape_cast %104 : vector<1x32x32xf32> to vector<32x32xf32>
    %106 = vector.broadcast %18 : f32 to vector<32x32xf32>
    %107 = arith.mulf %105, %106 : vector<32x32xf32>
    %108 = arith.addf %103, %107 : vector<32x32xf32>
    %c1_54 = arith.constant 1 : index
    %c1_55 = arith.constant 1 : index
    %c1_56 = arith.constant 1 : index
    %109 = vector.load %arg7[%c1_54, %c1_55, %c1_56] : memref<4x40x34xf32, #tpu.memory_space<vmem>>, vector<1x32x32xf32>
    %110 = vector.shape_cast %109 : vector<1x32x32xf32> to vector<32x32xf32>
    %111 = vector.broadcast %19 : f32 to vector<32x32xf32>
    %112 = arith.mulf %110, %111 : vector<32x32xf32>
    %113 = arith.addf %108, %112 : vector<32x32xf32>
    %c1_57 = arith.constant 1 : index
    %c1_58 = arith.constant 1 : index
    %c2_59 = arith.constant 2 : index
    %114 = vector.load %arg7[%c1_57, %c1_58, %c2_59] : memref<4x40x34xf32, #tpu.memory_space<vmem>>, vector<1x32x32xf32>
    %115 = vector.shape_cast %114 : vector<1x32x32xf32> to vector<32x32xf32>
    %116 = vector.broadcast %20 : f32 to vector<32x32xf32>
    %117 = arith.mulf %115, %116 : vector<32x32xf32>
    %118 = arith.addf %113, %117 : vector<32x32xf32>
    %c1_60 = arith.constant 1 : index
    %c2_61 = arith.constant 2 : index
    %c0_62 = arith.constant 0 : index
    %119 = vector.load %arg7[%c1_60, %c2_61, %c0_62] : memref<4x40x34xf32, #tpu.memory_space<vmem>>, vector<1x32x32xf32>
    %120 = vector.shape_cast %119 : vector<1x32x32xf32> to vector<32x32xf32>
    %121 = vector.broadcast %21 : f32 to vector<32x32xf32>
    %122 = arith.mulf %120, %121 : vector<32x32xf32>
    %123 = arith.addf %118, %122 : vector<32x32xf32>
    %c1_63 = arith.constant 1 : index
    %c2_64 = arith.constant 2 : index
    %c1_65 = arith.constant 1 : index
    %124 = vector.load %arg7[%c1_63, %c2_64, %c1_65] : memref<4x40x34xf32, #tpu.memory_space<vmem>>, vector<1x32x32xf32>
    %125 = vector.shape_cast %124 : vector<1x32x32xf32> to vector<32x32xf32>
    %126 = vector.broadcast %22 : f32 to vector<32x32xf32>
    %127 = arith.mulf %125, %126 : vector<32x32xf32>
    %128 = arith.addf %123, %127 : vector<32x32xf32>
    %c1_66 = arith.constant 1 : index
    %c2_67 = arith.constant 2 : index
    %c2_68 = arith.constant 2 : index
    %129 = vector.load %arg7[%c1_66, %c2_67, %c2_68] : memref<4x40x34xf32, #tpu.memory_space<vmem>>, vector<1x32x32xf32>
    %130 = vector.shape_cast %129 : vector<1x32x32xf32> to vector<32x32xf32>
    %131 = vector.broadcast %23 : f32 to vector<32x32xf32>
    %132 = arith.mulf %130, %131 : vector<32x32xf32>
    %133 = arith.addf %128, %132 : vector<32x32xf32>
    %c2_69 = arith.constant 2 : index
    %c0_70 = arith.constant 0 : index
    %c0_71 = arith.constant 0 : index
    %134 = vector.load %arg7[%c2_69, %c0_70, %c0_71] : memref<4x40x34xf32, #tpu.memory_space<vmem>>, vector<1x32x32xf32>
    %135 = vector.shape_cast %134 : vector<1x32x32xf32> to vector<32x32xf32>
    %136 = vector.broadcast %24 : f32 to vector<32x32xf32>
    %137 = arith.mulf %135, %136 : vector<32x32xf32>
    %138 = arith.addf %133, %137 : vector<32x32xf32>
    %c2_72 = arith.constant 2 : index
    %c0_73 = arith.constant 0 : index
    %c1_74 = arith.constant 1 : index
    %139 = vector.load %arg7[%c2_72, %c0_73, %c1_74] : memref<4x40x34xf32, #tpu.memory_space<vmem>>, vector<1x32x32xf32>
    %140 = vector.shape_cast %139 : vector<1x32x32xf32> to vector<32x32xf32>
    %141 = vector.broadcast %25 : f32 to vector<32x32xf32>
    %142 = arith.mulf %140, %141 : vector<32x32xf32>
    %143 = arith.addf %138, %142 : vector<32x32xf32>
    %c2_75 = arith.constant 2 : index
    %c0_76 = arith.constant 0 : index
    %c2_77 = arith.constant 2 : index
    %144 = vector.load %arg7[%c2_75, %c0_76, %c2_77] : memref<4x40x34xf32, #tpu.memory_space<vmem>>, vector<1x32x32xf32>
    %145 = vector.shape_cast %144 : vector<1x32x32xf32> to vector<32x32xf32>
    %146 = vector.broadcast %26 : f32 to vector<32x32xf32>
    %147 = arith.mulf %145, %146 : vector<32x32xf32>
    %148 = arith.addf %143, %147 : vector<32x32xf32>
    %c2_78 = arith.constant 2 : index
    %c1_79 = arith.constant 1 : index
    %c0_80 = arith.constant 0 : index
    %149 = vector.load %arg7[%c2_78, %c1_79, %c0_80] : memref<4x40x34xf32, #tpu.memory_space<vmem>>, vector<1x32x32xf32>
    %150 = vector.shape_cast %149 : vector<1x32x32xf32> to vector<32x32xf32>
    %151 = vector.broadcast %27 : f32 to vector<32x32xf32>
    %152 = arith.mulf %150, %151 : vector<32x32xf32>
    %153 = arith.addf %148, %152 : vector<32x32xf32>
    %c2_81 = arith.constant 2 : index
    %c1_82 = arith.constant 1 : index
    %c1_83 = arith.constant 1 : index
    %154 = vector.load %arg7[%c2_81, %c1_82, %c1_83] : memref<4x40x34xf32, #tpu.memory_space<vmem>>, vector<1x32x32xf32>
    %155 = vector.shape_cast %154 : vector<1x32x32xf32> to vector<32x32xf32>
    %156 = vector.broadcast %28 : f32 to vector<32x32xf32>
    %157 = arith.mulf %155, %156 : vector<32x32xf32>
    %158 = arith.addf %153, %157 : vector<32x32xf32>
    %c2_84 = arith.constant 2 : index
    %c1_85 = arith.constant 1 : index
    %c2_86 = arith.constant 2 : index
    %159 = vector.load %arg7[%c2_84, %c1_85, %c2_86] : memref<4x40x34xf32, #tpu.memory_space<vmem>>, vector<1x32x32xf32>
    %160 = vector.shape_cast %159 : vector<1x32x32xf32> to vector<32x32xf32>
    %161 = vector.broadcast %29 : f32 to vector<32x32xf32>
    %162 = arith.mulf %160, %161 : vector<32x32xf32>
    %163 = arith.addf %158, %162 : vector<32x32xf32>
    %c2_87 = arith.constant 2 : index
    %c2_88 = arith.constant 2 : index
    %c0_89 = arith.constant 0 : index
    %164 = vector.load %arg7[%c2_87, %c2_88, %c0_89] : memref<4x40x34xf32, #tpu.memory_space<vmem>>, vector<1x32x32xf32>
    %165 = vector.shape_cast %164 : vector<1x32x32xf32> to vector<32x32xf32>
    %166 = vector.broadcast %30 : f32 to vector<32x32xf32>
    %167 = arith.mulf %165, %166 : vector<32x32xf32>
    %168 = arith.addf %163, %167 : vector<32x32xf32>
    %c2_90 = arith.constant 2 : index
    %c2_91 = arith.constant 2 : index
    %c1_92 = arith.constant 1 : index
    %169 = vector.load %arg7[%c2_90, %c2_91, %c1_92] : memref<4x40x34xf32, #tpu.memory_space<vmem>>, vector<1x32x32xf32>
    %170 = vector.shape_cast %169 : vector<1x32x32xf32> to vector<32x32xf32>
    %171 = vector.broadcast %31 : f32 to vector<32x32xf32>
    %172 = arith.mulf %170, %171 : vector<32x32xf32>
    %173 = arith.addf %168, %172 : vector<32x32xf32>
    %c2_93 = arith.constant 2 : index
    %c2_94 = arith.constant 2 : index
    %c2_95 = arith.constant 2 : index
    %174 = vector.load %arg7[%c2_93, %c2_94, %c2_95] : memref<4x40x34xf32, #tpu.memory_space<vmem>>, vector<1x32x32xf32>
    %175 = vector.shape_cast %174 : vector<1x32x32xf32> to vector<32x32xf32>
    %176 = vector.broadcast %32 : f32 to vector<32x32xf32>
    %177 = arith.mulf %175, %176 : vector<32x32xf32>
    %178 = arith.addf %173, %177 : vector<32x32xf32>
    %c3_96 = arith.constant 3 : index
    %c0_97 = arith.constant 0 : index
    %c0_98 = arith.constant 0 : index
    %179 = vector.load %arg7[%c3_96, %c0_97, %c0_98] : memref<4x40x34xf32, #tpu.memory_space<vmem>>, vector<1x32x32xf32>
    %180 = vector.shape_cast %179 : vector<1x32x32xf32> to vector<32x32xf32>
    %181 = vector.broadcast %33 : f32 to vector<32x32xf32>
    %182 = arith.mulf %180, %181 : vector<32x32xf32>
    %183 = arith.addf %178, %182 : vector<32x32xf32>
    %c3_99 = arith.constant 3 : index
    %c0_100 = arith.constant 0 : index
    %c1_101 = arith.constant 1 : index
    %184 = vector.load %arg7[%c3_99, %c0_100, %c1_101] : memref<4x40x34xf32, #tpu.memory_space<vmem>>, vector<1x32x32xf32>
    %185 = vector.shape_cast %184 : vector<1x32x32xf32> to vector<32x32xf32>
    %186 = vector.broadcast %34 : f32 to vector<32x32xf32>
    %187 = arith.mulf %185, %186 : vector<32x32xf32>
    %188 = arith.addf %183, %187 : vector<32x32xf32>
    %c3_102 = arith.constant 3 : index
    %c0_103 = arith.constant 0 : index
    %c2_104 = arith.constant 2 : index
    %189 = vector.load %arg7[%c3_102, %c0_103, %c2_104] : memref<4x40x34xf32, #tpu.memory_space<vmem>>, vector<1x32x32xf32>
    %190 = vector.shape_cast %189 : vector<1x32x32xf32> to vector<32x32xf32>
    %191 = vector.broadcast %35 : f32 to vector<32x32xf32>
    %192 = arith.mulf %190, %191 : vector<32x32xf32>
    %193 = arith.addf %188, %192 : vector<32x32xf32>
    %c3_105 = arith.constant 3 : index
    %c1_106 = arith.constant 1 : index
    %c0_107 = arith.constant 0 : index
    %194 = vector.load %arg7[%c3_105, %c1_106, %c0_107] : memref<4x40x34xf32, #tpu.memory_space<vmem>>, vector<1x32x32xf32>
    %195 = vector.shape_cast %194 : vector<1x32x32xf32> to vector<32x32xf32>
    %196 = vector.broadcast %36 : f32 to vector<32x32xf32>
    %197 = arith.mulf %195, %196 : vector<32x32xf32>
    %198 = arith.addf %193, %197 : vector<32x32xf32>
    %c3_108 = arith.constant 3 : index
    %c1_109 = arith.constant 1 : index
    %c1_110 = arith.constant 1 : index
    %199 = vector.load %arg7[%c3_108, %c1_109, %c1_110] : memref<4x40x34xf32, #tpu.memory_space<vmem>>, vector<1x32x32xf32>
    %200 = vector.shape_cast %199 : vector<1x32x32xf32> to vector<32x32xf32>
    %201 = vector.broadcast %37 : f32 to vector<32x32xf32>
    %202 = arith.mulf %200, %201 : vector<32x32xf32>
    %203 = arith.addf %198, %202 : vector<32x32xf32>
    %c3_111 = arith.constant 3 : index
    %c1_112 = arith.constant 1 : index
    %c2_113 = arith.constant 2 : index
    %204 = vector.load %arg7[%c3_111, %c1_112, %c2_113] : memref<4x40x34xf32, #tpu.memory_space<vmem>>, vector<1x32x32xf32>
    %205 = vector.shape_cast %204 : vector<1x32x32xf32> to vector<32x32xf32>
    %206 = vector.broadcast %38 : f32 to vector<32x32xf32>
    %207 = arith.mulf %205, %206 : vector<32x32xf32>
    %208 = arith.addf %203, %207 : vector<32x32xf32>
    %c3_114 = arith.constant 3 : index
    %c2_115 = arith.constant 2 : index
    %c0_116 = arith.constant 0 : index
    %209 = vector.load %arg7[%c3_114, %c2_115, %c0_116] : memref<4x40x34xf32, #tpu.memory_space<vmem>>, vector<1x32x32xf32>
    %210 = vector.shape_cast %209 : vector<1x32x32xf32> to vector<32x32xf32>
    %211 = vector.broadcast %39 : f32 to vector<32x32xf32>
    %212 = arith.mulf %210, %211 : vector<32x32xf32>
    %213 = arith.addf %208, %212 : vector<32x32xf32>
    %c3_117 = arith.constant 3 : index
    %c2_118 = arith.constant 2 : index
    %c1_119 = arith.constant 1 : index
    %214 = vector.load %arg7[%c3_117, %c2_118, %c1_119] : memref<4x40x34xf32, #tpu.memory_space<vmem>>, vector<1x32x32xf32>
    %215 = vector.shape_cast %214 : vector<1x32x32xf32> to vector<32x32xf32>
    %216 = vector.broadcast %40 : f32 to vector<32x32xf32>
    %217 = arith.mulf %215, %216 : vector<32x32xf32>
    %218 = arith.addf %213, %217 : vector<32x32xf32>
    %c3_120 = arith.constant 3 : index
    %c2_121 = arith.constant 2 : index
    %c2_122 = arith.constant 2 : index
    %219 = vector.load %arg7[%c3_120, %c2_121, %c2_122] : memref<4x40x34xf32, #tpu.memory_space<vmem>>, vector<1x32x32xf32>
    %220 = vector.shape_cast %219 : vector<1x32x32xf32> to vector<32x32xf32>
    %221 = vector.broadcast %41 : f32 to vector<32x32xf32>
    %222 = arith.mulf %220, %221 : vector<32x32xf32>
    %223 = arith.addf %218, %222 : vector<32x32xf32>
    %c0_123 = arith.constant 0 : index
    %c0_124 = arith.constant 0 : index
    %c0_125 = arith.constant 0 : index
    %c0_126 = arith.constant 0 : index
    %224 = vector.load %arg6[%c0_123, %c0_124, %c0_125, %c0_126] : memref<1x1x32x32xf32, #tpu.memory_space<vmem>>, vector<1x1x32x32xf32>
    %225 = vector.shape_cast %224 : vector<1x1x32x32xf32> to vector<32x32xf32>
    %226 = vector.shape_cast %223 : vector<32x32xf32> to vector<1x1x32x32xf32>
    tpu.vector_store %arg6[%c0_123, %c0_124, %c0_125, %c0_126], %226 {strides = array<i32>} : memref<1x1x32x32xf32, #tpu.memory_space<vmem>>, vector<1x1x32x32xf32>,
    return
  }
  func.func @transform_0(%arg0: i32, %arg1: i32) -> i32 {
    %c0_i32 = arith.constant 0 : i32
    %c0_i32_0 = arith.constant 0 : i32
    return %c0_i32 : i32
  }
  func.func @transform_1(%arg0: i32, %arg1: i32) -> i32 {
    %c0_i32 = arith.constant 0 : i32
    %c0_i32_0 = arith.constant 0 : i32
    return %c0_i32 : i32
  }
  func.func @transform_2(%arg0: i32, %arg1: i32) -> (i32, i32, i32, i32) {
    %c0_i32 = arith.constant 0 : i32
    %c0_i32_0 = arith.constant 0 : i32
    %c0_i32_1 = arith.constant 0 : i32
    return %arg0, %c0_i32, %arg1, %c0_i32_0 : i32, i32, i32, i32
  }
  func.func @transform_3(%arg0: i32, %arg1: i32) -> (i32, i32, i32, i32) {
    %c1_i32 = arith.constant 1 : i32
    %0 = arith.addi %arg1, %c1_i32 : i32
    %c4_i32 = arith.constant 4 : i32
    %1 = arith.muli %0, %c4_i32 : i32
    %c0_i32 = arith.constant 0 : i32
    %c0_i32_0 = arith.constant 0 : i32
    %c0_i32_1 = arith.constant 0 : i32
    return %arg0, %c0_i32, %1, %c0_i32_0 : i32, i32, i32, i32
  }
  func.func @transform_4(%arg0: i32, %arg1: i32) -> (i32, i32, i32, i32) {
    %c0_i32 = arith.constant 0 : i32
    %c0_i32_0 = arith.constant 0 : i32
    %c0_i32_1 = arith.constant 0 : i32
    return %arg0, %c0_i32, %arg1, %c0_i32_0 : i32, i32, i32, i32
  }
}

module attributes {stable_mosaic.version = 11 : i64} {
  func.func @_sense_kernel(%arg0: i32, %arg1: memref<2x8xf32, #tpu.memory_space<vmem>>, %arg2: memref<2x1024xf32, #tpu.memory_space<vmem>>, %arg3: memref<8x1024xf32, #tpu.memory_space<vmem>>, %arg4: memref<1024x1024xf32, #tpu.memory_space<vmem>>, %arg5: memref<2x1024xf32, #tpu.memory_space<vmem>>) attributes {dimension_semantics = [#tpu.dimension_semantics<parallel>], iteration_bounds = array<i64: 1>, scalar_prefetch = 0 : i64, scratch_operands = 0 : i64, tpu.core_type = #tpu.core_type<tc>, window_params = [{transform_indices = @transform_0, window_bounds = array<i64: 2, 8>}, {transform_indices = @transform_1, window_bounds = array<i64: 2, 1024>}, {pipeline_mode = #tpu.pipeline_mode<synchronous>, transform_indices = @transform_2, window_bounds = array<i64: 8, 1024>}, {pipeline_mode = #tpu.pipeline_mode<synchronous>, transform_indices = @transform_3, window_bounds = array<i64: 1024, 1024>}, {transform_indices = @transform_4, window_bounds = array<i64: 2, 1024>}]} {
    %c0 = arith.constant 0 : index
    %c0_0 = arith.constant 0 : index
    %0 = vector.load %arg1[%c0, %c0_0] : memref<2x8xf32, #tpu.memory_space<vmem>>, vector<2x8xf32>
    %c0_1 = arith.constant 0 : index
    %c0_2 = arith.constant 0 : index
    %1 = vector.load %arg3[%c0_1, %c0_2] : memref<8x1024xf32, #tpu.memory_space<vmem>>, vector<8x1024xf32>
    %cst = arith.constant dense<0.000000e+00> : vector<2x1024xf32>
    %2 = tpu.matmul %0, %1, %cst {dimension_numbers = #tpu.dot_dimension_numbers<[1], [0], [0], [1], [0, 0, 1, 1], [], []>} : vector<2x8xf32>, vector<8x1024xf32>, vector<2x1024xf32> -> vector<2x1024xf32>
    %c0_3 = arith.constant 0 : index
    %c0_4 = arith.constant 0 : index
    %3 = vector.load %arg2[%c0_3, %c0_4] : memref<2x1024xf32, #tpu.memory_space<vmem>>, vector<2x1024xf32>
    %c0_5 = arith.constant 0 : index
    %c0_6 = arith.constant 0 : index
    %4 = vector.load %arg4[%c0_5, %c0_6] : memref<1024x1024xf32, #tpu.memory_space<vmem>>, vector<1024x1024xf32>
    %cst_7 = arith.constant dense<0.000000e+00> : vector<2x1024xf32>
    %5 = tpu.matmul %3, %4, %cst_7 {dimension_numbers = #tpu.dot_dimension_numbers<[1], [0], [0], [1], [0, 0, 1, 1], [], []>} : vector<2x1024xf32>, vector<1024x1024xf32>, vector<2x1024xf32> -> vector<2x1024xf32>
    %6 = arith.subf %2, %5 : vector<2x1024xf32>
    %c0_8 = arith.constant 0 : index
    %c0_9 = arith.constant 0 : index
    %7 = vector.load %arg5[%c0_8, %c0_9] : memref<2x1024xf32, #tpu.memory_space<vmem>>, vector<2x1024xf32>
    tpu.vector_store %arg5[%c0_8, %c0_9], %6 {strides = array<i32>} : memref<2x1024xf32, #tpu.memory_space<vmem>>, vector<2x1024xf32>,
    return
  }
  func.func @transform_0(%arg0: i32) -> (i32, i32) {
    %c0_i32 = arith.constant 0 : i32
    %c0_i32_0 = arith.constant 0 : i32
    return %arg0, %c0_i32 : i32, i32
  }
  func.func @transform_1(%arg0: i32) -> (i32, i32) {
    %c0_i32 = arith.constant 0 : i32
    %c0_i32_0 = arith.constant 0 : i32
    return %arg0, %c0_i32 : i32, i32
  }
  func.func @transform_2(%arg0: i32) -> (i32, i32) {
    %c0_i32 = arith.constant 0 : i32
    %c0_i32_0 = arith.constant 0 : i32
    %c0_i32_1 = arith.constant 0 : i32
    return %c0_i32, %c0_i32_0 : i32, i32
  }
  func.func @transform_3(%arg0: i32) -> (i32, i32) {
    %c0_i32 = arith.constant 0 : i32
    %c0_i32_0 = arith.constant 0 : i32
    %c0_i32_1 = arith.constant 0 : i32
    return %c0_i32, %c0_i32_0 : i32, i32
  }
  func.func @transform_4(%arg0: i32) -> (i32, i32) {
    %c0_i32 = arith.constant 0 : i32
    %c0_i32_0 = arith.constant 0 : i32
    return %arg0, %c0_i32 : i32, i32
  }
}

module attributes {stable_mosaic.version = 11 : i64} {
  func.func @_conv2_kernel(%arg0: i32, %arg1: i32, %arg2: memref<36xf32, #tpu.memory_space<smem>>, %arg3: memref<4xf32, #tpu.memory_space<smem>>, %arg4: memref<1x1x32x34xf32, #tpu.memory_space<vmem>>, %arg5: memref<1x1x8x34xf32, #tpu.memory_space<vmem>>, %arg6: memref<1x4x32x32xf32, #tpu.memory_space<vmem>>, %arg7: memref<40x34xf32, #tpu.memory_space<vmem>>) attributes {dimension_semantics = [#tpu.dimension_semantics<parallel>, #tpu.dimension_semantics<parallel>], iteration_bounds = array<i64: 2, 1>, scalar_prefetch = 0 : i64, scratch_operands = 1 : i64, tpu.core_type = #tpu.core_type<tc>, window_params = [{transform_indices = @transform_0, window_bounds = array<i64: 36>}, {transform_indices = @transform_1, window_bounds = array<i64: 4>}, {transform_indices = @transform_2, window_bounds = array<i64: 1, 1, 32, 34>}, {transform_indices = @transform_3, window_bounds = array<i64: 1, 1, 8, 34>}, {transform_indices = @transform_4, window_bounds = array<i64: 1, 4, 32, 32>}]} {
    %c0 = arith.constant 0 : index
    %c0_0 = arith.constant 0 : index
    %c0_1 = arith.constant 0 : index
    %c0_2 = arith.constant 0 : index
    %0 = vector.load %arg4[%c0, %c0_0, %c0_1, %c0_2] : memref<1x1x32x34xf32, #tpu.memory_space<vmem>>, vector<1x1x32x34xf32>
    %1 = vector.shape_cast %0 : vector<1x1x32x34xf32> to vector<32x34xf32>
    %c0_3 = arith.constant 0 : index
    %c0_4 = arith.constant 0 : index
    %2 = vector.load %arg7[%c0_3, %c0_4] : memref<40x34xf32, #tpu.memory_space<vmem>>, vector<32x34xf32>
    tpu.vector_store %arg7[%c0_3, %c0_4], %1 {strides = array<i32>} : memref<40x34xf32, #tpu.memory_space<vmem>>, vector<32x34xf32>,
    %c0_5 = arith.constant 0 : index
    %c0_6 = arith.constant 0 : index
    %c0_7 = arith.constant 0 : index
    %c0_8 = arith.constant 0 : index
    %3 = vector.load %arg5[%c0_5, %c0_6, %c0_7, %c0_8] : memref<1x1x8x34xf32, #tpu.memory_space<vmem>>, vector<1x1x8x34xf32>
    %4 = vector.shape_cast %3 : vector<1x1x8x34xf32> to vector<8x34xf32>
    %c32 = arith.constant 32 : index
    %c0_9 = arith.constant 0 : index
    %5 = vector.load %arg7[%c32, %c0_9] : memref<40x34xf32, #tpu.memory_space<vmem>>, vector<8x34xf32>
    tpu.vector_store %arg7[%c32, %c0_9], %4 {strides = array<i32>} : memref<40x34xf32, #tpu.memory_space<vmem>>, vector<8x34xf32>,
    %c0_10 = arith.constant 0 : index
    %c0_11 = arith.constant 0 : index
    %6 = vector.load %arg7[%c0_10, %c0_11] : memref<40x34xf32, #tpu.memory_space<vmem>>, vector<32x32xf32>
    %c0_12 = arith.constant 0 : index
    %c1 = arith.constant 1 : index
    %7 = vector.load %arg7[%c0_12, %c1] : memref<40x34xf32, #tpu.memory_space<vmem>>, vector<32x32xf32>
    %c0_13 = arith.constant 0 : index
    %c2 = arith.constant 2 : index
    %8 = vector.load %arg7[%c0_13, %c2] : memref<40x34xf32, #tpu.memory_space<vmem>>, vector<32x32xf32>
    %c1_14 = arith.constant 1 : index
    %c0_15 = arith.constant 0 : index
    %9 = vector.load %arg7[%c1_14, %c0_15] : memref<40x34xf32, #tpu.memory_space<vmem>>, vector<32x32xf32>
    %c1_16 = arith.constant 1 : index
    %c1_17 = arith.constant 1 : index
    %10 = vector.load %arg7[%c1_16, %c1_17] : memref<40x34xf32, #tpu.memory_space<vmem>>, vector<32x32xf32>
    %c1_18 = arith.constant 1 : index
    %c2_19 = arith.constant 2 : index
    %11 = vector.load %arg7[%c1_18, %c2_19] : memref<40x34xf32, #tpu.memory_space<vmem>>, vector<32x32xf32>
    %c2_20 = arith.constant 2 : index
    %c0_21 = arith.constant 0 : index
    %12 = vector.load %arg7[%c2_20, %c0_21] : memref<40x34xf32, #tpu.memory_space<vmem>>, vector<32x32xf32>
    %c2_22 = arith.constant 2 : index
    %c1_23 = arith.constant 1 : index
    %13 = vector.load %arg7[%c2_22, %c1_23] : memref<40x34xf32, #tpu.memory_space<vmem>>, vector<32x32xf32>
    %c2_24 = arith.constant 2 : index
    %c2_25 = arith.constant 2 : index
    %14 = vector.load %arg7[%c2_24, %c2_25] : memref<40x34xf32, #tpu.memory_space<vmem>>, vector<32x32xf32>
    %c0_26 = arith.constant 0 : index
    %15 = memref.load %arg2[%c0_26] : memref<36xf32, #tpu.memory_space<smem>>
    %c1_27 = arith.constant 1 : index
    %16 = memref.load %arg2[%c1_27] : memref<36xf32, #tpu.memory_space<smem>>
    %c2_28 = arith.constant 2 : index
    %17 = memref.load %arg2[%c2_28] : memref<36xf32, #tpu.memory_space<smem>>
    %c3 = arith.constant 3 : index
    %18 = memref.load %arg2[%c3] : memref<36xf32, #tpu.memory_space<smem>>
    %c4 = arith.constant 4 : index
    %19 = memref.load %arg2[%c4] : memref<36xf32, #tpu.memory_space<smem>>
    %c5 = arith.constant 5 : index
    %20 = memref.load %arg2[%c5] : memref<36xf32, #tpu.memory_space<smem>>
    %c6 = arith.constant 6 : index
    %21 = memref.load %arg2[%c6] : memref<36xf32, #tpu.memory_space<smem>>
    %c7 = arith.constant 7 : index
    %22 = memref.load %arg2[%c7] : memref<36xf32, #tpu.memory_space<smem>>
    %c8 = arith.constant 8 : index
    %23 = memref.load %arg2[%c8] : memref<36xf32, #tpu.memory_space<smem>>
    %c9 = arith.constant 9 : index
    %24 = memref.load %arg2[%c9] : memref<36xf32, #tpu.memory_space<smem>>
    %c10 = arith.constant 10 : index
    %25 = memref.load %arg2[%c10] : memref<36xf32, #tpu.memory_space<smem>>
    %c11 = arith.constant 11 : index
    %26 = memref.load %arg2[%c11] : memref<36xf32, #tpu.memory_space<smem>>
    %c12 = arith.constant 12 : index
    %27 = memref.load %arg2[%c12] : memref<36xf32, #tpu.memory_space<smem>>
    %c13 = arith.constant 13 : index
    %28 = memref.load %arg2[%c13] : memref<36xf32, #tpu.memory_space<smem>>
    %c14 = arith.constant 14 : index
    %29 = memref.load %arg2[%c14] : memref<36xf32, #tpu.memory_space<smem>>
    %c15 = arith.constant 15 : index
    %30 = memref.load %arg2[%c15] : memref<36xf32, #tpu.memory_space<smem>>
    %c16 = arith.constant 16 : index
    %31 = memref.load %arg2[%c16] : memref<36xf32, #tpu.memory_space<smem>>
    %c17 = arith.constant 17 : index
    %32 = memref.load %arg2[%c17] : memref<36xf32, #tpu.memory_space<smem>>
    %c18 = arith.constant 18 : index
    %33 = memref.load %arg2[%c18] : memref<36xf32, #tpu.memory_space<smem>>
    %c19 = arith.constant 19 : index
    %34 = memref.load %arg2[%c19] : memref<36xf32, #tpu.memory_space<smem>>
    %c20 = arith.constant 20 : index
    %35 = memref.load %arg2[%c20] : memref<36xf32, #tpu.memory_space<smem>>
    %c21 = arith.constant 21 : index
    %36 = memref.load %arg2[%c21] : memref<36xf32, #tpu.memory_space<smem>>
    %c22 = arith.constant 22 : index
    %37 = memref.load %arg2[%c22] : memref<36xf32, #tpu.memory_space<smem>>
    %c23 = arith.constant 23 : index
    %38 = memref.load %arg2[%c23] : memref<36xf32, #tpu.memory_space<smem>>
    %c24 = arith.constant 24 : index
    %39 = memref.load %arg2[%c24] : memref<36xf32, #tpu.memory_space<smem>>
    %c25 = arith.constant 25 : index
    %40 = memref.load %arg2[%c25] : memref<36xf32, #tpu.memory_space<smem>>
    %c26 = arith.constant 26 : index
    %41 = memref.load %arg2[%c26] : memref<36xf32, #tpu.memory_space<smem>>
    %c27 = arith.constant 27 : index
    %42 = memref.load %arg2[%c27] : memref<36xf32, #tpu.memory_space<smem>>
    %c28 = arith.constant 28 : index
    %43 = memref.load %arg2[%c28] : memref<36xf32, #tpu.memory_space<smem>>
    %c29 = arith.constant 29 : index
    %44 = memref.load %arg2[%c29] : memref<36xf32, #tpu.memory_space<smem>>
    %c30 = arith.constant 30 : index
    %45 = memref.load %arg2[%c30] : memref<36xf32, #tpu.memory_space<smem>>
    %c31 = arith.constant 31 : index
    %46 = memref.load %arg2[%c31] : memref<36xf32, #tpu.memory_space<smem>>
    %c32_29 = arith.constant 32 : index
    %47 = memref.load %arg2[%c32_29] : memref<36xf32, #tpu.memory_space<smem>>
    %c33 = arith.constant 33 : index
    %48 = memref.load %arg2[%c33] : memref<36xf32, #tpu.memory_space<smem>>
    %c34 = arith.constant 34 : index
    %49 = memref.load %arg2[%c34] : memref<36xf32, #tpu.memory_space<smem>>
    %c35 = arith.constant 35 : index
    %50 = memref.load %arg2[%c35] : memref<36xf32, #tpu.memory_space<smem>>
    %c0_30 = arith.constant 0 : index
    %51 = memref.load %arg3[%c0_30] : memref<4xf32, #tpu.memory_space<smem>>
    %52 = vector.broadcast %51 : f32 to vector<32x32xf32>
    %53 = vector.broadcast %15 : f32 to vector<32x32xf32>
    %54 = arith.mulf %6, %53 : vector<32x32xf32>
    %55 = arith.addf %52, %54 : vector<32x32xf32>
    %56 = vector.broadcast %16 : f32 to vector<32x32xf32>
    %57 = arith.mulf %7, %56 : vector<32x32xf32>
    %58 = arith.addf %55, %57 : vector<32x32xf32>
    %59 = vector.broadcast %17 : f32 to vector<32x32xf32>
    %60 = arith.mulf %8, %59 : vector<32x32xf32>
    %61 = arith.addf %58, %60 : vector<32x32xf32>
    %62 = vector.broadcast %18 : f32 to vector<32x32xf32>
    %63 = arith.mulf %9, %62 : vector<32x32xf32>
    %64 = arith.addf %61, %63 : vector<32x32xf32>
    %65 = vector.broadcast %19 : f32 to vector<32x32xf32>
    %66 = arith.mulf %10, %65 : vector<32x32xf32>
    %67 = arith.addf %64, %66 : vector<32x32xf32>
    %68 = vector.broadcast %20 : f32 to vector<32x32xf32>
    %69 = arith.mulf %11, %68 : vector<32x32xf32>
    %70 = arith.addf %67, %69 : vector<32x32xf32>
    %71 = vector.broadcast %21 : f32 to vector<32x32xf32>
    %72 = arith.mulf %12, %71 : vector<32x32xf32>
    %73 = arith.addf %70, %72 : vector<32x32xf32>
    %74 = vector.broadcast %22 : f32 to vector<32x32xf32>
    %75 = arith.mulf %13, %74 : vector<32x32xf32>
    %76 = arith.addf %73, %75 : vector<32x32xf32>
    %77 = vector.broadcast %23 : f32 to vector<32x32xf32>
    %78 = arith.mulf %14, %77 : vector<32x32xf32>
    %79 = arith.addf %76, %78 : vector<32x32xf32>
    %c0_31 = arith.constant 0 : index
    %c0_32 = arith.constant 0 : index
    %c0_33 = arith.constant 0 : index
    %c0_34 = arith.constant 0 : index
    %80 = vector.load %arg6[%c0_31, %c0_32, %c0_33, %c0_34] : memref<1x4x32x32xf32, #tpu.memory_space<vmem>>, vector<1x1x32x32xf32>
    %81 = vector.shape_cast %80 : vector<1x1x32x32xf32> to vector<32x32xf32>
    %82 = vector.shape_cast %79 : vector<32x32xf32> to vector<1x1x32x32xf32>
    tpu.vector_store %arg6[%c0_31, %c0_32, %c0_33, %c0_34], %82 {strides = array<i32>} : memref<1x4x32x32xf32, #tpu.memory_space<vmem>>, vector<1x1x32x32xf32>,
    %c1_35 = arith.constant 1 : index
    %83 = memref.load %arg3[%c1_35] : memref<4xf32, #tpu.memory_space<smem>>
    %84 = vector.broadcast %83 : f32 to vector<32x32xf32>
    %85 = vector.broadcast %24 : f32 to vector<32x32xf32>
    %86 = arith.mulf %6, %85 : vector<32x32xf32>
    %87 = arith.addf %84, %86 : vector<32x32xf32>
    %88 = vector.broadcast %25 : f32 to vector<32x32xf32>
    %89 = arith.mulf %7, %88 : vector<32x32xf32>
    %90 = arith.addf %87, %89 : vector<32x32xf32>
    %91 = vector.broadcast %26 : f32 to vector<32x32xf32>
    %92 = arith.mulf %8, %91 : vector<32x32xf32>
    %93 = arith.addf %90, %92 : vector<32x32xf32>
    %94 = vector.broadcast %27 : f32 to vector<32x32xf32>
    %95 = arith.mulf %9, %94 : vector<32x32xf32>
    %96 = arith.addf %93, %95 : vector<32x32xf32>
    %97 = vector.broadcast %28 : f32 to vector<32x32xf32>
    %98 = arith.mulf %10, %97 : vector<32x32xf32>
    %99 = arith.addf %96, %98 : vector<32x32xf32>
    %100 = vector.broadcast %29 : f32 to vector<32x32xf32>
    %101 = arith.mulf %11, %100 : vector<32x32xf32>
    %102 = arith.addf %99, %101 : vector<32x32xf32>
    %103 = vector.broadcast %30 : f32 to vector<32x32xf32>
    %104 = arith.mulf %12, %103 : vector<32x32xf32>
    %105 = arith.addf %102, %104 : vector<32x32xf32>
    %106 = vector.broadcast %31 : f32 to vector<32x32xf32>
    %107 = arith.mulf %13, %106 : vector<32x32xf32>
    %108 = arith.addf %105, %107 : vector<32x32xf32>
    %109 = vector.broadcast %32 : f32 to vector<32x32xf32>
    %110 = arith.mulf %14, %109 : vector<32x32xf32>
    %111 = arith.addf %108, %110 : vector<32x32xf32>
    %c0_36 = arith.constant 0 : index
    %c1_37 = arith.constant 1 : index
    %c0_38 = arith.constant 0 : index
    %c0_39 = arith.constant 0 : index
    %112 = vector.load %arg6[%c0_36, %c1_37, %c0_38, %c0_39] : memref<1x4x32x32xf32, #tpu.memory_space<vmem>>, vector<1x1x32x32xf32>
    %113 = vector.shape_cast %112 : vector<1x1x32x32xf32> to vector<32x32xf32>
    %114 = vector.shape_cast %111 : vector<32x32xf32> to vector<1x1x32x32xf32>
    tpu.vector_store %arg6[%c0_36, %c1_37, %c0_38, %c0_39], %114 {strides = array<i32>} : memref<1x4x32x32xf32, #tpu.memory_space<vmem>>, vector<1x1x32x32xf32>,
    %c2_40 = arith.constant 2 : index
    %115 = memref.load %arg3[%c2_40] : memref<4xf32, #tpu.memory_space<smem>>
    %116 = vector.broadcast %115 : f32 to vector<32x32xf32>
    %117 = vector.broadcast %33 : f32 to vector<32x32xf32>
    %118 = arith.mulf %6, %117 : vector<32x32xf32>
    %119 = arith.addf %116, %118 : vector<32x32xf32>
    %120 = vector.broadcast %34 : f32 to vector<32x32xf32>
    %121 = arith.mulf %7, %120 : vector<32x32xf32>
    %122 = arith.addf %119, %121 : vector<32x32xf32>
    %123 = vector.broadcast %35 : f32 to vector<32x32xf32>
    %124 = arith.mulf %8, %123 : vector<32x32xf32>
    %125 = arith.addf %122, %124 : vector<32x32xf32>
    %126 = vector.broadcast %36 : f32 to vector<32x32xf32>
    %127 = arith.mulf %9, %126 : vector<32x32xf32>
    %128 = arith.addf %125, %127 : vector<32x32xf32>
    %129 = vector.broadcast %37 : f32 to vector<32x32xf32>
    %130 = arith.mulf %10, %129 : vector<32x32xf32>
    %131 = arith.addf %128, %130 : vector<32x32xf32>
    %132 = vector.broadcast %38 : f32 to vector<32x32xf32>
    %133 = arith.mulf %11, %132 : vector<32x32xf32>
    %134 = arith.addf %131, %133 : vector<32x32xf32>
    %135 = vector.broadcast %39 : f32 to vector<32x32xf32>
    %136 = arith.mulf %12, %135 : vector<32x32xf32>
    %137 = arith.addf %134, %136 : vector<32x32xf32>
    %138 = vector.broadcast %40 : f32 to vector<32x32xf32>
    %139 = arith.mulf %13, %138 : vector<32x32xf32>
    %140 = arith.addf %137, %139 : vector<32x32xf32>
    %141 = vector.broadcast %41 : f32 to vector<32x32xf32>
    %142 = arith.mulf %14, %141 : vector<32x32xf32>
    %143 = arith.addf %140, %142 : vector<32x32xf32>
    %c0_41 = arith.constant 0 : index
    %c2_42 = arith.constant 2 : index
    %c0_43 = arith.constant 0 : index
    %c0_44 = arith.constant 0 : index
    %144 = vector.load %arg6[%c0_41, %c2_42, %c0_43, %c0_44] : memref<1x4x32x32xf32, #tpu.memory_space<vmem>>, vector<1x1x32x32xf32>
    %145 = vector.shape_cast %144 : vector<1x1x32x32xf32> to vector<32x32xf32>
    %146 = vector.shape_cast %143 : vector<32x32xf32> to vector<1x1x32x32xf32>
    tpu.vector_store %arg6[%c0_41, %c2_42, %c0_43, %c0_44], %146 {strides = array<i32>} : memref<1x4x32x32xf32, #tpu.memory_space<vmem>>, vector<1x1x32x32xf32>,
    %c3_45 = arith.constant 3 : index
    %147 = memref.load %arg3[%c3_45] : memref<4xf32, #tpu.memory_space<smem>>
    %148 = vector.broadcast %147 : f32 to vector<32x32xf32>
    %149 = vector.broadcast %42 : f32 to vector<32x32xf32>
    %150 = arith.mulf %6, %149 : vector<32x32xf32>
    %151 = arith.addf %148, %150 : vector<32x32xf32>
    %152 = vector.broadcast %43 : f32 to vector<32x32xf32>
    %153 = arith.mulf %7, %152 : vector<32x32xf32>
    %154 = arith.addf %151, %153 : vector<32x32xf32>
    %155 = vector.broadcast %44 : f32 to vector<32x32xf32>
    %156 = arith.mulf %8, %155 : vector<32x32xf32>
    %157 = arith.addf %154, %156 : vector<32x32xf32>
    %158 = vector.broadcast %45 : f32 to vector<32x32xf32>
    %159 = arith.mulf %9, %158 : vector<32x32xf32>
    %160 = arith.addf %157, %159 : vector<32x32xf32>
    %161 = vector.broadcast %46 : f32 to vector<32x32xf32>
    %162 = arith.mulf %10, %161 : vector<32x32xf32>
    %163 = arith.addf %160, %162 : vector<32x32xf32>
    %164 = vector.broadcast %47 : f32 to vector<32x32xf32>
    %165 = arith.mulf %11, %164 : vector<32x32xf32>
    %166 = arith.addf %163, %165 : vector<32x32xf32>
    %167 = vector.broadcast %48 : f32 to vector<32x32xf32>
    %168 = arith.mulf %12, %167 : vector<32x32xf32>
    %169 = arith.addf %166, %168 : vector<32x32xf32>
    %170 = vector.broadcast %49 : f32 to vector<32x32xf32>
    %171 = arith.mulf %13, %170 : vector<32x32xf32>
    %172 = arith.addf %169, %171 : vector<32x32xf32>
    %173 = vector.broadcast %50 : f32 to vector<32x32xf32>
    %174 = arith.mulf %14, %173 : vector<32x32xf32>
    %175 = arith.addf %172, %174 : vector<32x32xf32>
    %c0_46 = arith.constant 0 : index
    %c3_47 = arith.constant 3 : index
    %c0_48 = arith.constant 0 : index
    %c0_49 = arith.constant 0 : index
    %176 = vector.load %arg6[%c0_46, %c3_47, %c0_48, %c0_49] : memref<1x4x32x32xf32, #tpu.memory_space<vmem>>, vector<1x1x32x32xf32>
    %177 = vector.shape_cast %176 : vector<1x1x32x32xf32> to vector<32x32xf32>
    %178 = vector.shape_cast %175 : vector<32x32xf32> to vector<1x1x32x32xf32>
    tpu.vector_store %arg6[%c0_46, %c3_47, %c0_48, %c0_49], %178 {strides = array<i32>} : memref<1x4x32x32xf32, #tpu.memory_space<vmem>>, vector<1x1x32x32xf32>,
    return
  }
  func.func @transform_0(%arg0: i32, %arg1: i32) -> i32 {
    %c0_i32 = arith.constant 0 : i32
    %c0_i32_0 = arith.constant 0 : i32
    return %c0_i32 : i32
  }
  func.func @transform_1(%arg0: i32, %arg1: i32) -> i32 {
    %c0_i32 = arith.constant 0 : i32
    %c0_i32_0 = arith.constant 0 : i32
    return %c0_i32 : i32
  }
  func.func @transform_2(%arg0: i32, %arg1: i32) -> (i32, i32, i32, i32) {
    %c0_i32 = arith.constant 0 : i32
    %c0_i32_0 = arith.constant 0 : i32
    %c0_i32_1 = arith.constant 0 : i32
    return %arg0, %c0_i32, %arg1, %c0_i32_0 : i32, i32, i32, i32
  }
  func.func @transform_3(%arg0: i32, %arg1: i32) -> (i32, i32, i32, i32) {
    %c1_i32 = arith.constant 1 : i32
    %0 = arith.addi %arg1, %c1_i32 : i32
    %c4_i32 = arith.constant 4 : i32
    %1 = arith.muli %0, %c4_i32 : i32
    %c0_i32 = arith.constant 0 : i32
    %c0_i32_0 = arith.constant 0 : i32
    %c0_i32_1 = arith.constant 0 : i32
    return %arg0, %c0_i32, %1, %c0_i32_0 : i32, i32, i32, i32
  }
  func.func @transform_4(%arg0: i32, %arg1: i32) -> (i32, i32, i32, i32) {
    %c0_i32 = arith.constant 0 : i32
    %c0_i32_0 = arith.constant 0 : i32
    %c0_i32_1 = arith.constant 0 : i32
    return %arg0, %c0_i32, %arg1, %c0_i32_0 : i32, i32, i32, i32
  }
}

</mosaic_0001>

<llo_original>
// kernel: pdem_forward.3
$region0: #{pdem_forward.3}
  #allocation0 [shape = 'u32[]', space=smem, size = 0x4, offset = 0x4, fixed_abs, tag = 'smem constant byte address 0x4 - core index']
  #allocation1 [shape = 'u32[72,128]{1,0:T(1,128)}', space=vmem, size = 0x9000, scoped, tag = 'internal scratch']
  #allocation2 [shape = 'f32[4,40,34]{2,1,0:T(8,128)}', space=vmem, size = 0x14000, scoped, tag = 'scratch operand']
  #allocation3 [shape = 'f32[1]{0:T(128)S(6)}', space=smem, size = 0x200, scoped, tag = 'scoped memory for pdem_forward.3']
  %s0 = inlined_call_operand.vmem [shape: f32[36], index: 0, kind: input, shape index: {}]
  %s1 = inlined_call_operand.<no memory space> [shape: f32[1], index: 1, kind: input, shape index: {}]
  %s2 = inlined_call_operand.vmem [shape: f32[2,4,40,34], index: 2, kind: input, shape index: {}, may-alias: {2,3}]
  %s3 = inlined_call_operand.vmem [shape: f32[2,4,40,34], index: 3, kind: input, shape index: {}, may-alias: {2,3}]
  %s4 = inlined_call_operand.vmem [shape: f32[2,1,32,32], index: 4, kind: output, shape index: {}]
  %s5 = sld [smem:[#allocation0]]
  $region143: #{pdem_forward.3} parent=0
    _
  %s7 = ssub.s32 1, %s5
  %s8 = scalar_select 0, %s7, %s5
  %9 = sst [smem:[#allocation3]] %s1
  $region1: #{pdem_forward.3} parent=0
    #allocation4 [shape = 'u8[512]{0}', space=smem, size = 0x200, scoped, tag = 'input window, operand 0, single buffered']
    #allocation5 [shape = 's32[2]{0}', space=sflag, size = 0x8, scoped, tag = 'scoped memory for pdem_forward.3']
    #allocation6 [shape = 'u8[131072]{0}', space=vmem, size = 0x20000, scoped, tag = 'input window, operand 2']
    #allocation7 [shape = 'u8[32768]{0}', space=vmem, size = 0x8000, scoped, tag = 'input window, operand 3']
    %10 = vsyncpa [#allocation5], 0
    loop: start=0, step=1, limit=4
    $region2: #{pdem_forward.3} parent=1 // loop_pre_header
      _
    $region3: #{pdem_forward.3} parent=1 // loop_header
      %s12 = sphi 0, %s16
      %p13 = scmp.ge.s32.totalorder %s12, 4
      %s19 = sphi 0, %s31
      %s20 = sphi 0, %s27
      %s21 = sphi 0, %s19
      %s22 = sphi 0, %s20
      %s23 = sphi 0, %s21
      %s24 = sphi 0, %s22
      %s32 = sphi 0, %s32
      %s34 = sphi 0, %s32
      %s35 = sphi 0, %s34
      %s49 = sphi 0, %s35
      %s53 = sphi 0, %s53
      %s55 = sphi 0, %s53
      %s56 = sphi 0, %s55
      %s70 = sphi 0, %s56
      %s78 = sphi 0, %s80
      %s81 = sphi 0, %s78
      %s82 = sphi 0, %s81
      %s98 = sphi 0, %s82
      %s110 = sphi 0, %s112
      %s113 = sphi 0, %s110
      %s114 = sphi 0, %s113
      %s130 = sphi 0, %s114
      %s138 = sphi 0, %s140
      %s141 = sphi 0, %s138
      %s142 = sphi 0, %s141
      %s158 = sphi 0, %s142
    $region4: #{pdem_forward.3} parent=1 // loop_header_branch
      %15 = sbr.rel (%p13) target = $region8
    $region5: #{pdem_forward.3} parent=1 // loop_body
      %s17 = ssub.s32 %s12, 1
      %s18 = ssub.s32 %s12, 2
      %s25 = sadd.s32 1, %s20
      %p26 = scmp.ge.s32.totalorder %s25, 1
      %s27 = scalar_select %p26, 0, %s25
      %s28 = sadd.s32 1, %s19
      %s29 = scalar_select %p26, %s28, %s19
      %p30 = scmp.ge.s32.totalorder %s29, 2
      %s31 = scalar_select %p30, 0, %s29
      %s33 = sadd.s32 %s32, 1
      %p36 = scmp.eq.s32.totalorder %s12, 1
      %p37 = scmp.ne.s32.totalorder %s32, %s34
      %p38 = scmp.eq.s32.totalorder %s12, 0
      %p39 = por %p37, %p38
      %p40 = scmp.ne.s32.totalorder %s32, %s34
      %p41 = scmp.eq.s32.totalorder %s17, 1
      %p42 = por %p40, %p41
      %p43 = scmp.ne.s32.totalorder %s34, %s35
      %p44 = scmp.eq.s32.totalorder %s17, 0
      %p45 = por %p43, %p44
      %p46 = scmp.ne.s32.totalorder %s34, %s35
      %p47 = scmp.eq.s32.totalorder %s18, 1
      %p48 = por %p46, %p47
      %p50 = scmp.ne.s32.totalorder %s35, %s49
      %p51 = scmp.eq.s32.totalorder %s18, 0
      %p52 = por %p50, %p51
      %s54 = sadd.s32 %s53, 1
      %p57 = scmp.eq.s32.totalorder %s12, 1
      %p58 = scmp.ne.s32.totalorder %s53, %s55
      %p59 = scmp.eq.s32.totalorder %s12, 0
      %p60 = por %p58, %p59
      %p61 = scmp.ne.s32.totalorder %s53, %s55
      %p62 = scmp.eq.s32.totalorder %s17, 1
      %p63 = por %p61, %p62
      %p64 = scmp.ne.s32.totalorder %s55, %s56
      %p65 = scmp.eq.s32.totalorder %s17, 0
      %p66 = por %p64, %p65
      %p67 = scmp.ne.s32.totalorder %s55, %s56
      %p68 = scmp.eq.s32.totalorder %s18, 1
      %p69 = por %p67, %p68
      %p71 = scmp.ne.s32.totalorder %s56, %s70
      %p72 = scmp.eq.s32.totalorder %s18, 0
      %p73 = por %p71, %p72
      %s74 = ssub.s32 %s19, %s31
      %s75 = ssub.s32 %s20, %s27
      %s76 = sor.u32 %s74, %s75
      %p77 = scmp.eq.s32.totalorder %s76, 0
      %s79 = sadd.s32 %s78, 1
      %s80 = scalar_select %p77, %s78, %s79
      %p83 = pneg %p77
      %p84 = scmp.eq.s32.totalorder %s12, 1
      %p85 = por %p83, %p84
      %p86 = scmp.ne.s32.totalorder %s78, %s81
      %p87 = scmp.eq.s32.totalorder %s12, 0
      %p88 = por %p86, %p87
      %p89 = scmp.ne.s32.totalorder %s78, %s81
      %p90 = scmp.eq.s32.totalorder %s17, 1
      %p91 = por %p89, %p90
      %p92 = scmp.ne.s32.totalorder %s81, %s82
      %p93 = scmp.eq.s32.totalorder %s17, 0
      %p94 = por %p92, %p93
      %p95 = scmp.ne.s32.totalorder %s81, %s82
      %p96 = scmp.eq.s32.totalorder %s18, 1
      %p97 = por %p95, %p96
      %p99 = scmp.ne.s32.totalorder %s82, %s98
      %p100 = scmp.eq.s32.totalorder %s18, 0
      %p101 = por %p99, %p100
      %s102 = sadd.s32 %s20, 1
      %s103 = smul.u32 %s102, 4
      %s104 = sadd.s32 %s27, 1
      %s105 = smul.u32 %s104, 4
      %s106 = ssub.s32 %s19, %s31
      %s107 = ssub.s32 %s103, %s105
      %s108 = sor.u32 %s106, %s107
      %p109 = scmp.eq.s32.totalorder %s108, 0
      %s111 = sadd.s32 %s110, 1
      %s112 = scalar_select %p109, %s110, %s111
      %p115 = pneg %p109
      %p116 = scmp.eq.s32.totalorder %s12, 1
      %p117 = por %p115, %p116
      %p118 = scmp.ne.s32.totalorder %s110, %s113
      %p119 = scmp.eq.s32.totalorder %s12, 0
      %p120 = por %p118, %p119
      %p121 = scmp.ne.s32.totalorder %s110, %s113
      %p122 = scmp.eq.s32.totalorder %s17, 1
      %p123 = por %p121, %p122
      %p124 = scmp.ne.s32.totalorder %s113, %s114
      %p125 = scmp.eq.s32.totalorder %s17, 0
      %p126 = por %p124, %p125
      %p127 = scmp.ne.s32.totalorder %s113, %s114
      %p128 = scmp.eq.s32.totalorder %s18, 1
      %p129 = por %p127, %p128
      %p131 = scmp.ne.s32.totalorder %s114, %s130
      %p132 = scmp.eq.s32.totalorder %s18, 0
      %p133 = por %p131, %p132
      %s134 = ssub.s32 %s19, %s31
      %s135 = ssub.s32 %s20, %s27
      %s136 = sor.u32 %s134, %s135
      %p137 = scmp.eq.s32.totalorder %s136, 0
      %s139 = sadd.s32 %s138, 1
      %s140 = scalar_select %p137, %s138, %s139
      %p143 = pneg %p137
      %p144 = scmp.eq.s32.totalorder %s12, 1
      %p145 = por %p143, %p144
      %p146 = scmp.ne.s32.totalorder %s138, %s141
      %p147 = scmp.eq.s32.totalorder %s12, 0
      %p148 = por %p146, %p147
      %p149 = scmp.ne.s32.totalorder %s138, %s141
      %p150 = scmp.eq.s32.totalorder %s17, 1
      %p151 = por %p149, %p150
      %p152 = scmp.ne.s32.totalorder %s141, %s142
      %p153 = scmp.eq.s32.totalorder %s17, 0
      %p154 = por %p152, %p153
      %p155 = scmp.ne.s32.totalorder %s141, %s142
      %p156 = scmp.eq.s32.totalorder %s18, 1
      %p157 = por %p155, %p156
      %p159 = scmp.ne.s32.totalorder %s142, %s158
      %p160 = scmp.eq.s32.totalorder %s18, 0
      %p161 = por %p159, %p160
      %p162 = scmp.le.s32.totalorder 1, %s12
      %p163 = scmp.lt.s32.totalorder %s12, 3
      %p164 = pnand %p162, %p163
      %p165 = pneg %p164
      // Predicated region
      $region9: #{pdem_forward.3} parent=5 // pred_check
        _
      $region10: #{pdem_forward.3} parent=5 // pred_check_branch
        %167 = sbr.rel (%p164) target = $region12
      $region11: #{pdem_forward.3} parent=5 // pred_region
        %s168 = ssub.s32 %s12, 1
        // Predicated region
        $region13: #{pdem_forward.3} parent=11 // pred_check
          %p169 = pneg %p45
        $region14: #{pdem_forward.3} parent=11 // pred_check_branch
          %171 = sbr.rel (%p169) target = $region16
        $region15: #{pdem_forward.3} parent=11 // pred_region
          %173 = vsyncadd [#allocation5], 0
          %s175 = sshll.u32 %s0, 4
          %s176 = int_to_ptr.vmem [resolvable:$true] %s175
          %178 = dma.vmem_to_smem %s176, 16, [#allocation4], [#allocation5]
        $region16: #{pdem_forward.3} parent=11 // pred_fallthru
          _
        // Predicated region
        $region17: #{pdem_forward.3} parent=11 // pred_check
          %p179 = pneg %p66
        $region18: #{pdem_forward.3} parent=11 // pred_check_branch
          %181 = sbr.rel (%p179) target = $region20
        $region19: #{pdem_forward.3} parent=11 // pred_region
          _
        $region20: #{pdem_forward.3} parent=11 // pred_fallthru
          _
      $region12: #{pdem_forward.3} parent=5 // pred_fallthru
        _
      %p182 = scmp.lt.s32.totalorder %s12, 2
      // Predicated region
      $region21: #{pdem_forward.3} parent=5 // pred_check
        %p183 = pneg %p182
      $region22: #{pdem_forward.3} parent=5 // pred_check_branch
        %185 = sbr.rel (%p183) target = $region24
      $region23: #{pdem_forward.3} parent=5 // pred_region
        // Predicated region
        $region25: #{pdem_forward.3} parent=23 // pred_check
          %p186 = pneg %p88
        $region26: #{pdem_forward.3} parent=23 // pred_check_branch
          %188 = sbr.rel (%p186) target = $region28
        $region27: #{pdem_forward.3} parent=23 // pred_region
          %s189 = sand.u32 %s78, 1
          %s190 = sand.u32 %s78, 1
          %s191 = smul.addr %s190, 128
          %s192 = scalar_lea.vmem [#allocation6], %s191
          %s193 = smul.u32 4, %s20
          %s194 = ssub.s32 5, %s193
          %p195 = scmp.lt.s32.totalorder %s194, 4
          %s196 = scalar_select %p195, %s194, 4
          %s197 = smul.u32 32, %s196
          %p198 = scmp.ne.s32.totalorder 0, %s197
          %s199 = smul.addr %s19, 20
          %s200 = sadd.s32 %s193, %s199
          %s201 = smul.addr %s200, 8
          %s202 = scalar_lea.vmem %s2, %s201
          // Predicated region
          $region29: #{pdem_forward.3} parent=27 // pred_check
            %p203 = pneg %p198
          $region30: #{pdem_forward.3} parent=27 // pred_check_branch
            %205 = sbr.rel (%p203) target = $region32
          $region31: #{pdem_forward.3} parent=27 // pred_region
            // Predicated region
            $region33: #{pdem_forward.3} parent=31 // pred_check
              _
            $region34: #{pdem_forward.3} parent=31 // pred_check_branch
              %207 = sbr.rel (0) target = $region36
            $region35: #{pdem_forward.3} parent=31 // pred_region
              // Predicated region
              $region55: #{pdem_forward.3} parent=35 // pred_check
                _
              $region56: #{pdem_forward.3} parent=35 // pred_check_branch
                %293 = sbr.rel (0) target = $region58
              $region57: #{pdem_forward.3} parent=35 // pred_region
                %s294 = sshrl.u32 %s196, 2
                // While loop
                $region59: #{pdem_forward.3} parent=57 // loop_pre_header
                  _
                $region60: #{pdem_forward.3} parent=57 // loop_header
                  %s296 = sphi 0, %s298
                  %p297 = scmp.ge.s32.totalorder %s296, %s294
                  %s301 = sphi 0, %s338
                  %s302 = sphi %s202, %s341
                  %s303 = sphi %s192, %s342
                $region61: #{pdem_forward.3} parent=57 // loop_header_branch
                  %300 = sbr.rel (%p297) target = $region65
                $region62: #{pdem_forward.3} parent=57 // loop_body
                  %v304 = vld [vmem:[%s302] sm:$0xff]
                  %305 = vst [vmem:[%s303] sm:$0xff] %v304
                  %v306 = vld [vmem:[%s302 + $0x8] sm:$0xff]
                  %307 = vst [vmem:[%s303 + $0x8] sm:$0xff] %v306
                  %v308 = vld [vmem:[%s302 + $0x10] sm:$0xff]
                  %309 = vst [vmem:[%s303 + $0x10] sm:$0xff] %v308
                  %v310 = vld [vmem:[%s302 + $0x18] sm:$0xff]
                  %311 = vst [vmem:[%s303 + $0x18] sm:$0xff] %v310
                  %v312 = vld [vmem:[%s302 + $0x28] sm:$0xff]
                  %313 = vst [vmem:[%s303 + $0x20] sm:$0xff] %v312
                  %v314 = vld [vmem:[%s302 + $0x30] sm:$0xff]
                  %315 = vst [vmem:[%s303 + $0x28] sm:$0xff] %v314
                  %v316 = vld [vmem:[%s302 + $0x38] sm:$0xff]
                  %317 = vst [vmem:[%s303 + $0x30] sm:$0xff] %v316
                  %v318 = vld [vmem:[%s302 + $0x40] sm:$0xff]
                  %319 = vst [vmem:[%s303 + $0x38] sm:$0xff] %v318
                  %v320 = vld [vmem:[%s302 + $0x50] sm:$0xff]
                  %321 = vst [vmem:[%s303 + $0x40] sm:$0xff] %v320
                  %v322 = vld [vmem:[%s302 + $0x58] sm:$0xff]
                  %323 = vst [vmem:[%s303 + $0x48] sm:$0xff] %v322
                  %v324 = vld [vmem:[%s302 + $0x60] sm:$0xff]
                  %325 = vst [vmem:[%s303 + $0x50] sm:$0xff] %v324
                  %v326 = vld [vmem:[%s302 + $0x68] sm:$0xff]
                  %327 = vst [vmem:[%s303 + $0x58] sm:$0xff] %v326
                  %v328 = vld [vmem:[%s302 + $0x78] sm:$0xff]
                  %329 = vst [vmem:[%s303 + $0x60] sm:$0xff] %v328
                  %v330 = vld [vmem:[%s302 + $0x80] sm:$0xff]
                  %331 = vst [vmem:[%s303 + $0x68] sm:$0xff] %v330
                  %v332 = vld [vmem:[%s302 + $0x88] sm:$0xff]
                  %333 = vst [vmem:[%s303 + $0x70] sm:$0xff] %v332
                  %v334 = vld [vmem:[%s302 + $0x90] sm:$0xff]
                  %335 = vst [vmem:[%s303 + $0x78] sm:$0xff] %v334
                  %s336 = sadd.s32 1, %s301
                  %p337 = scmp.ge.s32.totalorder %s336, %s294
                  %s338 = scalar_select %p337, 0, %s336
                  %s339 = smul.u32 %s338, 32
                  %s340 = smul.u32 %s338, 32
                  %s341 = scalar_lea.vmem %s202, %s339
                  %s342 = scalar_lea.vmem %s192, %s340 [#allocation6]
                $region63: #{pdem_forward.3} parent=57 // loop_footer
                  %s298 = sadd.s32 %s296, 1
                $region64: #{pdem_forward.3} parent=57 // loop_footer_branch
                  %295 = sbr.rel target = $region60
                $region65: #{pdem_forward.3} parent=57 // loop_exit
                  _
                %s343 = sshrl.u32 %s196, 2
                %s344 = sand.u32 %s196, 3
                %s345 = smul.u32 %s343, 4
                %s346 = smul.u32 8, %s345
                %s347 = scalar_lea.vmem %s202, %s346
                %s348 = smul.u32 8, %s345
                %s349 = scalar_lea.vmem %s192, %s348 [#allocation6]
                // While loop
                $region66: #{pdem_forward.3} parent=57 // loop_pre_header
                  _
                $region67: #{pdem_forward.3} parent=57 // loop_header
                  %s351 = sphi 0, %s353
                  %p352 = scmp.ge.s32.totalorder %s351, %s344
                  %s356 = sphi 0, %s369
                  %s357 = sphi %s347, %s372
                  %s358 = sphi %s349, %s373
                $region68: #{pdem_forward.3} parent=57 // loop_header_branch
                  %355 = sbr.rel (%p352) target = $region72
                $region69: #{pdem_forward.3} parent=57 // loop_body
                  %v359 = vld [vmem:[%s357] sm:$0xff]
                  %360 = vst [vmem:[%s358] sm:$0xff] %v359
                  %v361 = vld [vmem:[%s357 + $0x28] sm:$0xff]
                  %362 = vst [vmem:[%s358 + $0x20] sm:$0xff] %v361
                  %v363 = vld [vmem:[%s357 + $0x50] sm:$0xff]
                  %364 = vst [vmem:[%s358 + $0x40] sm:$0xff] %v363
                  %v365 = vld [vmem:[%s357 + $0x78] sm:$0xff]
                  %366 = vst [vmem:[%s358 + $0x60] sm:$0xff] %v365
                  %s367 = sadd.s32 1, %s356
                  %p368 = scmp.ge.s32.totalorder %s367, %s344
                  %s369 = scalar_select %p368, 0, %s367
                  %s370 = smul.u32 %s369, 8
                  %s371 = smul.u32 %s369, 8
                  %s372 = scalar_lea.vmem %s347, %s370
                  %s373 = scalar_lea.vmem %s349, %s371 [#allocation6]
                $region70: #{pdem_forward.3} parent=57 // loop_footer
                  %s353 = sadd.s32 %s351, 1
                $region71: #{pdem_forward.3} parent=57 // loop_footer_branch
                  %350 = sbr.rel target = $region67
                $region72: #{pdem_forward.3} parent=57 // loop_exit
                  _
              $region58: #{pdem_forward.3} parent=35 // pred_fallthru
                _
              // Predicated region
              $region73: #{pdem_forward.3} parent=35 // pred_check
                _
              $region74: #{pdem_forward.3} parent=35 // pred_check_branch
                %375 = sbr.rel target = $region76
              $region75: #{pdem_forward.3} parent=35 // pred_region
                _
              $region76: #{pdem_forward.3} parent=35 // pred_fallthru
                _
            $region36: #{pdem_forward.3} parent=31 // pred_fallthru
              _
            // Predicated region
            $region37: #{pdem_forward.3} parent=31 // pred_check
              _
            $region38: #{pdem_forward.3} parent=31 // pred_check_branch
              %209 = sbr.rel target = $region40
            $region39: #{pdem_forward.3} parent=31 // pred_region
              %s211 = ssub.s32 256, 1
              %s212 = sshrl.u32 %s196, 2
              // While loop
              $region41: #{pdem_forward.3} parent=39 // loop_pre_header
                _
              $region42: #{pdem_forward.3} parent=39 // loop_header
                %s214 = sphi 0, %s216
                %p215 = scmp.ge.s32.totalorder %s214, %s212
                %s219 = sphi 0, %s256
                %s220 = sphi %s202, %s259
                %s221 = sphi %s192, %s260
              $region43: #{pdem_forward.3} parent=39 // loop_header_branch
                %218 = sbr.rel (%p215) target = $region47
              $region44: #{pdem_forward.3} parent=39 // loop_body
                %v222 = vld [vmem:[%s220] sm:%s211]
                %223 = vst [vmem:[%s221] sm:%s211] %v222
                %v224 = vld [vmem:[%s220 + $0x8] sm:%s211]
                %225 = vst [vmem:[%s221 + $0x8] sm:%s211] %v224
                %v226 = vld [vmem:[%s220 + $0x10] sm:%s211]
                %227 = vst [vmem:[%s221 + $0x10] sm:%s211] %v226
                %v228 = vld [vmem:[%s220 + $0x18] sm:%s211]
                %229 = vst [vmem:[%s221 + $0x18] sm:%s211] %v228
                %v230 = vld [vmem:[%s220 + $0x28] sm:%s211]
                %231 = vst [vmem:[%s221 + $0x20] sm:%s211] %v230
                %v232 = vld [vmem:[%s220 + $0x30] sm:%s211]
                %233 = vst [vmem:[%s221 + $0x28] sm:%s211] %v232
                %v234 = vld [vmem:[%s220 + $0x38] sm:%s211]
                %235 = vst [vmem:[%s221 + $0x30] sm:%s211] %v234
                %v236 = vld [vmem:[%s220 + $0x40] sm:%s211]
                %237 = vst [vmem:[%s221 + $0x38] sm:%s211] %v236
                %v238 = vld [vmem:[%s220 + $0x50] sm:%s211]
                %239 = vst [vmem:[%s221 + $0x40] sm:%s211] %v238
                %v240 = vld [vmem:[%s220 + $0x58] sm:%s211]
                %241 = vst [vmem:[%s221 + $0x48] sm:%s211] %v240
                %v242 = vld [vmem:[%s220 + $0x60] sm:%s211]
                %243 = vst [vmem:[%s221 + $0x50] sm:%s211] %v242
                %v244 = vld [vmem:[%s220 + $0x68] sm:%s211]
                %245 = vst [vmem:[%s221 + $0x58] sm:%s211] %v244
                %v246 = vld [vmem:[%s220 + $0x78] sm:%s211]
                %247 = vst [vmem:[%s221 + $0x60] sm:%s211] %v246
                %v248 = vld [vmem:[%s220 + $0x80] sm:%s211]
                %249 = vst [vmem:[%s221 + $0x68] sm:%s211] %v248
                %v250 = vld [vmem:[%s220 + $0x88] sm:%s211]
                %251 = vst [vmem:[%s221 + $0x70] sm:%s211] %v250
                %v252 = vld [vmem:[%s220 + $0x90] sm:%s211]
                %253 = vst [vmem:[%s221 + $0x78] sm:%s211] %v252
                %s254 = sadd.s32 1, %s219
                %p255 = scmp.ge.s32.totalorder %s254, %s212
                %s256 = scalar_select %p255, 0, %s254
                %s257 = smul.u32 %s256, 32
                %s258 = smul.u32 %s256, 32
                %s259 = scalar_lea.vmem %s202, %s257
                %s260 = scalar_lea.vmem %s192, %s258 [#allocation6]
              $region45: #{pdem_forward.3} parent=39 // loop_footer
                %s216 = sadd.s32 %s214, 1
              $region46: #{pdem_forward.3} parent=39 // loop_footer_branch
                %213 = sbr.rel target = $region42
              $region47: #{pdem_forward.3} parent=39 // loop_exit
                _
              %s261 = sshrl.u32 %s196, 2
              %s262 = sand.u32 %s196, 3
              %s263 = smul.u32 %s261, 4
              %s264 = smul.u32 8, %s263
              %s265 = scalar_lea.vmem %s202, %s264
              %s266 = smul.u32 8, %s263
              %s267 = scalar_lea.vmem %s192, %s266 [#allocation6]
              // While loop
              $region48: #{pdem_forward.3} parent=39 // loop_pre_header
                _
              $region49: #{pdem_forward.3} parent=39 // loop_header
                %s269 = sphi 0, %s271
                %p270 = scmp.ge.s32.totalorder %s269, %s262
                %s274 = sphi 0, %s287
                %s275 = sphi %s265, %s290
                %s276 = sphi %s267, %s291
              $region50: #{pdem_forward.3} parent=39 // loop_header_branch
                %273 = sbr.rel (%p270) target = $region54
              $region51: #{pdem_forward.3} parent=39 // loop_body
                %v277 = vld [vmem:[%s275] sm:%s211]
                %278 = vst [vmem:[%s276] sm:%s211] %v277
                %v279 = vld [vmem:[%s275 + $0x28] sm:%s211]
                %280 = vst [vmem:[%s276 + $0x20] sm:%s211] %v279
                %v281 = vld [vmem:[%s275 + $0x50] sm:%s211]
                %282 = vst [vmem:[%s276 + $0x40] sm:%s211] %v281
                %v283 = vld [vmem:[%s275 + $0x78] sm:%s211]
                %284 = vst [vmem:[%s276 + $0x60] sm:%s211] %v283
                %s285 = sadd.s32 1, %s274
                %p286 = scmp.ge.s32.totalorder %s285, %s262
                %s287 = scalar_select %p286, 0, %s285
                %s288 = smul.u32 %s287, 8
                %s289 = smul.u32 %s287, 8
                %s290 = scalar_lea.vmem %s265, %s288
                %s291 = scalar_lea.vmem %s267, %s289 [#allocation6]
              $region52: #{pdem_forward.3} parent=39 // loop_footer
                %s271 = sadd.s32 %s269, 1
              $region53: #{pdem_forward.3} parent=39 // loop_footer_branch
                %268 = sbr.rel target = $region49
              $region54: #{pdem_forward.3} parent=39 // loop_exit
                _
            $region40: #{pdem_forward.3} parent=31 // pred_fallthru
              _
          $region32: #{pdem_forward.3} parent=27 // pred_fallthru
            _
          %376 = vnop
        $region28: #{pdem_forward.3} parent=23 // pred_fallthru
          _
        // Predicated region
        $region77: #{pdem_forward.3} parent=23 // pred_check
          %p377 = pneg %p120
        $region78: #{pdem_forward.3} parent=23 // pred_check_branch
          %379 = sbr.rel (%p377) target = $region80
        $region79: #{pdem_forward.3} parent=23 // pred_region
          %s380 = sand.u32 %s110, 1
          %s381 = sand.u32 %s110, 1
          %s382 = smul.addr %s381, 32
          %s383 = scalar_lea.vmem [#allocation7], %s382
          %s384 = sadd.s32 %s20, 1
          %s385 = smul.u32 %s384, 4
          %s386 = smul.addr %s19, 20
          %s387 = sadd.s32 %s385, %s386
          %s388 = smul.addr %s387, 8
          %s389 = scalar_lea.vmem %s3, %s388
          // Predicated region
          $region81: #{pdem_forward.3} parent=79 // pred_check
            _
          $region82: #{pdem_forward.3} parent=79 // pred_check_branch
            %391 = sbr.rel (0) target = $region84
          $region83: #{pdem_forward.3} parent=79 // pred_region
            // Predicated region
            $region85: #{pdem_forward.3} parent=83 // pred_check
              _
            $region86: #{pdem_forward.3} parent=83 // pred_check_branch
              %393 = sbr.rel (0) target = $region88
            $region87: #{pdem_forward.3} parent=83 // pred_region
              // Predicated region
              $region100: #{pdem_forward.3} parent=87 // pred_check
                _
              $region101: #{pdem_forward.3} parent=87 // pred_check_branch
                %415 = sbr.rel (0) target = $region103
              $region102: #{pdem_forward.3} parent=87 // pred_region
                loop: start=0, step=1, limit=1
                $region104: #{pdem_forward.3} parent=102 // loop_pre_header
                  _
                $region105: #{pdem_forward.3} parent=102 // loop_header
                  %s417 = sphi 0, %s421
                  %p418 = scmp.ge.s32.totalorder %s417, 1
                  %s422 = sphi %s389, %s389
                  %s423 = sphi %s383, %s383
                $region106: #{pdem_forward.3} parent=102 // loop_header_branch
                  %420 = sbr.rel (%p418) target = $region110
                $region107: #{pdem_forward.3} parent=102 // loop_body
                  %v424 = vld [vmem:[%s422] sm:$0xff]
                  %425 = vst [vmem:[%s423] sm:$0xff] %v424
                  %v426 = vld [vmem:[%s422 + $0x28] sm:$0xff]
                  %427 = vst [vmem:[%s423 + $0x8] sm:$0xff] %v426
                  %v428 = vld [vmem:[%s422 + $0x50] sm:$0xff]
                  %429 = vst [vmem:[%s423 + $0x10] sm:$0xff] %v428
                  %v430 = vld [vmem:[%s422 + $0x78] sm:$0xff]
                  %431 = vst [vmem:[%s423 + $0x18] sm:$0xff] %v430
                $region108: #{pdem_forward.3} parent=102 // loop_footer
                  %s421 = sadd.s32 1, %s417
                $region109: #{pdem_forward.3} parent=102 // loop_footer_branch
                  %416 = sbr.rel target = $region105
                $region110: #{pdem_forward.3} parent=102 // loop_exit
                  _
              $region103: #{pdem_forward.3} parent=87 // pred_fallthru
                _
              // Predicated region
              $region111: #{pdem_forward.3} parent=87 // pred_check
                _
              $region112: #{pdem_forward.3} parent=87 // pred_check_branch
                %433 = sbr.rel target = $region114
              $region113: #{pdem_forward.3} parent=87 // pred_region
                _
              $region114: #{pdem_forward.3} parent=87 // pred_fallthru
                _
            $region88: #{pdem_forward.3} parent=83 // pred_fallthru
              _
            // Predicated region
            $region89: #{pdem_forward.3} parent=83 // pred_check
              _
            $region90: #{pdem_forward.3} parent=83 // pred_check_branch
              %395 = sbr.rel target = $region92
            $region91: #{pdem_forward.3} parent=83 // pred_region
              %s397 = ssub.s32 256, 1
              loop: start=0, step=1, limit=1
              $region93: #{pdem_forward.3} parent=91 // loop_pre_header
                _
              $region94: #{pdem_forward.3} parent=91 // loop_header
                %s399 = sphi 0, %s403
                %p400 = scmp.ge.s32.totalorder %s399, 1
                %s404 = sphi %s389, %s389
                %s405 = sphi %s383, %s383
              $region95: #{pdem_forward.3} parent=91 // loop_header_branch
                %402 = sbr.rel (%p400) target = $region99
              $region96: #{pdem_forward.3} parent=91 // loop_body
                %v406 = vld [vmem:[%s404] sm:%s397]
                %407 = vst [vmem:[%s405] sm:%s397] %v406
                %v408 = vld [vmem:[%s404 + $0x28] sm:%s397]
                %409 = vst [vmem:[%s405 + $0x8] sm:%s397] %v408
                %v410 = vld [vmem:[%s404 + $0x50] sm:%s397]
                %411 = vst [vmem:[%s405 + $0x10] sm:%s397] %v410
                %v412 = vld [vmem:[%s404 + $0x78] sm:%s397]
                %413 = vst [vmem:[%s405 + $0x18] sm:%s397] %v412
              $region97: #{pdem_forward.3} parent=91 // loop_footer
                %s403 = sadd.s32 1, %s399
              $region98: #{pdem_forward.3} parent=91 // loop_footer_branch
                %398 = sbr.rel target = $region94
              $region99: #{pdem_forward.3} parent=91 // loop_exit
                _
            $region92: #{pdem_forward.3} parent=83 // pred_fallthru
              _
          $region84: #{pdem_forward.3} parent=79 // pred_fallthru
            _
          %434 = vnop
        $region80: #{pdem_forward.3} parent=23 // pred_fallthru
          _
      $region24: #{pdem_forward.3} parent=5 // pred_fallthru
        _
      %p435 = scmp.le.s32.totalorder 1, %s12
      %p436 = scmp.lt.s32.totalorder %s12, 3
      %p437 = pnand %p435, %p436
      %p438 = pneg %p437
      // Predicated region
      $region115: #{pdem_forward.3} parent=5 // pred_check
        _
      $region116: #{pdem_forward.3} parent=5 // pred_check_branch
        %440 = sbr.rel (%p437) target = $region118
      $region117: #{pdem_forward.3} parent=5 // pred_region
        %s441 = ssub.s32 %s12, 1
        // Predicated region
        $region119: #{pdem_forward.3} parent=117 // pred_check
          %p442 = pneg %p45
        $region120: #{pdem_forward.3} parent=117 // pred_check_branch
          %444 = sbr.rel (%p442) target = $region122
        $region121: #{pdem_forward.3} parent=117 // pred_region
          %446 = dma.done [#allocation5], 16
        $region122: #{pdem_forward.3} parent=117 // pred_fallthru
          _
        %s447 = sand.u32 %s81, 1
        %s448 = sand.u32 %s81, 1
        %s449 = smul.addr %s448, 128
        %s450 = scalar_lea.vmem [#allocation6], %s449
        // Predicated region
        $region123: #{pdem_forward.3} parent=117 // pred_check
          %p451 = pneg %p94
        $region124: #{pdem_forward.3} parent=117 // pred_check_branch
          %453 = sbr.rel (%p451) target = $region126
        $region125: #{pdem_forward.3} parent=117 // pred_region
          _
        $region126: #{pdem_forward.3} parent=117 // pred_fallthru
          _
        %s454 = sand.u32 %s113, 1
        %s455 = sand.u32 %s113, 1
        %s456 = smul.addr %s455, 32
        %s457 = scalar_lea.vmem [#allocation7], %s456
        // Predicated region
        $region127: #{pdem_forward.3} parent=117 // pred_check
          %p458 = pneg %p126
        $region128: #{pdem_forward.3} parent=117 // pred_check_branch
          %460 = sbr.rel (%p458) target = $region130
        $region129: #{pdem_forward.3} parent=117 // pred_region
          _
        $region130: #{pdem_forward.3} parent=117 // pred_fallthru
          _
        %461 = sfence
        %p462 = pneg %p45
        %p463 = pneg %p42
        %p464 = pneg %p66
        %p465 = pneg %p63
        %s466 = sand.u32 %s81, 1
        %s467 = sand.u32 %s81, 1
        %s468 = smul.addr %s467, 128
        %s469 = scalar_lea.vmem [#allocation6], %s468
        %p470 = pneg %p94
        %p471 = pneg %p91
        %s472 = sand.u32 %s113, 1
        %s473 = sand.u32 %s113, 1
        %s474 = smul.addr %s473, 32
        %s475 = scalar_lea.vmem [#allocation7], %s474
        %p476 = pneg %p126
        %p477 = pneg %p123
        %p478 = pneg %p154
        %p479 = pneg %p151
        %s480 = smul.u32 4, %s22
        %p481 = scmp.lt.s32.totalorder %s21, 1
        %s482 = scalar_select %p481, %s21, 1
        %p483 = scmp.lt.s32.totalorder %s480, 3
        %s484 = scalar_select %p483, %s480, 3
        %s485 = smul.addr %s482, 4
        %s486 = sadd.s32 %s484, %s485
        %s487 = smul.addr %s486, 8
        %s488 = scalar_lea.vmem %s4, %s487
        %s489 = smul.u32 4, %s22
        %s490 = ssub.s32 5, %s489
        %p491 = scmp.lt.s32.totalorder %s490, 4
        %s492 = scalar_select %p491, %s490, 4
        %s493 = smul.u32 32, %s492
        %s494 = sadd.s32 %s22, 1
        %s495 = smul.u32 %s494, 4
        %s496 = smul.u32 4, %s22
        %p497 = scmp.lt.s32.totalorder %s21, 1
        %s498 = scalar_select %p497, %s21, 1
        %p499 = scmp.lt.s32.totalorder %s496, 3
        %s500 = scalar_select %p499, %s496, 3
        %s501 = smul.addr %s498, 4
        %s502 = sadd.s32 %s500, %s501
        %s503 = smul.addr %s502, 8
        %s504 = scalar_lea.vmem %s4, %s503
        %s505 = smul.u32 4, %s22
        %v506 = vld [vmem:[%s450] sm:$0xff]
        %v507 = vld [vmem:[%s450 + $0x8] sm:$0xff]
        %v508 = vld [vmem:[%s450 + $0x10] sm:$0xff]
        %v509 = vld [vmem:[%s450 + $0x18] sm:$0xff]
        %v510 = vld [vmem:[%s450 + $0x20] sm:$0xff]
        %v511 = vld [vmem:[%s450 + $0x28] sm:$0xff]
        %v512 = vld [vmem:[%s450 + $0x30] sm:$0xff]
        %v513 = vld [vmem:[%s450 + $0x38] sm:$0xff]
        %v514 = vld [vmem:[%s450 + $0x40] sm:$0xff]
        %v515 = vld [vmem:[%s450 + $0x48] sm:$0xff]
        %v516 = vld [vmem:[%s450 + $0x50] sm:$0xff]
        %v517 = vld [vmem:[%s450 + $0x58] sm:$0xff]
        %v518 = vld [vmem:[%s450 + $0x60] sm:$0xff]
        %v519 = vld [vmem:[%s450 + $0x68] sm:$0xff]
        %v520 = vld [vmem:[%s450 + $0x70] sm:$0xff]
        %v521 = vld [vmem:[%s450 + $0x78] sm:$0xff]
        %vm522 = vcmask 277504
        %523 = vst.msk [vmem:[#allocation2] sm:$0xff] %vm522, %v506
        %524 = vst.msk [vmem:[#allocation2 + $0x8] sm:$0xff] %vm522, %v507
        %525 = vst.msk [vmem:[#allocation2 + $0x10] sm:$0xff] %vm522, %v508
        %526 = vst.msk [vmem:[#allocation2 + $0x18] sm:$0xff] %vm522, %v509
        %527 = vst.msk [vmem:[#allocation2 + $0x28] sm:$0xff] %vm522, %v510
        %528 = vst.msk [vmem:[#allocation2 + $0x30] sm:$0xff] %vm522, %v511
        %529 = vst.msk [vmem:[#allocation2 + $0x38] sm:$0xff] %vm522, %v512
        %530 = vst.msk [vmem:[#allocation2 + $0x40] sm:$0xff] %vm522, %v513
        %531 = vst.msk [vmem:[#allocation2 + $0x50] sm:$0xff] %vm522, %v514
        %532 = vst.msk [vmem:[#allocation2 + $0x58] sm:$0xff] %vm522, %v515
        %533 = vst.msk [vmem:[#allocation2 + $0x60] sm:$0xff] %vm522, %v516
        %534 = vst.msk [vmem:[#allocation2 + $0x68] sm:$0xff] %vm522, %v517
        %535 = vst.msk [vmem:[#allocation2 + $0x78] sm:$0xff] %vm522, %v518
        %536 = vst.msk [vmem:[#allocation2 + $0x80] sm:$0xff] %vm522, %v519
        %537 = vst.msk [vmem:[#allocation2 + $0x88] sm:$0xff] %vm522, %v520
        %538 = vst.msk [vmem:[#allocation2 + $0x90] sm:$0xff] %vm522, %v521
        %v539 = vld [vmem:[%s457] sm:$0xff]
        %v540 = vld [vmem:[%s457 + $0x8] sm:$0xff]
        %v541 = vld [vmem:[%s457 + $0x10] sm:$0xff]
        %v542 = vld [vmem:[%s457 + $0x18] sm:$0xff]
        %543 = vst.msk [vmem:[#allocation2 + $0x20] sm:$0xff] %vm522, %v539
        %544 = vst.msk [vmem:[#allocation2 + $0x48] sm:$0xff] %vm522, %v540
        %545 = vst.msk [vmem:[#allocation2 + $0x70] sm:$0xff] %vm522, %v541
        %546 = vst.msk [vmem:[#allocation2 + $0x98] sm:$0xff] %vm522, %v542
        %s547 = sld [smem:[#allocation4]]
        %s548 = sld [smem:[#allocation4 + $0x1]]
        %s549 = sld [smem:[#allocation4 + $0x2]]
        %s550 = sld [smem:[#allocation4 + $0x3]]
        %s551 = sld [smem:[#allocation4 + $0x4]]
        %s552 = sld [smem:[#allocation4 + $0x5]]
        %s553 = sld [smem:[#allocation4 + $0x6]]
        %s554 = sld [smem:[#allocation4 + $0x7]]
        %s555 = sld [smem:[#allocation4 + $0x8]]
        %s556 = sld [smem:[#allocation4 + $0x9]]
        %s557 = sld [smem:[#allocation4 + $0xa]]
        %s558 = sld [smem:[#allocation4 + $0xb]]
        %s559 = sld [smem:[#allocation4 + $0xc]]
        %s560 = sld [smem:[#allocation4 + $0xd]]
        %s561 = sld [smem:[#allocation4 + $0xe]]
        %s562 = sld [smem:[#allocation4 + $0xf]]
        %s563 = sld [smem:[#allocation4 + $0x10]]
        %s564 = sld [smem:[#allocation4 + $0x11]]
        %s565 = sld [smem:[#allocation4 + $0x12]]
        %s566 = sld [smem:[#allocation4 + $0x13]]
        %s567 = sld [smem:[#allocation4 + $0x14]]
        %s568 = sld [smem:[#allocation4 + $0x15]]
        %s569 = sld [smem:[#allocation4 + $0x16]]
        %s570 = sld [smem:[#allocation4 + $0x17]]
        %s571 = sld [smem:[#allocation4 + $0x18]]
        %s572 = sld [smem:[#allocation4 + $0x19]]
        %s573 = sld [smem:[#allocation4 + $0x1a]]
        %s574 = sld [smem:[#allocation4 + $0x1b]]
        %s575 = sld [smem:[#allocation4 + $0x1c]]
        %s576 = sld [smem:[#allocation4 + $0x1d]]
        %s577 = sld [smem:[#allocation4 + $0x1e]]
        %s578 = sld [smem:[#allocation4 + $0x1f]]
        %s579 = sld [smem:[#allocation4 + $0x20]]
        %s580 = sld [smem:[#allocation4 + $0x21]]
        %s581 = sld [smem:[#allocation4 + $0x22]]
        %s582 = sld [smem:[#allocation4 + $0x23]]
        %s583 = sld [smem:[#allocation3]]
        %v584 = vstv %s583
        %v585 = vld [vmem:[#allocation2] sm:$0xff]
        %v586 = vld [vmem:[#allocation2 + $0x8] sm:$0xff]
        %v587 = vld [vmem:[#allocation2 + $0x10] sm:$0xff]
        %v588 = vld [vmem:[#allocation2 + $0x18] sm:$0xff]
        %v589 = vstv %s547
        %v590 = vmul.f32 %v585, %v589
        %v591 = vmul.f32 %v586, %v589
        %v592 = vmul.f32 %v587, %v589
        %v593 = vmul.f32 %v588, %v589
        %v594 = vadd.f32 %v584, %v590
        %v595 = vadd.f32 %v584, %v591
        %v596 = vadd.f32 %v584, %v592
        %v597 = vadd.f32 %v584, %v593
        %v598 = vstv %s548
        %v599 = vmul.f32 %v585, %v598
        %v600 = vmul.f32 %v586, %v598
        %v601 = vmul.f32 %v587, %v598
        %v602 = vmul.f32 %v588, %v598
        %607 = vrot.lane.b32.xlu0 %v599, 127
        %v608 = vpop.permute.xlu0 %607
        %609 = vrot.lane.b32.xlu0 %v600, 127
        %v610 = vpop.permute.xlu0 %609
        %611 = vrot.lane.b32.xlu0 %v601, 127
        %v612 = vpop.permute.xlu0 %611
        %613 = vrot.lane.b32.xlu0 %v602, 127
        %v614 = vpop.permute.xlu0 %613
        %v619 = vadd.f32 %v594, %v608
        %v620 = vadd.f32 %v595, %v610
        %v621 = vadd.f32 %v596, %v612
        %v622 = vadd.f32 %v597, %v614
        %v623 = vstv %s549
        %v624 = vmul.f32 %v585, %v623
        %v625 = vmul.f32 %v586, %v623
        %v626 = vmul.f32 %v587, %v623
        %v627 = vmul.f32 %v588, %v623
        %632 = vrot.lane.b32.xlu0 %v624, 126
        %v633 = vpop.permute.xlu0 %632
        %634 = vrot.lane.b32.xlu0 %v625, 126
        %v635 = vpop.permute.xlu0 %634
        %636 = vrot.lane.b32.xlu0 %v626, 126
        %v637 = vpop.permute.xlu0 %636
        %638 = vrot.lane.b32.xlu0 %v627, 126
        %v639 = vpop.permute.xlu0 %638
        %v644 = vadd.f32 %v619, %v633
        %v645 = vadd.f32 %v620, %v635
        %v646 = vadd.f32 %v621, %v637
        %v647 = vadd.f32 %v622, %v639
        %v648 = vld [vmem:[#allocation2 + $0x1] sm:$0xff]
        %v649 = vld [vmem:[#allocation2 + $0x9] sm:$0xff]
        %v650 = vld [vmem:[#allocation2 + $0x11] sm:$0xff]
        %v651 = vld [vmem:[#allocation2 + $0x19] sm:$0xff]
        %v652 = vstv %s550
        %v653 = vmul.f32 %v648, %v652
        %v654 = vmul.f32 %v649, %v652
        %v655 = vmul.f32 %v650, %v652
        %v656 = vmul.f32 %v651, %v652
        %v657 = vadd.f32 %v644, %v653
        %v658 = vadd.f32 %v645, %v654
        %v659 = vadd.f32 %v646, %v655
        %v660 = vadd.f32 %v647, %v656
        %v661 = vstv %s551
        %v662 = vmul.f32 %v648, %v661
        %v663 = vmul.f32 %v649, %v661
        %v664 = vmul.f32 %v650, %v661
        %v665 = vmul.f32 %v651, %v661
        %670 = vrot.lane.b32.xlu0 %v662, 127
        %v671 = vpop.permute.xlu0 %670
        %672 = vrot.lane.b32.xlu0 %v663, 127
        %v673 = vpop.permute.xlu0 %672
        %674 = vrot.lane.b32.xlu0 %v664, 127
        %v675 = vpop.permute.xlu0 %674
        %676 = vrot.lane.b32.xlu0 %v665, 127
        %v677 = vpop.permute.xlu0 %676
        %v682 = vadd.f32 %v657, %v671
        %v683 = vadd.f32 %v658, %v673
        %v684 = vadd.f32 %v659, %v675
        %v685 = vadd.f32 %v660, %v677
        %v686 = vstv %s552
        %v687 = vmul.f32 %v648, %v686
        %v688 = vmul.f32 %v649, %v686
        %v689 = vmul.f32 %v650, %v686
        %v690 = vmul.f32 %v651, %v686
        %695 = vrot.lane.b32.xlu0 %v687, 126
        %v696 = vpop.permute.xlu0 %695
        %697 = vrot.lane.b32.xlu0 %v688, 126
        %v698 = vpop.permute.xlu0 %697
        %699 = vrot.lane.b32.xlu0 %v689, 126
        %v700 = vpop.permute.xlu0 %699
        %701 = vrot.lane.b32.xlu0 %v690, 126
        %v702 = vpop.permute.xlu0 %701
        %v707 = vadd.f32 %v682, %v696
        %v708 = vadd.f32 %v683, %v698
        %v709 = vadd.f32 %v684, %v700
        %v710 = vadd.f32 %v685, %v702
        %v711 = vld [vmem:[#allocation2 + $0x2] sm:$0xff]
        %v712 = vld [vmem:[#allocation2 + $0xa] sm:$0xff]
        %v713 = vld [vmem:[#allocation2 + $0x12] sm:$0xff]
        %v714 = vld [vmem:[#allocation2 + $0x1a] sm:$0xff]
        %v715 = vstv %s553
        %v716 = vmul.f32 %v711, %v715
        %v717 = vmul.f32 %v712, %v715
        %v718 = vmul.f32 %v713, %v715
        %v719 = vmul.f32 %v714, %v715
        %v720 = vadd.f32 %v707, %v716
        %v721 = vadd.f32 %v708, %v717
        %v722 = vadd.f32 %v709, %v718
        %v723 = vadd.f32 %v710, %v719
        %v724 = vstv %s554
        %v725 = vmul.f32 %v711, %v724
        %v726 = vmul.f32 %v712, %v724
        %v727 = vmul.f32 %v713, %v724
        %v728 = vmul.f32 %v714, %v724
        %733 = vrot.lane.b32.xlu0 %v725, 127
        %v734 = vpop.permute.xlu0 %733
        %735 = vrot.lane.b32.xlu0 %v726, 127
        %v736 = vpop.permute.xlu0 %735
        %737 = vrot.lane.b32.xlu0 %v727, 127
        %v738 = vpop.permute.xlu0 %737
        %739 = vrot.lane.b32.xlu0 %v728, 127
        %v740 = vpop.permute.xlu0 %739
        %v745 = vadd.f32 %v720, %v734
        %v746 = vadd.f32 %v721, %v736
        %v747 = vadd.f32 %v722, %v738
        %v748 = vadd.f32 %v723, %v740
        %v749 = vstv %s555
        %v750 = vmul.f32 %v711, %v749
        %v751 = vmul.f32 %v712, %v749
        %v752 = vmul.f32 %v713, %v749
        %v753 = vmul.f32 %v714, %v749
        %758 = vrot.lane.b32.xlu0 %v750, 126
        %v759 = vpop.permute.xlu0 %758
        %760 = vrot.lane.b32.xlu0 %v751, 126
        %v761 = vpop.permute.xlu0 %760
        %762 = vrot.lane.b32.xlu0 %v752, 126
        %v763 = vpop.permute.xlu0 %762
        %764 = vrot.lane.b32.xlu0 %v753, 126
        %v765 = vpop.permute.xlu0 %764
        %v770 = vadd.f32 %v745, %v759
        %v771 = vadd.f32 %v746, %v761
        %v772 = vadd.f32 %v747, %v763
        %v773 = vadd.f32 %v748, %v765
        %s774 = scalar_lea.vmem [#allocation2], 40
        %v775 = vld [vmem:[%s774] sm:$0xff]
        %v776 = vld [vmem:[%s774 + $0x8] sm:$0xff]
        %v777 = vld [vmem:[%s774 + $0x10] sm:$0xff]
        %v778 = vld [vmem:[%s774 + $0x18] sm:$0xff]
        %v779 = vstv %s556
        %v780 = vmul.f32 %v775, %v779
        %v781 = vmul.f32 %v776, %v779
        %v782 = vmul.f32 %v777, %v779
        %v783 = vmul.f32 %v778, %v779
        %v784 = vadd.f32 %v770, %v780
        %v785 = vadd.f32 %v771, %v781
        %v786 = vadd.f32 %v772, %v782
        %v787 = vadd.f32 %v773, %v783
        %v788 = vstv %s557
        %v789 = vmul.f32 %v775, %v788
        %v790 = vmul.f32 %v776, %v788
        %v791 = vmul.f32 %v777, %v788
        %v792 = vmul.f32 %v778, %v788
        %797 = vrot.lane.b32.xlu0 %v789, 127
        %v798 = vpop.permute.xlu0 %797
        %799 = vrot.lane.b32.xlu0 %v790, 127
        %v800 = vpop.permute.xlu0 %799
        %801 = vrot.lane.b32.xlu0 %v791, 127
        %v802 = vpop.permute.xlu0 %801
        %803 = vrot.lane.b32.xlu0 %v792, 127
        %v804 = vpop.permute.xlu0 %803
        %v809 = vadd.f32 %v784, %v798
        %v810 = vadd.f32 %v785, %v800
        %v811 = vadd.f32 %v786, %v802
        %v812 = vadd.f32 %v787, %v804
        %v813 = vstv %s558
        %v814 = vmul.f32 %v775, %v813
        %v815 = vmul.f32 %v776, %v813
        %v816 = vmul.f32 %v777, %v813
        %v817 = vmul.f32 %v778, %v813
        %822 = vrot.lane.b32.xlu0 %v814, 126
        %v823 = vpop.permute.xlu0 %822
        %824 = vrot.lane.b32.xlu0 %v815, 126
        %v825 = vpop.permute.xlu0 %824
        %826 = vrot.lane.b32.xlu0 %v816, 126
        %v827 = vpop.permute.xlu0 %826
        %828 = vrot.lane.b32.xlu0 %v817, 126
        %v829 = vpop.permute.xlu0 %828
        %v834 = vadd.f32 %v809, %v823
        %v835 = vadd.f32 %v810, %v825
        %v836 = vadd.f32 %v811, %v827
        %v837 = vadd.f32 %v812, %v829
        %v838 = vld [vmem:[%s774 + $0x1] sm:$0xff]
        %v839 = vld [vmem:[%s774 + $0x9] sm:$0xff]
        %v840 = vld [vmem:[%s774 + $0x11] sm:$0xff]
        %v841 = vld [vmem:[%s774 + $0x19] sm:$0xff]
        %v842 = vstv %s559
        %v843 = vmul.f32 %v838, %v842
        %v844 = vmul.f32 %v839, %v842
        %v845 = vmul.f32 %v840, %v842
        %v846 = vmul.f32 %v841, %v842
        %v847 = vadd.f32 %v834, %v843
        %v848 = vadd.f32 %v835, %v844
        %v849 = vadd.f32 %v836, %v845
        %v850 = vadd.f32 %v837, %v846
        %v851 = vstv %s560
        %v852 = vmul.f32 %v838, %v851
        %v853 = vmul.f32 %v839, %v851
        %v854 = vmul.f32 %v840, %v851
        %v855 = vmul.f32 %v841, %v851
        %860 = vrot.lane.b32.xlu0 %v852, 127
        %v861 = vpop.permute.xlu0 %860
        %862 = vrot.lane.b32.xlu0 %v853, 127
        %v863 = vpop.permute.xlu0 %862
        %864 = vrot.lane.b32.xlu0 %v854, 127
        %v865 = vpop.permute.xlu0 %864
        %866 = vrot.lane.b32.xlu0 %v855, 127
        %v867 = vpop.permute.xlu0 %866
        %v872 = vadd.f32 %v847, %v861
        %v873 = vadd.f32 %v848, %v863
        %v874 = vadd.f32 %v849, %v865
        %v875 = vadd.f32 %v850, %v867
        %v876 = vstv %s561
        %v877 = vmul.f32 %v838, %v876
        %v878 = vmul.f32 %v839, %v876
        %v879 = vmul.f32 %v840, %v876
        %v880 = vmul.f32 %v841, %v876
        %885 = vrot.lane.b32.xlu0 %v877, 126
        %v886 = vpop.permute.xlu0 %885
        %887 = vrot.lane.b32.xlu0 %v878, 126
        %v888 = vpop.permute.xlu0 %887
        %889 = vrot.lane.b32.xlu0 %v879, 126
        %v890 = vpop.permute.xlu0 %889
        %891 = vrot.lane.b32.xlu0 %v880, 126
        %v892 = vpop.permute.xlu0 %891
        %v897 = vadd.f32 %v872, %v886
        %v898 = vadd.f32 %v873, %v888
        %v899 = vadd.f32 %v874, %v890
        %v900 = vadd.f32 %v875, %v892
        %v901 = vld [vmem:[%s774 + $0x2] sm:$0xff]
        %v902 = vld [vmem:[%s774 + $0xa] sm:$0xff]
        %v903 = vld [vmem:[%s774 + $0x12] sm:$0xff]
        %v904 = vld [vmem:[%s774 + $0x1a] sm:$0xff]
        %v905 = vstv %s562
        %v906 = vmul.f32 %v901, %v905
        %v907 = vmul.f32 %v902, %v905
        %v908 = vmul.f32 %v903, %v905
        %v909 = vmul.f32 %v904, %v905
        %v910 = vadd.f32 %v897, %v906
        %v911 = vadd.f32 %v898, %v907
        %v912 = vadd.f32 %v899, %v908
        %v913 = vadd.f32 %v900, %v909
        %v914 = vstv %s563
        %v915 = vmul.f32 %v901, %v914
        %v916 = vmul.f32 %v902, %v914
        %v917 = vmul.f32 %v903, %v914
        %v918 = vmul.f32 %v904, %v914
        %923 = vrot.lane.b32.xlu0 %v915, 127
        %v924 = vpop.permute.xlu0 %923
        %925 = vrot.lane.b32.xlu0 %v916, 127
        %v926 = vpop.permute.xlu0 %925
        %927 = vrot.lane.b32.xlu0 %v917, 127
        %v928 = vpop.permute.xlu0 %927
        %929 = vrot.lane.b32.xlu0 %v918, 127
        %v930 = vpop.permute.xlu0 %929
        %v935 = vadd.f32 %v910, %v924
        %v936 = vadd.f32 %v911, %v926
        %v937 = vadd.f32 %v912, %v928
        %v938 = vadd.f32 %v913, %v930
        %v939 = vstv %s564
        %v940 = vmul.f32 %v901, %v939
        %v941 = vmul.f32 %v902, %v939
        %v942 = vmul.f32 %v903, %v939
        %v943 = vmul.f32 %v904, %v939
        %948 = vrot.lane.b32.xlu0 %v940, 126
        %v949 = vpop.permute.xlu0 %948
        %950 = vrot.lane.b32.xlu0 %v941, 126
        %v951 = vpop.permute.xlu0 %950
        %952 = vrot.lane.b32.xlu0 %v942, 126
        %v953 = vpop.permute.xlu0 %952
        %954 = vrot.lane.b32.xlu0 %v943, 126
        %v955 = vpop.permute.xlu0 %954
        %v960 = vadd.f32 %v935, %v949
        %v961 = vadd.f32 %v936, %v951
        %v962 = vadd.f32 %v937, %v953
        %v963 = vadd.f32 %v938, %v955
        %s964 = scalar_lea.vmem [#allocation2], 80
        %v965 = vld [vmem:[%s964] sm:$0xff]
        %v966 = vld [vmem:[%s964 + $0x8] sm:$0xff]
        %v967 = vld [vmem:[%s964 + $0x10] sm:$0xff]
        %v968 = vld [vmem:[%s964 + $0x18] sm:$0xff]
        %v969 = vstv %s565
        %v970 = vmul.f32 %v965, %v969
        %v971 = vmul.f32 %v966, %v969
        %v972 = vmul.f32 %v967, %v969
        %v973 = vmul.f32 %v968, %v969
        %v974 = vadd.f32 %v960, %v970
        %v975 = vadd.f32 %v961, %v971
        %v976 = vadd.f32 %v962, %v972
        %v977 = vadd.f32 %v963, %v973
        %v978 = vstv %s566
        %v979 = vmul.f32 %v965, %v978
        %v980 = vmul.f32 %v966, %v978
        %v981 = vmul.f32 %v967, %v978
        %v982 = vmul.f32 %v968, %v978
        %987 = vrot.lane.b32.xlu0 %v979, 127
        %v988 = vpop.permute.xlu0 %987
        %989 = vrot.lane.b32.xlu0 %v980, 127
        %v990 = vpop.permute.xlu0 %989
        %991 = vrot.lane.b32.xlu0 %v981, 127
        %v992 = vpop.permute.xlu0 %991
        %993 = vrot.lane.b32.xlu0 %v982, 127
        %v994 = vpop.permute.xlu0 %993
        %v999 = vadd.f32 %v974, %v988
        %v1000 = vadd.f32 %v975, %v990
        %v1001 = vadd.f32 %v976, %v992
        %v1002 = vadd.f32 %v977, %v994
        %v1003 = vstv %s567
        %v1004 = vmul.f32 %v965, %v1003
        %v1005 = vmul.f32 %v966, %v1003
        %v1006 = vmul.f32 %v967, %v1003
        %v1007 = vmul.f32 %v968, %v1003
        %1012 = vrot.lane.b32.xlu0 %v1004, 126
        %v1013 = vpop.permute.xlu0 %1012
        %1014 = vrot.lane.b32.xlu0 %v1005, 126
        %v1015 = vpop.permute.xlu0 %1014
        %1016 = vrot.lane.b32.xlu0 %v1006, 126
        %v1017 = vpop.permute.xlu0 %1016
        %1018 = vrot.lane.b32.xlu0 %v1007, 126
        %v1019 = vpop.permute.xlu0 %1018
        %v1024 = vadd.f32 %v999, %v1013
        %v1025 = vadd.f32 %v1000, %v1015
        %v1026 = vadd.f32 %v1001, %v1017
        %v1027 = vadd.f32 %v1002, %v1019
        %v1028 = vld [vmem:[%s964 + $0x1] sm:$0xff]
        %v1029 = vld [vmem:[%s964 + $0x9] sm:$0xff]
        %v1030 = vld [vmem:[%s964 + $0x11] sm:$0xff]
        %v1031 = vld [vmem:[%s964 + $0x19] sm:$0xff]
        %v1032 = vstv %s568
        %v1033 = vmul.f32 %v1028, %v1032
        %v1034 = vmul.f32 %v1029, %v1032
        %v1035 = vmul.f32 %v1030, %v1032
        %v1036 = vmul.f32 %v1031, %v1032
        %v1037 = vadd.f32 %v1024, %v1033
        %v1038 = vadd.f32 %v1025, %v1034
        %v1039 = vadd.f32 %v1026, %v1035
        %v1040 = vadd.f32 %v1027, %v1036
        %v1041 = vstv %s569
        %v1042 = vmul.f32 %v1028, %v1041
        %v1043 = vmul.f32 %v1029, %v1041
        %v1044 = vmul.f32 %v1030, %v1041
        %v1045 = vmul.f32 %v1031, %v1041
        %1050 = vrot.lane.b32.xlu0 %v1042, 127
        %v1051 = vpop.permute.xlu0 %1050
        %1052 = vrot.lane.b32.xlu0 %v1043, 127
        %v1053 = vpop.permute.xlu0 %1052
        %1054 = vrot.lane.b32.xlu0 %v1044, 127
        %v1055 = vpop.permute.xlu0 %1054
        %1056 = vrot.lane.b32.xlu0 %v1045, 127
        %v1057 = vpop.permute.xlu0 %1056
        %v1062 = vadd.f32 %v1037, %v1051
        %v1063 = vadd.f32 %v1038, %v1053
        %v1064 = vadd.f32 %v1039, %v1055
        %v1065 = vadd.f32 %v1040, %v1057
        %v1066 = vstv %s570
        %v1067 = vmul.f32 %v1028, %v1066
        %v1068 = vmul.f32 %v1029, %v1066
        %v1069 = vmul.f32 %v1030, %v1066
        %v1070 = vmul.f32 %v1031, %v1066
        %1075 = vrot.lane.b32.xlu0 %v1067, 126
        %v1076 = vpop.permute.xlu0 %1075
        %1077 = vrot.lane.b32.xlu0 %v1068, 126
        %v1078 = vpop.permute.xlu0 %1077
        %1079 = vrot.lane.b32.xlu0 %v1069, 126
        %v1080 = vpop.permute.xlu0 %1079
        %1081 = vrot.lane.b32.xlu0 %v1070, 126
        %v1082 = vpop.permute.xlu0 %1081
        %v1087 = vadd.f32 %v1062, %v1076
        %v1088 = vadd.f32 %v1063, %v1078
        %v1089 = vadd.f32 %v1064, %v1080
        %v1090 = vadd.f32 %v1065, %v1082
        %v1091 = vld [vmem:[%s964 + $0x2] sm:$0xff]
        %v1092 = vld [vmem:[%s964 + $0xa] sm:$0xff]
        %v1093 = vld [vmem:[%s964 + $0x12] sm:$0xff]
        %v1094 = vld [vmem:[%s964 + $0x1a] sm:$0xff]
        %v1095 = vstv %s571
        %v1096 = vmul.f32 %v1091, %v1095
        %v1097 = vmul.f32 %v1092, %v1095
        %v1098 = vmul.f32 %v1093, %v1095
        %v1099 = vmul.f32 %v1094, %v1095
        %v1100 = vadd.f32 %v1087, %v1096
        %v1101 = vadd.f32 %v1088, %v1097
        %v1102 = vadd.f32 %v1089, %v1098
        %v1103 = vadd.f32 %v1090, %v1099
        %v1104 = vstv %s572
        %v1105 = vmul.f32 %v1091, %v1104
        %v1106 = vmul.f32 %v1092, %v1104
        %v1107 = vmul.f32 %v1093, %v1104
        %v1108 = vmul.f32 %v1094, %v1104
        %1113 = vrot.lane.b32.xlu0 %v1105, 127
        %v1114 = vpop.permute.xlu0 %1113
        %1115 = vrot.lane.b32.xlu0 %v1106, 127
        %v1116 = vpop.permute.xlu0 %1115
        %1117 = vrot.lane.b32.xlu0 %v1107, 127
        %v1118 = vpop.permute.xlu0 %1117
        %1119 = vrot.lane.b32.xlu0 %v1108, 127
        %v1120 = vpop.permute.xlu0 %1119
        %v1125 = vadd.f32 %v1100, %v1114
        %v1126 = vadd.f32 %v1101, %v1116
        %v1127 = vadd.f32 %v1102, %v1118
        %v1128 = vadd.f32 %v1103, %v1120
        %v1129 = vstv %s573
        %v1130 = vmul.f32 %v1091, %v1129
        %v1131 = vmul.f32 %v1092, %v1129
        %v1132 = vmul.f32 %v1093, %v1129
        %v1133 = vmul.f32 %v1094, %v1129
        %1138 = vrot.lane.b32.xlu0 %v1130, 126
        %v1139 = vpop.permute.xlu0 %1138
        %1140 = vrot.lane.b32.xlu0 %v1131, 126
        %v1141 = vpop.permute.xlu0 %1140
        %1142 = vrot.lane.b32.xlu0 %v1132, 126
        %v1143 = vpop.permute.xlu0 %1142
        %1144 = vrot.lane.b32.xlu0 %v1133, 126
        %v1145 = vpop.permute.xlu0 %1144
        %v1150 = vadd.f32 %v1125, %v1139
        %v1151 = vadd.f32 %v1126, %v1141
        %v1152 = vadd.f32 %v1127, %v1143
        %v1153 = vadd.f32 %v1128, %v1145
        %s1154 = scalar_lea.vmem [#allocation2], 120
        %v1155 = vld [vmem:[%s1154] sm:$0xff]
        %v1156 = vld [vmem:[%s1154 + $0x8] sm:$0xff]
        %v1157 = vld [vmem:[%s1154 + $0x10] sm:$0xff]
        %v1158 = vld [vmem:[%s1154 + $0x18] sm:$0xff]
        %v1159 = vstv %s574
        %v1160 = vmul.f32 %v1155, %v1159
        %v1161 = vmul.f32 %v1156, %v1159
        %v1162 = vmul.f32 %v1157, %v1159
        %v1163 = vmul.f32 %v1158, %v1159
        %v1164 = vadd.f32 %v1150, %v1160
        %v1165 = vadd.f32 %v1151, %v1161
        %v1166 = vadd.f32 %v1152, %v1162
        %v1167 = vadd.f32 %v1153, %v1163
        %v1168 = vstv %s575
        %v1169 = vmul.f32 %v1155, %v1168
        %v1170 = vmul.f32 %v1156, %v1168
        %v1171 = vmul.f32 %v1157, %v1168
        %v1172 = vmul.f32 %v1158, %v1168
        %1177 = vrot.lane.b32.xlu0 %v1169, 127
        %v1178 = vpop.permute.xlu0 %1177
        %1179 = vrot.lane.b32.xlu0 %v1170, 127
        %v1180 = vpop.permute.xlu0 %1179
        %1181 = vrot.lane.b32.xlu0 %v1171, 127
        %v1182 = vpop.permute.xlu0 %1181
        %1183 = vrot.lane.b32.xlu0 %v1172, 127
        %v1184 = vpop.permute.xlu0 %1183
        %v1189 = vadd.f32 %v1164, %v1178
        %v1190 = vadd.f32 %v1165, %v1180
        %v1191 = vadd.f32 %v1166, %v1182
        %v1192 = vadd.f32 %v1167, %v1184
        %v1193 = vstv %s576
        %v1194 = vmul.f32 %v1155, %v1193
        %v1195 = vmul.f32 %v1156, %v1193
        %v1196 = vmul.f32 %v1157, %v1193
        %v1197 = vmul.f32 %v1158, %v1193
        %1202 = vrot.lane.b32.xlu0 %v1194, 126
        %v1203 = vpop.permute.xlu0 %1202
        %1204 = vrot.lane.b32.xlu0 %v1195, 126
        %v1205 = vpop.permute.xlu0 %1204
        %1206 = vrot.lane.b32.xlu0 %v1196, 126
        %v1207 = vpop.permute.xlu0 %1206
        %1208 = vrot.lane.b32.xlu0 %v1197, 126
        %v1209 = vpop.permute.xlu0 %1208
        %v1214 = vadd.f32 %v1189, %v1203
        %v1215 = vadd.f32 %v1190, %v1205
        %v1216 = vadd.f32 %v1191, %v1207
        %v1217 = vadd.f32 %v1192, %v1209
        %v1218 = vld [vmem:[%s1154 + $0x1] sm:$0xff]
        %v1219 = vld [vmem:[%s1154 + $0x9] sm:$0xff]
        %v1220 = vld [vmem:[%s1154 + $0x11] sm:$0xff]
        %v1221 = vld [vmem:[%s1154 + $0x19] sm:$0xff]
        %v1222 = vstv %s577
        %v1223 = vmul.f32 %v1218, %v1222
        %v1224 = vmul.f32 %v1219, %v1222
        %v1225 = vmul.f32 %v1220, %v1222
        %v1226 = vmul.f32 %v1221, %v1222
        %v1227 = vadd.f32 %v1214, %v1223
        %v1228 = vadd.f32 %v1215, %v1224
        %v1229 = vadd.f32 %v1216, %v1225
        %v1230 = vadd.f32 %v1217, %v1226
        %v1231 = vstv %s578
        %v1232 = vmul.f32 %v1218, %v1231
        %v1233 = vmul.f32 %v1219, %v1231
        %v1234 = vmul.f32 %v1220, %v1231
        %v1235 = vmul.f32 %v1221, %v1231
        %1240 = vrot.lane.b32.xlu0 %v1232, 127
        %v1241 = vpop.permute.xlu0 %1240
        %1242 = vrot.lane.b32.xlu0 %v1233, 127
        %v1243 = vpop.permute.xlu0 %1242
        %1244 = vrot.lane.b32.xlu0 %v1234, 127
        %v1245 = vpop.permute.xlu0 %1244
        %1246 = vrot.lane.b32.xlu0 %v1235, 127
        %v1247 = vpop.permute.xlu0 %1246
        %v1252 = vadd.f32 %v1227, %v1241
        %v1253 = vadd.f32 %v1228, %v1243
        %v1254 = vadd.f32 %v1229, %v1245
        %v1255 = vadd.f32 %v1230, %v1247
        %v1256 = vstv %s579
        %v1257 = vmul.f32 %v1218, %v1256
        %v1258 = vmul.f32 %v1219, %v1256
        %v1259 = vmul.f32 %v1220, %v1256
        %v1260 = vmul.f32 %v1221, %v1256
        %1265 = vrot.lane.b32.xlu0 %v1257, 126
        %v1266 = vpop.permute.xlu0 %1265
        %1267 = vrot.lane.b32.xlu0 %v1258, 126
        %v1268 = vpop.permute.xlu0 %1267
        %1269 = vrot.lane.b32.xlu0 %v1259, 126
        %v1270 = vpop.permute.xlu0 %1269
        %1271 = vrot.lane.b32.xlu0 %v1260, 126
        %v1272 = vpop.permute.xlu0 %1271
        %v1277 = vadd.f32 %v1252, %v1266
        %v1278 = vadd.f32 %v1253, %v1268
        %v1279 = vadd.f32 %v1254, %v1270
        %v1280 = vadd.f32 %v1255, %v1272
        %v1281 = vld [vmem:[%s1154 + $0x2] sm:$0xff]
        %v1282 = vld [vmem:[%s1154 + $0xa] sm:$0xff]
        %v1283 = vld [vmem:[%s1154 + $0x12] sm:$0xff]
        %v1284 = vld [vmem:[%s1154 + $0x1a] sm:$0xff]
        %v1285 = vstv %s580
        %v1286 = vmul.f32 %v1281, %v1285
        %v1287 = vmul.f32 %v1282, %v1285
        %v1288 = vmul.f32 %v1283, %v1285
        %v1289 = vmul.f32 %v1284, %v1285
        %v1290 = vadd.f32 %v1277, %v1286
        %v1291 = vadd.f32 %v1278, %v1287
        %v1292 = vadd.f32 %v1279, %v1288
        %v1293 = vadd.f32 %v1280, %v1289
        %v1294 = vstv %s581
        %v1295 = vmul.f32 %v1281, %v1294
        %v1296 = vmul.f32 %v1282, %v1294
        %v1297 = vmul.f32 %v1283, %v1294
        %v1298 = vmul.f32 %v1284, %v1294
        %1303 = vrot.lane.b32.xlu0 %v1295, 127
        %v1304 = vpop.permute.xlu0 %1303
        %1305 = vrot.lane.b32.xlu0 %v1296, 127
        %v1306 = vpop.permute.xlu0 %1305
        %1307 = vrot.lane.b32.xlu0 %v1297, 127
        %v1308 = vpop.permute.xlu0 %1307
        %1309 = vrot.lane.b32.xlu0 %v1298, 127
        %v1310 = vpop.permute.xlu0 %1309
        %v1315 = vadd.f32 %v1290, %v1304
        %v1316 = vadd.f32 %v1291, %v1306
        %v1317 = vadd.f32 %v1292, %v1308
        %v1318 = vadd.f32 %v1293, %v1310
        %v1319 = vstv %s582
        %v1320 = vmul.f32 %v1281, %v1319
        %v1321 = vmul.f32 %v1282, %v1319
        %v1322 = vmul.f32 %v1283, %v1319
        %v1323 = vmul.f32 %v1284, %v1319
        %1328 = vrot.lane.b32.xlu0 %v1320, 126
        %v1329 = vpop.permute.xlu0 %1328
        %1330 = vrot.lane.b32.xlu0 %v1321, 126
        %v1331 = vpop.permute.xlu0 %1330
        %1332 = vrot.lane.b32.xlu0 %v1322, 126
        %v1333 = vpop.permute.xlu0 %1332
        %1334 = vrot.lane.b32.xlu0 %v1323, 126
        %v1335 = vpop.permute.xlu0 %1334
        %v1340 = vadd.f32 %v1315, %v1329
        %v1341 = vadd.f32 %v1316, %v1331
        %v1342 = vadd.f32 %v1317, %v1333
        %v1343 = vadd.f32 %v1318, %v1335
        %vm1344 = vcmask 261120
        %1345 = vst.msk [vmem:[%s504] sm:$0xff] %vm1344, %v1340
        %1346 = vst.msk [vmem:[%s504 + $0x8] sm:$0xff] %vm1344, %v1341
        %1347 = vst.msk [vmem:[%s504 + $0x10] sm:$0xff] %vm1344, %v1342
        %1348 = vst.msk [vmem:[%s504 + $0x18] sm:$0xff] %vm1344, %v1343
        %s1349 = smul.u32 4, %s22
        %p1350 = scmp.lt.s32.totalorder %s21, 1
        %s1351 = scalar_select %p1350, %s21, 1
        %p1352 = scmp.lt.s32.totalorder %s1349, 3
        %s1353 = scalar_select %p1352, %s1349, 3
        %s1354 = smul.addr %s1351, 4
        %s1355 = sadd.s32 %s1353, %s1354
        %s1356 = smul.addr %s1355, 8
        %s1357 = scalar_lea.vmem %s4, %s1356
        // Predicated region
        $region131: #{pdem_forward.3} parent=117 // pred_check
          %p1358 = pneg %p151
        $region132: #{pdem_forward.3} parent=117 // pred_check_branch
          %1360 = sbr.rel (%p1358) target = $region134
        $region133: #{pdem_forward.3} parent=117 // pred_region
          %s1361 = smul.u32 4, %s22
        $region134: #{pdem_forward.3} parent=117 // pred_fallthru
          _
      $region118: #{pdem_forward.3} parent=5 // pred_fallthru
        _
      %p1362 = scmp.le.s32.totalorder 2, %s12
      // Predicated region
      $region135: #{pdem_forward.3} parent=5 // pred_check
        %p1363 = pneg %p1362
      $region136: #{pdem_forward.3} parent=5 // pred_check_branch
        %1365 = sbr.rel (%p1363) target = $region138
      $region137: #{pdem_forward.3} parent=5 // pred_region
        %s1366 = ssub.s32 %s12, 2
        // Predicated region
        $region139: #{pdem_forward.3} parent=137 // pred_check
          %p1367 = pneg %p157
        $region140: #{pdem_forward.3} parent=137 // pred_check_branch
          %1369 = sbr.rel (%p1367) target = $region142
        $region141: #{pdem_forward.3} parent=137 // pred_region
          %s1370 = smul.u32 4, %s24
          %p1371 = scmp.lt.s32.totalorder %s23, 1
          %s1372 = scalar_select %p1371, %s23, 1
          %p1373 = scmp.lt.s32.totalorder %s1370, 3
          %s1374 = scalar_select %p1373, %s1370, 3
          %s1375 = smul.addr %s1372, 4
          %s1376 = sadd.s32 %s1374, %s1375
          %s1377 = smul.addr %s1376, 8
          %s1378 = scalar_lea.vmem %s4, %s1377
        $region142: #{pdem_forward.3} parent=137 // pred_fallthru
          _
      $region138: #{pdem_forward.3} parent=5 // pred_fallthru
        _
    $region6: #{pdem_forward.3} parent=1 // loop_footer
      %s16 = sadd.s32 1, %s12
    $region7: #{pdem_forward.3} parent=1 // loop_footer_branch
      %11 = sbr.rel target = $region3
    $region8: #{pdem_forward.3} parent=1 // loop_exit
      _
    %1379 = vsyncpa [#allocation5], 1
    %s1380 = scalar_lea.sflag [#allocation5], 1
    %1381 = vsyncpa %s1380, 1

// kernel: pdem_forward.5
$region0: #{pdem_forward.5}
  #allocation0 [shape = 'u32[]', space=smem, size = 0x4, offset = 0x4, fixed_abs, tag = 'smem constant byte address 0x4 - core index']
  #allocation1 [shape = 'u32[72,128]{1,0:T(1,128)}', space=vmem, size = 0x9000, scoped, tag = 'internal scratch']
  #allocation2 [shape = 'f32[40,34]{1,0:T(8,128)}', space=vmem, size = 0x5000, scoped, tag = 'scratch operand']
  %s0 = inlined_call_operand.vmem [shape: f32[36], index: 0, kind: input, shape index: {}]
  %s1 = inlined_call_operand.vmem [shape: f32[4], index: 1, kind: input, shape index: {}]
  %s2 = inlined_call_operand.vmem [shape: f32[2,1,40,34], index: 2, kind: input, shape index: {}, may-alias: {2,3}]
  %s3 = inlined_call_operand.vmem [shape: f32[2,1,40,34], index: 3, kind: input, shape index: {}, may-alias: {2,3}]
  %s4 = inlined_call_operand.hbm [shape: f32[2,4,32,32], index: 4, kind: output, shape index: {}]
  %s5 = sld [smem:[#allocation0]]
  $region57: #{pdem_forward.5} parent=0
    _
  %s7 = ssub.s32 1, %s5
  %s8 = scalar_select 0, %s7, %s5
  $region1: #{pdem_forward.5} parent=0
    #allocation3 [shape = 'u8[512]{0}', space=smem, size = 0x200, scoped, tag = 'input window, operand 0, single buffered']
    #allocation4 [shape = 's32[2]{0}', space=sflag, size = 0x8, scoped, tag = 'scoped memory for pdem_forward.5']
    #allocation5 [shape = 's32[2]{0}', space=sflag, size = 0x8, scoped, tag = 'scoped memory for pdem_forward.5']
    #allocation6 [shape = 'u8[512]{0}', space=smem, size = 0x200, scoped, tag = 'input window, operand 1, single buffered']
    #allocation7 [shape = 's32[1]{0}', space=sflag, size = 0x4, scoped, tag = 'scoped memory for pdem_forward.5']
    #allocation8 [shape = 'u8[131072]{0}', space=vmem, size = 0x20000, scoped, tag = 'output window, operand 0']
    %9 = vsyncpa [#allocation5], 0
    %10 = vsyncpa [#allocation7], 0
    %11 = vsyncpa [#allocation4], 0
    %s12 = scalar_lea.sflag [#allocation4], 1
    %13 = vsyncpa %s12, 0
    loop: start=0, step=1, limit=4
    $region2: #{pdem_forward.5} parent=1 // loop_pre_header
      _
    $region3: #{pdem_forward.5} parent=1 // loop_header
      %s15 = sphi 0, %s19
      %p16 = scmp.ge.s32.totalorder %s15, 4
      %s22 = sphi 0, %s34
      %s23 = sphi 0, %s30
      %s24 = sphi 0, %s22
      %s25 = sphi 0, %s23
      %s26 = sphi 0, %s24
      %s27 = sphi 0, %s25
      %s35 = sphi 0, %s35
      %s37 = sphi 0, %s35
      %s38 = sphi 0, %s37
      %s52 = sphi 0, %s38
      %s56 = sphi 0, %s56
      %s58 = sphi 0, %s56
      %s59 = sphi 0, %s58
      %s73 = sphi 0, %s59
      %s81 = sphi 0, %s83
      %s84 = sphi 0, %s81
      %s85 = sphi 0, %s84
      %s101 = sphi 0, %s85
      %s113 = sphi 0, %s115
      %s116 = sphi 0, %s113
      %s117 = sphi 0, %s116
      %s133 = sphi 0, %s117
      %s141 = sphi 0, %s143
      %s144 = sphi 0, %s141
      %s145 = sphi 0, %s144
      %s161 = sphi 0, %s145
    $region4: #{pdem_forward.5} parent=1 // loop_header_branch
      %18 = sbr.rel (%p16) target = $region8
    $region5: #{pdem_forward.5} parent=1 // loop_body
      %s20 = ssub.s32 %s15, 1
      %s21 = ssub.s32 %s15, 2
      %s28 = sadd.s32 1, %s23
      %p29 = scmp.ge.s32.totalorder %s28, 1
      %s30 = scalar_select %p29, 0, %s28
      %s31 = sadd.s32 1, %s22
      %s32 = scalar_select %p29, %s31, %s22
      %p33 = scmp.ge.s32.totalorder %s32, 2
      %s34 = scalar_select %p33, 0, %s32
      %s36 = sadd.s32 %s35, 1
      %p39 = scmp.eq.s32.totalorder %s15, 1
      %p40 = scmp.ne.s32.totalorder %s35, %s37
      %p41 = scmp.eq.s32.totalorder %s15, 0
      %p42 = por %p40, %p41
      %p43 = scmp.ne.s32.totalorder %s35, %s37
      %p44 = scmp.eq.s32.totalorder %s20, 1
      %p45 = por %p43, %p44
      %p46 = scmp.ne.s32.totalorder %s37, %s38
      %p47 = scmp.eq.s32.totalorder %s20, 0
      %p48 = por %p46, %p47
      %p49 = scmp.ne.s32.totalorder %s37, %s38
      %p50 = scmp.eq.s32.totalorder %s21, 1
      %p51 = por %p49, %p50
      %p53 = scmp.ne.s32.totalorder %s38, %s52
      %p54 = scmp.eq.s32.totalorder %s21, 0
      %p55 = por %p53, %p54
      %s57 = sadd.s32 %s56, 1
      %p60 = scmp.eq.s32.totalorder %s15, 1
      %p61 = scmp.ne.s32.totalorder %s56, %s58
      %p62 = scmp.eq.s32.totalorder %s15, 0
      %p63 = por %p61, %p62
      %p64 = scmp.ne.s32.totalorder %s56, %s58
      %p65 = scmp.eq.s32.totalorder %s20, 1
      %p66 = por %p64, %p65
      %p67 = scmp.ne.s32.totalorder %s58, %s59
      %p68 = scmp.eq.s32.totalorder %s20, 0
      %p69 = por %p67, %p68
      %p70 = scmp.ne.s32.totalorder %s58, %s59
      %p71 = scmp.eq.s32.totalorder %s21, 1
      %p72 = por %p70, %p71
      %p74 = scmp.ne.s32.totalorder %s59, %s73
      %p75 = scmp.eq.s32.totalorder %s21, 0
      %p76 = por %p74, %p75
      %s77 = ssub.s32 %s22, %s34
      %s78 = ssub.s32 %s23, %s30
      %s79 = sor.u32 %s77, %s78
      %p80 = scmp.eq.s32.totalorder %s79, 0
      %s82 = sadd.s32 %s81, 1
      %s83 = scalar_select %p80, %s81, %s82
      %p86 = pneg %p80
      %p87 = scmp.eq.s32.totalorder %s15, 1
      %p88 = por %p86, %p87
      %p89 = scmp.ne.s32.totalorder %s81, %s84
      %p90 = scmp.eq.s32.totalorder %s15, 0
      %p91 = por %p89, %p90
      %p92 = scmp.ne.s32.totalorder %s81, %s84
      %p93 = scmp.eq.s32.totalorder %s20, 1
      %p94 = por %p92, %p93
      %p95 = scmp.ne.s32.totalorder %s84, %s85
      %p96 = scmp.eq.s32.totalorder %s20, 0
      %p97 = por %p95, %p96
      %p98 = scmp.ne.s32.totalorder %s84, %s85
      %p99 = scmp.eq.s32.totalorder %s21, 1
      %p100 = por %p98, %p99
      %p102 = scmp.ne.s32.totalorder %s85, %s101
      %p103 = scmp.eq.s32.totalorder %s21, 0
      %p104 = por %p102, %p103
      %s105 = sadd.s32 %s23, 1
      %s106 = smul.u32 %s105, 4
      %s107 = sadd.s32 %s30, 1
      %s108 = smul.u32 %s107, 4
      %s109 = ssub.s32 %s22, %s34
      %s110 = ssub.s32 %s106, %s108
      %s111 = sor.u32 %s109, %s110
      %p112 = scmp.eq.s32.totalorder %s111, 0
      %s114 = sadd.s32 %s113, 1
      %s115 = scalar_select %p112, %s113, %s114
      %p118 = pneg %p112
      %p119 = scmp.eq.s32.totalorder %s15, 1
      %p120 = por %p118, %p119
      %p121 = scmp.ne.s32.totalorder %s113, %s116
      %p122 = scmp.eq.s32.totalorder %s15, 0
      %p123 = por %p121, %p122
      %p124 = scmp.ne.s32.totalorder %s113, %s116
      %p125 = scmp.eq.s32.totalorder %s20, 1
      %p126 = por %p124, %p125
      %p127 = scmp.ne.s32.totalorder %s116, %s117
      %p128 = scmp.eq.s32.totalorder %s20, 0
      %p129 = por %p127, %p128
      %p130 = scmp.ne.s32.totalorder %s116, %s117
      %p131 = scmp.eq.s32.totalorder %s21, 1
      %p132 = por %p130, %p131
      %p134 = scmp.ne.s32.totalorder %s117, %s133
      %p135 = scmp.eq.s32.totalorder %s21, 0
      %p136 = por %p134, %p135
      %s137 = ssub.s32 %s22, %s34
      %s138 = ssub.s32 %s23, %s30
      %s139 = sor.u32 %s137, %s138
      %p140 = scmp.eq.s32.totalorder %s139, 0
      %s142 = sadd.s32 %s141, 1
      %s143 = scalar_select %p140, %s141, %s142
      %p146 = pneg %p140
      %p147 = scmp.eq.s32.totalorder %s15, 1
      %p148 = por %p146, %p147
      %p149 = scmp.ne.s32.totalorder %s141, %s144
      %p150 = scmp.eq.s32.totalorder %s15, 0
      %p151 = por %p149, %p150
      %p152 = scmp.ne.s32.totalorder %s141, %s144
      %p153 = scmp.eq.s32.totalorder %s20, 1
      %p154 = por %p152, %p153
      %p155 = scmp.ne.s32.totalorder %s144, %s145
      %p156 = scmp.eq.s32.totalorder %s20, 0
      %p157 = por %p155, %p156
      %p158 = scmp.ne.s32.totalorder %s144, %s145
      %p159 = scmp.eq.s32.totalorder %s21, 1
      %p160 = por %p158, %p159
      %p162 = scmp.ne.s32.totalorder %s145, %s161
      %p163 = scmp.eq.s32.totalorder %s21, 0
      %p164 = por %p162, %p163
      %p165 = scmp.le.s32.totalorder 1, %s15
      %p166 = scmp.lt.s32.totalorder %s15, 3
      %p167 = pnand %p165, %p166
      %p168 = pneg %p167
      // Predicated region
      $region9: #{pdem_forward.5} parent=5 // pred_check
        _
      $region10: #{pdem_forward.5} parent=5 // pred_check_branch
        %170 = sbr.rel (%p167) target = $region12
      $region11: #{pdem_forward.5} parent=5 // pred_region
        %s171 = ssub.s32 %s15, 1
        // Predicated region
        $region13: #{pdem_forward.5} parent=11 // pred_check
          %p172 = pneg %p48
        $region14: #{pdem_forward.5} parent=11 // pred_check_branch
          %174 = sbr.rel (%p172) target = $region16
        $region15: #{pdem_forward.5} parent=11 // pred_region
          %176 = vsyncadd [#allocation5], 0
          %s178 = sshll.u32 %s0, 4
          %s179 = int_to_ptr.vmem [resolvable:$true] %s178
          %181 = dma.vmem_to_smem %s179, 16, [#allocation3], [#allocation5]
        $region16: #{pdem_forward.5} parent=11 // pred_fallthru
          _
        // Predicated region
        $region17: #{pdem_forward.5} parent=11 // pred_check
          %p182 = pneg %p69
        $region18: #{pdem_forward.5} parent=11 // pred_check_branch
          %184 = sbr.rel (%p182) target = $region20
        $region19: #{pdem_forward.5} parent=11 // pred_region
          %186 = vsyncadd [#allocation7], 0
          %s188 = sshll.u32 %s1, 4
          %s189 = int_to_ptr.vmem [resolvable:$true] %s188
          %191 = dma.vmem_to_smem %s189, 16, [#allocation6], [#allocation7]
        $region20: #{pdem_forward.5} parent=11 // pred_fallthru
          _
      $region12: #{pdem_forward.5} parent=5 // pred_fallthru
        _
      %p192 = scmp.lt.s32.totalorder %s15, 2
      // Predicated region
      $region21: #{pdem_forward.5} parent=5 // pred_check
        %p193 = pneg %p192
      $region22: #{pdem_forward.5} parent=5 // pred_check_branch
        %195 = sbr.rel (%p193) target = $region24
      $region23: #{pdem_forward.5} parent=5 // pred_region
        // Predicated region
        $region25: #{pdem_forward.5} parent=23 // pred_check
          %p196 = pneg %p91
        $region26: #{pdem_forward.5} parent=23 // pred_check_branch
          %198 = sbr.rel (%p196) target = $region28
        $region27: #{pdem_forward.5} parent=23 // pred_region
          %s199 = smul.u32 4, %s23
          %s200 = ssub.s32 5, %s199
          %p201 = scmp.lt.s32.totalorder %s200, 4
          %s202 = scalar_select %p201, %s200, 4
          %s203 = smul.u32 8, %s202
          %p204 = scmp.lt.s32.totalorder %s22, 1
          %s205 = scalar_select %p204, %s22, 1
          %p206 = scmp.lt.s32.totalorder %s199, 4
          %s207 = scalar_select %p206, %s199, 4
          %s208 = smul.addr %s205, 5
          %s209 = sadd.s32 %s207, %s208
          %s210 = smul.addr %s209, 8
          %s211 = scalar_lea.vmem %s2, %s210
          %s212 = smul.u32 4, %s23
          %s213 = ssub.s32 5, %s212
          %p214 = scmp.lt.s32.totalorder %s213, 4
          %s215 = scalar_select %p214, %s213, 4
          %s216 = smul.u32 8, %s215
        $region28: #{pdem_forward.5} parent=23 // pred_fallthru
          _
        // Predicated region
        $region29: #{pdem_forward.5} parent=23 // pred_check
          %p217 = pneg %p123
        $region30: #{pdem_forward.5} parent=23 // pred_check_branch
          %219 = sbr.rel (%p217) target = $region32
        $region31: #{pdem_forward.5} parent=23 // pred_region
          %s220 = sadd.s32 %s23, 1
          %s221 = smul.u32 %s220, 4
          %p222 = scmp.lt.s32.totalorder %s22, 1
          %s223 = scalar_select %p222, %s22, 1
          %p224 = scmp.lt.s32.totalorder %s221, 4
          %s225 = scalar_select %p224, %s221, 4
          %s226 = smul.addr %s223, 5
          %s227 = sadd.s32 %s225, %s226
          %s228 = smul.addr %s227, 8
          %s229 = scalar_lea.vmem %s3, %s228
          %s230 = sadd.s32 %s23, 1
          %s231 = smul.u32 %s230, 4
        $region32: #{pdem_forward.5} parent=23 // pred_fallthru
          _
      $region24: #{pdem_forward.5} parent=5 // pred_fallthru
        _
      %p232 = scmp.le.s32.totalorder 1, %s15
      %p233 = scmp.lt.s32.totalorder %s15, 3
      %p234 = pnand %p232, %p233
      %p235 = pneg %p234
      // Predicated region
      $region33: #{pdem_forward.5} parent=5 // pred_check
        _
      $region34: #{pdem_forward.5} parent=5 // pred_check_branch
        %237 = sbr.rel (%p234) target = $region36
      $region35: #{pdem_forward.5} parent=5 // pred_region
        %s238 = ssub.s32 %s15, 1
        // Predicated region
        $region37: #{pdem_forward.5} parent=35 // pred_check
          %p239 = pneg %p48
        $region38: #{pdem_forward.5} parent=35 // pred_check_branch
          %241 = sbr.rel (%p239) target = $region40
        $region39: #{pdem_forward.5} parent=35 // pred_region
          %243 = dma.done [#allocation5], 16
        $region40: #{pdem_forward.5} parent=35 // pred_fallthru
          _
        // Predicated region
        $region41: #{pdem_forward.5} parent=35 // pred_check
          %p244 = pneg %p69
        $region42: #{pdem_forward.5} parent=35 // pred_check_branch
          %246 = sbr.rel (%p244) target = $region44
        $region43: #{pdem_forward.5} parent=35 // pred_region
          %248 = dma.done [#allocation7], 16
        $region44: #{pdem_forward.5} parent=35 // pred_fallthru
          _
        %249 = sfence
        %p250 = pneg %p48
        %p251 = pneg %p45
        %p252 = pneg %p69
        %p253 = pneg %p66
        %s254 = smul.u32 4, %s25
        %s255 = ssub.s32 5, %s254
        %p256 = scmp.lt.s32.totalorder %s255, 4
        %s257 = scalar_select %p256, %s255, 4
        %s258 = smul.u32 8, %s257
        %p259 = scmp.lt.s32.totalorder %s24, 1
        %s260 = scalar_select %p259, %s24, 1
        %p261 = scmp.lt.s32.totalorder %s254, 4
        %s262 = scalar_select %p261, %s254, 4
        %s263 = smul.addr %s260, 5
        %s264 = sadd.s32 %s262, %s263
        %s265 = smul.addr %s264, 8
        %s266 = scalar_lea.vmem %s2, %s265
        %p267 = pneg %p97
        %p268 = pneg %p94
        %s269 = sadd.s32 %s25, 1
        %s270 = smul.u32 %s269, 4
        %p271 = scmp.lt.s32.totalorder %s24, 1
        %s272 = scalar_select %p271, %s24, 1
        %p273 = scmp.lt.s32.totalorder %s270, 4
        %s274 = scalar_select %p273, %s270, 4
        %s275 = smul.addr %s272, 5
        %s276 = sadd.s32 %s274, %s275
        %s277 = smul.addr %s276, 8
        %s278 = scalar_lea.vmem %s3, %s277
        %p279 = pneg %p129
        %p280 = pneg %p126
        %p281 = pneg %p157
        %p282 = pneg %p154
        %s283 = sand.u32 %s144, 1
        %s284 = scalar_lea.sflag [#allocation4], %s283
        %s285 = sand.u32 %s144, 1
        %s286 = smul.addr %s285, 128
        %s287 = scalar_lea.vmem [#allocation8], %s286
        %s288 = smul.u32 4, %s25
        %s289 = ssub.s32 5, %s288
        %p290 = scmp.lt.s32.totalorder %s289, 4
        %s291 = scalar_select %p290, %s289, 4
        %s292 = smul.u32 8, %s291
        %p293 = scmp.lt.s32.totalorder %s24, 1
        %s294 = scalar_select %p293, %s24, 1
        %p295 = scmp.lt.s32.totalorder %s288, 4
        %s296 = scalar_select %p295, %s288, 4
        %s297 = smul.addr %s294, 5
        %s298 = sadd.s32 %s296, %s297
        %s299 = smul.addr %s298, 8
        %s300 = scalar_lea.vmem %s2, %s299
        %s301 = smul.u32 4, %s25
        %s302 = ssub.s32 5, %s301
        %p303 = scmp.lt.s32.totalorder %s302, 4
        %s304 = scalar_select %p303, %s302, 4
        %s305 = smul.u32 8, %s304
        %s306 = sadd.s32 %s25, 1
        %s307 = smul.u32 %s306, 4
        %p308 = scmp.lt.s32.totalorder %s24, 1
        %s309 = scalar_select %p308, %s24, 1
        %p310 = scmp.lt.s32.totalorder %s307, 4
        %s311 = scalar_select %p310, %s307, 4
        %s312 = smul.addr %s309, 5
        %s313 = sadd.s32 %s311, %s312
        %s314 = smul.addr %s313, 8
        %s315 = scalar_lea.vmem %s3, %s314
        %s316 = sadd.s32 %s25, 1
        %s317 = smul.u32 %s316, 4
        %s318 = smul.u32 4, %s25
        %v319 = vld [vmem:[%s300] sm:$0xff]
        %v320 = vld [vmem:[%s300 + $0x8] sm:$0xff]
        %v321 = vld [vmem:[%s300 + $0x10] sm:$0xff]
        %v322 = vld [vmem:[%s300 + $0x18] sm:$0xff]
        %vm323 = vcmask 277504
        %324 = vst.msk [vmem:[#allocation2] sm:$0xff] %vm323, %v319
        %325 = vst.msk [vmem:[#allocation2 + $0x8] sm:$0xff] %vm323, %v320
        %326 = vst.msk [vmem:[#allocation2 + $0x10] sm:$0xff] %vm323, %v321
        %327 = vst.msk [vmem:[#allocation2 + $0x18] sm:$0xff] %vm323, %v322
        %v328 = vld [vmem:[%s315] sm:$0xff]
        %329 = vst.msk [vmem:[#allocation2 + $0x20] sm:$0xff] %vm323, %v328
        %v330 = vld [vmem:[#allocation2] sm:$0xff]
        %v331 = vld [vmem:[#allocation2 + $0x8] sm:$0xff]
        %v332 = vld [vmem:[#allocation2 + $0x10] sm:$0xff]
        %v333 = vld [vmem:[#allocation2 + $0x18] sm:$0xff]
        %v334 = vld [vmem:[#allocation2 + $0x1] sm:$0xff]
        %v335 = vld [vmem:[#allocation2 + $0x9] sm:$0xff]
        %v336 = vld [vmem:[#allocation2 + $0x11] sm:$0xff]
        %v337 = vld [vmem:[#allocation2 + $0x19] sm:$0xff]
        %v338 = vld [vmem:[#allocation2 + $0x2] sm:$0xff]
        %v339 = vld [vmem:[#allocation2 + $0xa] sm:$0xff]
        %v340 = vld [vmem:[#allocation2 + $0x12] sm:$0xff]
        %v341 = vld [vmem:[#allocation2 + $0x1a] sm:$0xff]
        %s342 = sld [smem:[#allocation3]]
        %s343 = sld [smem:[#allocation3 + $0x1]]
        %s344 = sld [smem:[#allocation3 + $0x2]]
        %s345 = sld [smem:[#allocation3 + $0x3]]
        %s346 = sld [smem:[#allocation3 + $0x4]]
        %s347 = sld [smem:[#allocation3 + $0x5]]
        %s348 = sld [smem:[#allocation3 + $0x6]]
        %s349 = sld [smem:[#allocation3 + $0x7]]
        %s350 = sld [smem:[#allocation3 + $0x8]]
        %s351 = sld [smem:[#allocation3 + $0x9]]
        %s352 = sld [smem:[#allocation3 + $0xa]]
        %s353 = sld [smem:[#allocation3 + $0xb]]
        %s354 = sld [smem:[#allocation3 + $0xc]]
        %s355 = sld [smem:[#allocation3 + $0xd]]
        %s356 = sld [smem:[#allocation3 + $0xe]]
        %s357 = sld [smem:[#allocation3 + $0xf]]
        %s358 = sld [smem:[#allocation3 + $0x10]]
        %s359 = sld [smem:[#allocation3 + $0x11]]
        %s360 = sld [smem:[#allocation3 + $0x12]]
        %s361 = sld [smem:[#allocation3 + $0x13]]
        %s362 = sld [smem:[#allocation3 + $0x14]]
        %s363 = sld [smem:[#allocation3 + $0x15]]
        %s364 = sld [smem:[#allocation3 + $0x16]]
        %s365 = sld [smem:[#allocation3 + $0x17]]
        %s366 = sld [smem:[#allocation3 + $0x18]]
        %s367 = sld [smem:[#allocation3 + $0x19]]
        %s368 = sld [smem:[#allocation3 + $0x1a]]
        %s369 = sld [smem:[#allocation3 + $0x1b]]
        %s370 = sld [smem:[#allocation3 + $0x1c]]
        %s371 = sld [smem:[#allocation3 + $0x1d]]
        %s372 = sld [smem:[#allocation3 + $0x1e]]
        %s373 = sld [smem:[#allocation3 + $0x1f]]
        %s374 = sld [smem:[#allocation3 + $0x20]]
        %s375 = sld [smem:[#allocation3 + $0x21]]
        %s376 = sld [smem:[#allocation3 + $0x22]]
        %s377 = sld [smem:[#allocation3 + $0x23]]
        %s378 = sld [smem:[#allocation6]]
        %v379 = vstv %s378
        %v380 = vstv %s342
        %v381 = vmul.f32 %v330, %v380
        %v382 = vmul.f32 %v331, %v380
        %v383 = vmul.f32 %v332, %v380
        %v384 = vmul.f32 %v333, %v380
        %v385 = vadd.f32 %v379, %v381
        %v386 = vadd.f32 %v379, %v382
        %v387 = vadd.f32 %v379, %v383
        %v388 = vadd.f32 %v379, %v384
        %v389 = vstv %s343
        %v390 = vmul.f32 %v330, %v389
        %v391 = vmul.f32 %v331, %v389
        %v392 = vmul.f32 %v332, %v389
        %v393 = vmul.f32 %v333, %v389
        %398 = vrot.lane.b32.xlu0 %v390, 127
        %v399 = vpop.permute.xlu0 %398
        %400 = vrot.lane.b32.xlu0 %v391, 127
        %v401 = vpop.permute.xlu0 %400
        %402 = vrot.lane.b32.xlu0 %v392, 127
        %v403 = vpop.permute.xlu0 %402
        %404 = vrot.lane.b32.xlu0 %v393, 127
        %v405 = vpop.permute.xlu0 %404
        %v410 = vadd.f32 %v385, %v399
        %v411 = vadd.f32 %v386, %v401
        %v412 = vadd.f32 %v387, %v403
        %v413 = vadd.f32 %v388, %v405
        %v414 = vstv %s344
        %v415 = vmul.f32 %v330, %v414
        %v416 = vmul.f32 %v331, %v414
        %v417 = vmul.f32 %v332, %v414
        %v418 = vmul.f32 %v333, %v414
        %423 = vrot.lane.b32.xlu0 %v415, 126
        %v424 = vpop.permute.xlu0 %423
        %425 = vrot.lane.b32.xlu0 %v416, 126
        %v426 = vpop.permute.xlu0 %425
        %427 = vrot.lane.b32.xlu0 %v417, 126
        %v428 = vpop.permute.xlu0 %427
        %429 = vrot.lane.b32.xlu0 %v418, 126
        %v430 = vpop.permute.xlu0 %429
        %v435 = vadd.f32 %v410, %v424
        %v436 = vadd.f32 %v411, %v426
        %v437 = vadd.f32 %v412, %v428
        %v438 = vadd.f32 %v413, %v430
        %v439 = vstv %s345
        %v440 = vmul.f32 %v334, %v439
        %v441 = vmul.f32 %v335, %v439
        %v442 = vmul.f32 %v336, %v439
        %v443 = vmul.f32 %v337, %v439
        %v444 = vadd.f32 %v435, %v440
        %v445 = vadd.f32 %v436, %v441
        %v446 = vadd.f32 %v437, %v442
        %v447 = vadd.f32 %v438, %v443
        %v448 = vstv %s346
        %v449 = vmul.f32 %v334, %v448
        %v450 = vmul.f32 %v335, %v448
        %v451 = vmul.f32 %v336, %v448
        %v452 = vmul.f32 %v337, %v448
        %457 = vrot.lane.b32.xlu0 %v449, 127
        %v458 = vpop.permute.xlu0 %457
        %459 = vrot.lane.b32.xlu0 %v450, 127
        %v460 = vpop.permute.xlu0 %459
        %461 = vrot.lane.b32.xlu0 %v451, 127
        %v462 = vpop.permute.xlu0 %461
        %463 = vrot.lane.b32.xlu0 %v452, 127
        %v464 = vpop.permute.xlu0 %463
        %v469 = vadd.f32 %v444, %v458
        %v470 = vadd.f32 %v445, %v460
        %v471 = vadd.f32 %v446, %v462
        %v472 = vadd.f32 %v447, %v464
        %v473 = vstv %s347
        %v474 = vmul.f32 %v334, %v473
        %v475 = vmul.f32 %v335, %v473
        %v476 = vmul.f32 %v336, %v473
        %v477 = vmul.f32 %v337, %v473
        %482 = vrot.lane.b32.xlu0 %v474, 126
        %v483 = vpop.permute.xlu0 %482
        %484 = vrot.lane.b32.xlu0 %v475, 126
        %v485 = vpop.permute.xlu0 %484
        %486 = vrot.lane.b32.xlu0 %v476, 126
        %v487 = vpop.permute.xlu0 %486
        %488 = vrot.lane.b32.xlu0 %v477, 126
        %v489 = vpop.permute.xlu0 %488
        %v494 = vadd.f32 %v469, %v483
        %v495 = vadd.f32 %v470, %v485
        %v496 = vadd.f32 %v471, %v487
        %v497 = vadd.f32 %v472, %v489
        %v498 = vstv %s348
        %v499 = vmul.f32 %v338, %v498
        %v500 = vmul.f32 %v339, %v498
        %v501 = vmul.f32 %v340, %v498
        %v502 = vmul.f32 %v341, %v498
        %v503 = vadd.f32 %v494, %v499
        %v504 = vadd.f32 %v495, %v500
        %v505 = vadd.f32 %v496, %v501
        %v506 = vadd.f32 %v497, %v502
        %v507 = vstv %s349
        %v508 = vmul.f32 %v338, %v507
        %v509 = vmul.f32 %v339, %v507
        %v510 = vmul.f32 %v340, %v507
        %v511 = vmul.f32 %v341, %v507
        %516 = vrot.lane.b32.xlu0 %v508, 127
        %v517 = vpop.permute.xlu0 %516
        %518 = vrot.lane.b32.xlu0 %v509, 127
        %v519 = vpop.permute.xlu0 %518
        %520 = vrot.lane.b32.xlu0 %v510, 127
        %v521 = vpop.permute.xlu0 %520
        %522 = vrot.lane.b32.xlu0 %v511, 127
        %v523 = vpop.permute.xlu0 %522
        %v528 = vadd.f32 %v503, %v517
        %v529 = vadd.f32 %v504, %v519
        %v530 = vadd.f32 %v505, %v521
        %v531 = vadd.f32 %v506, %v523
        %v532 = vstv %s350
        %v533 = vmul.f32 %v338, %v532
        %v534 = vmul.f32 %v339, %v532
        %v535 = vmul.f32 %v340, %v532
        %v536 = vmul.f32 %v341, %v532
        %541 = vrot.lane.b32.xlu0 %v533, 126
        %v542 = vpop.permute.xlu0 %541
        %543 = vrot.lane.b32.xlu0 %v534, 126
        %v544 = vpop.permute.xlu0 %543
        %545 = vrot.lane.b32.xlu0 %v535, 126
        %v546 = vpop.permute.xlu0 %545
        %547 = vrot.lane.b32.xlu0 %v536, 126
        %v548 = vpop.permute.xlu0 %547
        %v553 = vadd.f32 %v528, %v542
        %v554 = vadd.f32 %v529, %v544
        %v555 = vadd.f32 %v530, %v546
        %v556 = vadd.f32 %v531, %v548
        %vm557 = vcmask 261120
        %558 = vst.msk [vmem:[%s287] sm:$0xff] %vm557, %v553
        %559 = vst.msk [vmem:[%s287 + $0x8] sm:$0xff] %vm557, %v554
        %560 = vst.msk [vmem:[%s287 + $0x10] sm:$0xff] %vm557, %v555
        %561 = vst.msk [vmem:[%s287 + $0x18] sm:$0xff] %vm557, %v556
        %s562 = sld [smem:[#allocation6 + $0x1]]
        %v563 = vstv %s562
        %v564 = vstv %s351
        %v565 = vmul.f32 %v330, %v564
        %v566 = vmul.f32 %v331, %v564
        %v567 = vmul.f32 %v332, %v564
        %v568 = vmul.f32 %v333, %v564
        %v569 = vadd.f32 %v563, %v565
        %v570 = vadd.f32 %v563, %v566
        %v571 = vadd.f32 %v563, %v567
        %v572 = vadd.f32 %v563, %v568
        %v573 = vstv %s352
        %v574 = vmul.f32 %v330, %v573
        %v575 = vmul.f32 %v331, %v573
        %v576 = vmul.f32 %v332, %v573
        %v577 = vmul.f32 %v333, %v573
        %582 = vrot.lane.b32.xlu0 %v574, 127
        %v583 = vpop.permute.xlu0 %582
        %584 = vrot.lane.b32.xlu0 %v575, 127
        %v585 = vpop.permute.xlu0 %584
        %586 = vrot.lane.b32.xlu0 %v576, 127
        %v587 = vpop.permute.xlu0 %586
        %588 = vrot.lane.b32.xlu0 %v577, 127
        %v589 = vpop.permute.xlu0 %588
        %v594 = vadd.f32 %v569, %v583
        %v595 = vadd.f32 %v570, %v585
        %v596 = vadd.f32 %v571, %v587
        %v597 = vadd.f32 %v572, %v589
        %v598 = vstv %s353
        %v599 = vmul.f32 %v330, %v598
        %v600 = vmul.f32 %v331, %v598
        %v601 = vmul.f32 %v332, %v598
        %v602 = vmul.f32 %v333, %v598
        %607 = vrot.lane.b32.xlu0 %v599, 126
        %v608 = vpop.permute.xlu0 %607
        %609 = vrot.lane.b32.xlu0 %v600, 126
        %v610 = vpop.permute.xlu0 %609
        %611 = vrot.lane.b32.xlu0 %v601, 126
        %v612 = vpop.permute.xlu0 %611
        %613 = vrot.lane.b32.xlu0 %v602, 126
        %v614 = vpop.permute.xlu0 %613
        %v619 = vadd.f32 %v594, %v608
        %v620 = vadd.f32 %v595, %v610
        %v621 = vadd.f32 %v596, %v612
        %v622 = vadd.f32 %v597, %v614
        %v623 = vstv %s354
        %v624 = vmul.f32 %v334, %v623
        %v625 = vmul.f32 %v335, %v623
        %v626 = vmul.f32 %v336, %v623
        %v627 = vmul.f32 %v337, %v623
        %v628 = vadd.f32 %v619, %v624
        %v629 = vadd.f32 %v620, %v625
        %v630 = vadd.f32 %v621, %v626
        %v631 = vadd.f32 %v622, %v627
        %v632 = vstv %s355
        %v633 = vmul.f32 %v334, %v632
        %v634 = vmul.f32 %v335, %v632
        %v635 = vmul.f32 %v336, %v632
        %v636 = vmul.f32 %v337, %v632
        %641 = vrot.lane.b32.xlu0 %v633, 127
        %v642 = vpop.permute.xlu0 %641
        %643 = vrot.lane.b32.xlu0 %v634, 127
        %v644 = vpop.permute.xlu0 %643
        %645 = vrot.lane.b32.xlu0 %v635, 127
        %v646 = vpop.permute.xlu0 %645
        %647 = vrot.lane.b32.xlu0 %v636, 127
        %v648 = vpop.permute.xlu0 %647
        %v653 = vadd.f32 %v628, %v642
        %v654 = vadd.f32 %v629, %v644
        %v655 = vadd.f32 %v630, %v646
        %v656 = vadd.f32 %v631, %v648
        %v657 = vstv %s356
        %v658 = vmul.f32 %v334, %v657
        %v659 = vmul.f32 %v335, %v657
        %v660 = vmul.f32 %v336, %v657
        %v661 = vmul.f32 %v337, %v657
        %666 = vrot.lane.b32.xlu0 %v658, 126
        %v667 = vpop.permute.xlu0 %666
        %668 = vrot.lane.b32.xlu0 %v659, 126
        %v669 = vpop.permute.xlu0 %668
        %670 = vrot.lane.b32.xlu0 %v660, 126
        %v671 = vpop.permute.xlu0 %670
        %672 = vrot.lane.b32.xlu0 %v661, 126
        %v673 = vpop.permute.xlu0 %672
        %v678 = vadd.f32 %v653, %v667
        %v679 = vadd.f32 %v654, %v669
        %v680 = vadd.f32 %v655, %v671
        %v681 = vadd.f32 %v656, %v673
        %v682 = vstv %s357
        %v683 = vmul.f32 %v338, %v682
        %v684 = vmul.f32 %v339, %v682
        %v685 = vmul.f32 %v340, %v682
        %v686 = vmul.f32 %v341, %v682
        %v687 = vadd.f32 %v678, %v683
        %v688 = vadd.f32 %v679, %v684
        %v689 = vadd.f32 %v680, %v685
        %v690 = vadd.f32 %v681, %v686
        %v691 = vstv %s358
        %v692 = vmul.f32 %v338, %v691
        %v693 = vmul.f32 %v339, %v691
        %v694 = vmul.f32 %v340, %v691
        %v695 = vmul.f32 %v341, %v691
        %700 = vrot.lane.b32.xlu0 %v692, 127
        %v701 = vpop.permute.xlu0 %700
        %702 = vrot.lane.b32.xlu0 %v693, 127
        %v703 = vpop.permute.xlu0 %702
        %704 = vrot.lane.b32.xlu0 %v694, 127
        %v705 = vpop.permute.xlu0 %704
        %706 = vrot.lane.b32.xlu0 %v695, 127
        %v707 = vpop.permute.xlu0 %706
        %v712 = vadd.f32 %v687, %v701
        %v713 = vadd.f32 %v688, %v703
        %v714 = vadd.f32 %v689, %v705
        %v715 = vadd.f32 %v690, %v707
        %v716 = vstv %s359
        %v717 = vmul.f32 %v338, %v716
        %v718 = vmul.f32 %v339, %v716
        %v719 = vmul.f32 %v340, %v716
        %v720 = vmul.f32 %v341, %v716
        %725 = vrot.lane.b32.xlu0 %v717, 126
        %v726 = vpop.permute.xlu0 %725
        %727 = vrot.lane.b32.xlu0 %v718, 126
        %v728 = vpop.permute.xlu0 %727
        %729 = vrot.lane.b32.xlu0 %v719, 126
        %v730 = vpop.permute.xlu0 %729
        %731 = vrot.lane.b32.xlu0 %v720, 126
        %v732 = vpop.permute.xlu0 %731
        %v737 = vadd.f32 %v712, %v726
        %v738 = vadd.f32 %v713, %v728
        %v739 = vadd.f32 %v714, %v730
        %v740 = vadd.f32 %v715, %v732
        %s741 = scalar_lea.vmem %s287, 32 [#allocation8]
        %742 = vst.msk [vmem:[%s741] sm:$0xff] %vm557, %v737
        %743 = vst.msk [vmem:[%s741 + $0x8] sm:$0xff] %vm557, %v738
        %744 = vst.msk [vmem:[%s741 + $0x10] sm:$0xff] %vm557, %v739
        %745 = vst.msk [vmem:[%s741 + $0x18] sm:$0xff] %vm557, %v740
        %s746 = sld [smem:[#allocation6 + $0x2]]
        %v747 = vstv %s746
        %v748 = vstv %s360
        %v749 = vmul.f32 %v330, %v748
        %v750 = vmul.f32 %v331, %v748
        %v751 = vmul.f32 %v332, %v748
        %v752 = vmul.f32 %v333, %v748
        %v753 = vadd.f32 %v747, %v749
        %v754 = vadd.f32 %v747, %v750
        %v755 = vadd.f32 %v747, %v751
        %v756 = vadd.f32 %v747, %v752
        %v757 = vstv %s361
        %v758 = vmul.f32 %v330, %v757
        %v759 = vmul.f32 %v331, %v757
        %v760 = vmul.f32 %v332, %v757
        %v761 = vmul.f32 %v333, %v757
        %766 = vrot.lane.b32.xlu0 %v758, 127
        %v767 = vpop.permute.xlu0 %766
        %768 = vrot.lane.b32.xlu0 %v759, 127
        %v769 = vpop.permute.xlu0 %768
        %770 = vrot.lane.b32.xlu0 %v760, 127
        %v771 = vpop.permute.xlu0 %770
        %772 = vrot.lane.b32.xlu0 %v761, 127
        %v773 = vpop.permute.xlu0 %772
        %v778 = vadd.f32 %v753, %v767
        %v779 = vadd.f32 %v754, %v769
        %v780 = vadd.f32 %v755, %v771
        %v781 = vadd.f32 %v756, %v773
        %v782 = vstv %s362
        %v783 = vmul.f32 %v330, %v782
        %v784 = vmul.f32 %v331, %v782
        %v785 = vmul.f32 %v332, %v782
        %v786 = vmul.f32 %v333, %v782
        %791 = vrot.lane.b32.xlu0 %v783, 126
        %v792 = vpop.permute.xlu0 %791
        %793 = vrot.lane.b32.xlu0 %v784, 126
        %v794 = vpop.permute.xlu0 %793
        %795 = vrot.lane.b32.xlu0 %v785, 126
        %v796 = vpop.permute.xlu0 %795
        %797 = vrot.lane.b32.xlu0 %v786, 126
        %v798 = vpop.permute.xlu0 %797
        %v803 = vadd.f32 %v778, %v792
        %v804 = vadd.f32 %v779, %v794
        %v805 = vadd.f32 %v780, %v796
        %v806 = vadd.f32 %v781, %v798
        %v807 = vstv %s363
        %v808 = vmul.f32 %v334, %v807
        %v809 = vmul.f32 %v335, %v807
        %v810 = vmul.f32 %v336, %v807
        %v811 = vmul.f32 %v337, %v807
        %v812 = vadd.f32 %v803, %v808
        %v813 = vadd.f32 %v804, %v809
        %v814 = vadd.f32 %v805, %v810
        %v815 = vadd.f32 %v806, %v811
        %v816 = vstv %s364
        %v817 = vmul.f32 %v334, %v816
        %v818 = vmul.f32 %v335, %v816
        %v819 = vmul.f32 %v336, %v816
        %v820 = vmul.f32 %v337, %v816
        %825 = vrot.lane.b32.xlu0 %v817, 127
        %v826 = vpop.permute.xlu0 %825
        %827 = vrot.lane.b32.xlu0 %v818, 127
        %v828 = vpop.permute.xlu0 %827
        %829 = vrot.lane.b32.xlu0 %v819, 127
        %v830 = vpop.permute.xlu0 %829
        %831 = vrot.lane.b32.xlu0 %v820, 127
        %v832 = vpop.permute.xlu0 %831
        %v837 = vadd.f32 %v812, %v826
        %v838 = vadd.f32 %v813, %v828
        %v839 = vadd.f32 %v814, %v830
        %v840 = vadd.f32 %v815, %v832
        %v841 = vstv %s365
        %v842 = vmul.f32 %v334, %v841
        %v843 = vmul.f32 %v335, %v841
        %v844 = vmul.f32 %v336, %v841
        %v845 = vmul.f32 %v337, %v841
        %850 = vrot.lane.b32.xlu0 %v842, 126
        %v851 = vpop.permute.xlu0 %850
        %852 = vrot.lane.b32.xlu0 %v843, 126
        %v853 = vpop.permute.xlu0 %852
        %854 = vrot.lane.b32.xlu0 %v844, 126
        %v855 = vpop.permute.xlu0 %854
        %856 = vrot.lane.b32.xlu0 %v845, 126
        %v857 = vpop.permute.xlu0 %856
        %v862 = vadd.f32 %v837, %v851
        %v863 = vadd.f32 %v838, %v853
        %v864 = vadd.f32 %v839, %v855
        %v865 = vadd.f32 %v840, %v857
        %v866 = vstv %s366
        %v867 = vmul.f32 %v338, %v866
        %v868 = vmul.f32 %v339, %v866
        %v869 = vmul.f32 %v340, %v866
        %v870 = vmul.f32 %v341, %v866
        %v871 = vadd.f32 %v862, %v867
        %v872 = vadd.f32 %v863, %v868
        %v873 = vadd.f32 %v864, %v869
        %v874 = vadd.f32 %v865, %v870
        %v875 = vstv %s367
        %v876 = vmul.f32 %v338, %v875
        %v877 = vmul.f32 %v339, %v875
        %v878 = vmul.f32 %v340, %v875
        %v879 = vmul.f32 %v341, %v875
        %884 = vrot.lane.b32.xlu0 %v876, 127
        %v885 = vpop.permute.xlu0 %884
        %886 = vrot.lane.b32.xlu0 %v877, 127
        %v887 = vpop.permute.xlu0 %886
        %888 = vrot.lane.b32.xlu0 %v878, 127
        %v889 = vpop.permute.xlu0 %888
        %890 = vrot.lane.b32.xlu0 %v879, 127
        %v891 = vpop.permute.xlu0 %890
        %v896 = vadd.f32 %v871, %v885
        %v897 = vadd.f32 %v872, %v887
        %v898 = vadd.f32 %v873, %v889
        %v899 = vadd.f32 %v874, %v891
        %v900 = vstv %s368
        %v901 = vmul.f32 %v338, %v900
        %v902 = vmul.f32 %v339, %v900
        %v903 = vmul.f32 %v340, %v900
        %v904 = vmul.f32 %v341, %v900
        %909 = vrot.lane.b32.xlu0 %v901, 126
        %v910 = vpop.permute.xlu0 %909
        %911 = vrot.lane.b32.xlu0 %v902, 126
        %v912 = vpop.permute.xlu0 %911
        %913 = vrot.lane.b32.xlu0 %v903, 126
        %v914 = vpop.permute.xlu0 %913
        %915 = vrot.lane.b32.xlu0 %v904, 126
        %v916 = vpop.permute.xlu0 %915
        %v921 = vadd.f32 %v896, %v910
        %v922 = vadd.f32 %v897, %v912
        %v923 = vadd.f32 %v898, %v914
        %v924 = vadd.f32 %v899, %v916
        %s925 = scalar_lea.vmem %s287, 64 [#allocation8]
        %926 = vst.msk [vmem:[%s925] sm:$0xff] %vm557, %v921
        %927 = vst.msk [vmem:[%s925 + $0x8] sm:$0xff] %vm557, %v922
        %928 = vst.msk [vmem:[%s925 + $0x10] sm:$0xff] %vm557, %v923
        %929 = vst.msk [vmem:[%s925 + $0x18] sm:$0xff] %vm557, %v924
        %s930 = sld [smem:[#allocation6 + $0x3]]
        %v931 = vstv %s930
        %v932 = vstv %s369
        %v933 = vmul.f32 %v330, %v932
        %v934 = vmul.f32 %v331, %v932
        %v935 = vmul.f32 %v332, %v932
        %v936 = vmul.f32 %v333, %v932
        %v937 = vadd.f32 %v931, %v933
        %v938 = vadd.f32 %v931, %v934
        %v939 = vadd.f32 %v931, %v935
        %v940 = vadd.f32 %v931, %v936
        %v941 = vstv %s370
        %v942 = vmul.f32 %v330, %v941
        %v943 = vmul.f32 %v331, %v941
        %v944 = vmul.f32 %v332, %v941
        %v945 = vmul.f32 %v333, %v941
        %950 = vrot.lane.b32.xlu0 %v942, 127
        %v951 = vpop.permute.xlu0 %950
        %952 = vrot.lane.b32.xlu0 %v943, 127
        %v953 = vpop.permute.xlu0 %952
        %954 = vrot.lane.b32.xlu0 %v944, 127
        %v955 = vpop.permute.xlu0 %954
        %956 = vrot.lane.b32.xlu0 %v945, 127
        %v957 = vpop.permute.xlu0 %956
        %v962 = vadd.f32 %v937, %v951
        %v963 = vadd.f32 %v938, %v953
        %v964 = vadd.f32 %v939, %v955
        %v965 = vadd.f32 %v940, %v957
        %v966 = vstv %s371
        %v967 = vmul.f32 %v330, %v966
        %v968 = vmul.f32 %v331, %v966
        %v969 = vmul.f32 %v332, %v966
        %v970 = vmul.f32 %v333, %v966
        %975 = vrot.lane.b32.xlu0 %v967, 126
        %v976 = vpop.permute.xlu0 %975
        %977 = vrot.lane.b32.xlu0 %v968, 126
        %v978 = vpop.permute.xlu0 %977
        %979 = vrot.lane.b32.xlu0 %v969, 126
        %v980 = vpop.permute.xlu0 %979
        %981 = vrot.lane.b32.xlu0 %v970, 126
        %v982 = vpop.permute.xlu0 %981
        %v987 = vadd.f32 %v962, %v976
        %v988 = vadd.f32 %v963, %v978
        %v989 = vadd.f32 %v964, %v980
        %v990 = vadd.f32 %v965, %v982
        %v991 = vstv %s372
        %v992 = vmul.f32 %v334, %v991
        %v993 = vmul.f32 %v335, %v991
        %v994 = vmul.f32 %v336, %v991
        %v995 = vmul.f32 %v337, %v991
        %v996 = vadd.f32 %v987, %v992
        %v997 = vadd.f32 %v988, %v993
        %v998 = vadd.f32 %v989, %v994
        %v999 = vadd.f32 %v990, %v995
        %v1000 = vstv %s373
        %v1001 = vmul.f32 %v334, %v1000
        %v1002 = vmul.f32 %v335, %v1000
        %v1003 = vmul.f32 %v336, %v1000
        %v1004 = vmul.f32 %v337, %v1000
        %1009 = vrot.lane.b32.xlu0 %v1001, 127
        %v1010 = vpop.permute.xlu0 %1009
        %1011 = vrot.lane.b32.xlu0 %v1002, 127
        %v1012 = vpop.permute.xlu0 %1011
        %1013 = vrot.lane.b32.xlu0 %v1003, 127
        %v1014 = vpop.permute.xlu0 %1013
        %1015 = vrot.lane.b32.xlu0 %v1004, 127
        %v1016 = vpop.permute.xlu0 %1015
        %v1021 = vadd.f32 %v996, %v1010
        %v1022 = vadd.f32 %v997, %v1012
        %v1023 = vadd.f32 %v998, %v1014
        %v1024 = vadd.f32 %v999, %v1016
        %v1025 = vstv %s374
        %v1026 = vmul.f32 %v334, %v1025
        %v1027 = vmul.f32 %v335, %v1025
        %v1028 = vmul.f32 %v336, %v1025
        %v1029 = vmul.f32 %v337, %v1025
        %1034 = vrot.lane.b32.xlu0 %v1026, 126
        %v1035 = vpop.permute.xlu0 %1034
        %1036 = vrot.lane.b32.xlu0 %v1027, 126
        %v1037 = vpop.permute.xlu0 %1036
        %1038 = vrot.lane.b32.xlu0 %v1028, 126
        %v1039 = vpop.permute.xlu0 %1038
        %1040 = vrot.lane.b32.xlu0 %v1029, 126
        %v1041 = vpop.permute.xlu0 %1040
        %v1046 = vadd.f32 %v1021, %v1035
        %v1047 = vadd.f32 %v1022, %v1037
        %v1048 = vadd.f32 %v1023, %v1039
        %v1049 = vadd.f32 %v1024, %v1041
        %v1050 = vstv %s375
        %v1051 = vmul.f32 %v338, %v1050
        %v1052 = vmul.f32 %v339, %v1050
        %v1053 = vmul.f32 %v340, %v1050
        %v1054 = vmul.f32 %v341, %v1050
        %v1055 = vadd.f32 %v1046, %v1051
        %v1056 = vadd.f32 %v1047, %v1052
        %v1057 = vadd.f32 %v1048, %v1053
        %v1058 = vadd.f32 %v1049, %v1054
        %v1059 = vstv %s376
        %v1060 = vmul.f32 %v338, %v1059
        %v1061 = vmul.f32 %v339, %v1059
        %v1062 = vmul.f32 %v340, %v1059
        %v1063 = vmul.f32 %v341, %v1059
        %1068 = vrot.lane.b32.xlu0 %v1060, 127
        %v1069 = vpop.permute.xlu0 %1068
        %1070 = vrot.lane.b32.xlu0 %v1061, 127
        %v1071 = vpop.permute.xlu0 %1070
        %1072 = vrot.lane.b32.xlu0 %v1062, 127
        %v1073 = vpop.permute.xlu0 %1072
        %1074 = vrot.lane.b32.xlu0 %v1063, 127
        %v1075 = vpop.permute.xlu0 %1074
        %v1080 = vadd.f32 %v1055, %v1069
        %v1081 = vadd.f32 %v1056, %v1071
        %v1082 = vadd.f32 %v1057, %v1073
        %v1083 = vadd.f32 %v1058, %v1075
        %v1084 = vstv %s377
        %v1085 = vmul.f32 %v338, %v1084
        %v1086 = vmul.f32 %v339, %v1084
        %v1087 = vmul.f32 %v340, %v1084
        %v1088 = vmul.f32 %v341, %v1084
        %1093 = vrot.lane.b32.xlu0 %v1085, 126
        %v1094 = vpop.permute.xlu0 %1093
        %1095 = vrot.lane.b32.xlu0 %v1086, 126
        %v1096 = vpop.permute.xlu0 %1095
        %1097 = vrot.lane.b32.xlu0 %v1087, 126
        %v1098 = vpop.permute.xlu0 %1097
        %1099 = vrot.lane.b32.xlu0 %v1088, 126
        %v1100 = vpop.permute.xlu0 %1099
        %v1105 = vadd.f32 %v1080, %v1094
        %v1106 = vadd.f32 %v1081, %v1096
        %v1107 = vadd.f32 %v1082, %v1098
        %v1108 = vadd.f32 %v1083, %v1100
        %s1109 = scalar_lea.vmem %s287, 96 [#allocation8]
        %1110 = vst.msk [vmem:[%s1109] sm:$0xff] %vm557, %v1105
        %1111 = vst.msk [vmem:[%s1109 + $0x8] sm:$0xff] %vm557, %v1106
        %1112 = vst.msk [vmem:[%s1109 + $0x10] sm:$0xff] %vm557, %v1107
        %1113 = vst.msk [vmem:[%s1109 + $0x18] sm:$0xff] %vm557, %v1108
        %s1114 = sand.u32 %s144, 1
        %s1115 = scalar_lea.sflag [#allocation4], %s1114
        %s1116 = sand.u32 %s144, 1
        %s1117 = smul.addr %s1116, 128
        %s1118 = scalar_lea.vmem [#allocation8], %s1117
        // Predicated region
        $region45: #{pdem_forward.5} parent=35 // pred_check
          %p1119 = pneg %p154
        $region46: #{pdem_forward.5} parent=35 // pred_check_branch
          %1121 = sbr.rel (%p1119) target = $region48
        $region47: #{pdem_forward.5} parent=35 // pred_region
          %s1122 = smul.u32 4, %s25
          %1124 = vsyncadd %s1115, 0
          %s1125 = smul.addr %s24, 16
          %s1126 = sadd.s32 %s1122, %s1125
          %s1127 = smul.addr %s1126, 8
          %s1128 = scalar_lea.hbm %s4, %s1127
          %s1129 = sshll.u32 %s1118, 4
          %s1130 = int_to_ptr.vmem [resolvable:$true] %s1129
          %s1131 = sshll.u32 %s1128, 4
          %s1132 = int_to_ptr.hbm [resolvable:$true] %s1131
          %1137 = dma.vmem_to_hbm [thread:$0]  %s1130, 2048, %s1132, %s1115, 128, 128, 8
        $region48: #{pdem_forward.5} parent=35 // pred_fallthru
          _
      $region36: #{pdem_forward.5} parent=5 // pred_fallthru
        _
      %p1138 = scmp.le.s32.totalorder 2, %s15
      // Predicated region
      $region49: #{pdem_forward.5} parent=5 // pred_check
        %p1139 = pneg %p1138
      $region50: #{pdem_forward.5} parent=5 // pred_check_branch
        %1141 = sbr.rel (%p1139) target = $region52
      $region51: #{pdem_forward.5} parent=5 // pred_region
        %s1142 = ssub.s32 %s15, 2
        // Predicated region
        $region53: #{pdem_forward.5} parent=51 // pred_check
          %p1143 = pneg %p160
        $region54: #{pdem_forward.5} parent=51 // pred_check_branch
          %1145 = sbr.rel (%p1143) target = $region56
        $region55: #{pdem_forward.5} parent=51 // pred_region
          %s1146 = sand.u32 %s145, 1
          %s1147 = scalar_lea.sflag [#allocation4], %s1146
          %s1148 = sand.u32 %s145, 1
          %s1149 = smul.addr %s1148, 128
          %s1150 = scalar_lea.vmem [#allocation8], %s1149
          %1152 = dma.done %s1147, 2048
        $region56: #{pdem_forward.5} parent=51 // pred_fallthru
          _
      $region52: #{pdem_forward.5} parent=5 // pred_fallthru
        _
    $region6: #{pdem_forward.5} parent=1 // loop_footer
      %s19 = sadd.s32 1, %s15
    $region7: #{pdem_forward.5} parent=1 // loop_footer_branch
      %14 = sbr.rel target = $region3
    $region8: #{pdem_forward.5} parent=1 // loop_exit
      _
    %1153 = vsyncpa [#allocation4], 1
    %s1154 = scalar_lea.sflag [#allocation4], 1
    %1155 = vsyncpa %s1154, 1
    %1156 = vsyncpa [#allocation5], 1
    %s1157 = scalar_lea.sflag [#allocation5], 1
    %1158 = vsyncpa %s1157, 1
    %1159 = vsyncpa [#allocation7], 1

// kernel: pdem_forward.4
$region0: #{pdem_forward.4}
  #allocation0 [shape = 'u32[]', space=smem, size = 0x4, offset = 0x4, fixed_abs, tag = 'smem constant byte address 0x4 - core index']
  #allocation1 [shape = 'u32[72,128]{1,0:T(1,128)}', space=vmem, size = 0x9000, scoped, tag = 'internal scratch']
  %s0 = inlined_call_operand.vmem [shape: f32[2,8], index: 0, kind: input, shape index: {}]
  %s1 = inlined_call_operand.vmem [shape: f32[2,1024], index: 1, kind: input, shape index: {}]
  %s2 = inlined_call_operand.vmem [shape: f32[8,1024], index: 2, kind: input, shape index: {}]
  %s3 = inlined_call_operand.vmem [shape: f32[1024,1024], index: 3, kind: input, shape index: {}]
  %s4 = inlined_call_operand.vmem [shape: f32[2,1024], index: 4, kind: output, shape index: {}]
  %s5 = sld [smem:[#allocation0]]
  $region26: #{pdem_forward.4} parent=0
    _
  %s7 = ssub.s32 1, %s5
  %s8 = scalar_select 0, %s7, %s5
  // Predicated region
  $region2: #{pdem_forward.4} parent=0 // pred_check
    _
  $region3: #{pdem_forward.4} parent=0 // pred_check_branch
    %10 = sbr.rel (0) target = $region5
  $region4: #{pdem_forward.4} parent=0 // pred_region
    _
  $region5: #{pdem_forward.4} parent=0 // pred_fallthru
    _
  // Predicated region
  $region6: #{pdem_forward.4} parent=0 // pred_check
    _
  $region7: #{pdem_forward.4} parent=0 // pred_check_branch
    %12 = sbr.rel (0) target = $region9
  $region8: #{pdem_forward.4} parent=0 // pred_region
    _
  $region9: #{pdem_forward.4} parent=0 // pred_fallthru
    _
  // Predicated region
  $region10: #{pdem_forward.4} parent=0 // pred_check
    _
  $region11: #{pdem_forward.4} parent=0 // pred_check_branch
    %14 = sbr.rel (0) target = $region13
  $region12: #{pdem_forward.4} parent=0 // pred_region
    _
  $region13: #{pdem_forward.4} parent=0 // pred_fallthru
    _
  // Predicated region
  $region14: #{pdem_forward.4} parent=0 // pred_check
    _
  $region15: #{pdem_forward.4} parent=0 // pred_check_branch
    %16 = sbr.rel (0) target = $region17
  $region16: #{pdem_forward.4} parent=0 // pred_region
    _
  $region17: #{pdem_forward.4} parent=0 // pred_fallthru
    _
  %v17 = vld [vmem:[%s0] sm:$0x3]
  %v18 = vld [vmem:[%s2] sm:$0xff]
  %v19 = vld [vmem:[%s2 + $0x8] sm:$0xff]
  %v20 = vld [vmem:[%s2 + $0x10] sm:$0xff]
  %v21 = vld [vmem:[%s2 + $0x18] sm:$0xff]
  %v22 = vld [vmem:[%s2 + $0x20] sm:$0xff]
  %v23 = vld [vmem:[%s2 + $0x28] sm:$0xff]
  %v24 = vld [vmem:[%s2 + $0x30] sm:$0xff]
  %v25 = vld [vmem:[%s2 + $0x38] sm:$0xff]
  %vm26 = vcmask 64512
  %v28 = vsel %vm26, %v17, 0
  %30 = vmatpush.msra.mxu0 0.0
  %31 = vmatpush.msra.mxu0 0.0
  %32 = vmatpush.msra.mxu0 0.0
  %33 = vmatpush.msra.mxu0 0.0
  %34 = vmatpush.msra.mxu0 0.0
  %35 = vmatpush.msra.mxu0 0.0
  %36 = vmatpush.msra.mxu0 0.0
  %37 = vmatpush.msra.mxu0 0.0
  %38 = vmatpush.msra.mxu0 0.0
  %39 = vmatpush.msra.mxu0 0.0
  %40 = vmatpush.msra.mxu0 0.0
  %41 = vmatpush.msra.mxu0 0.0
  %42 = vmatpush.msra.mxu0 0.0
  %43 = vmatpush.msra.mxu0 0.0
  %44 = vmatpush.msra.mxu0 0.0
  %45 = vmatpush.msra.mxu0 %v18
  %46 = vmatmul.f32.gmra.mxu0 %v28
  %v47 = vpop.f32.mrf.mxu0
  %v48 = vadd.f32 0.0, %v47
  %49 = vdwg.mxu0
  %50 = vmatpush.msra.mxu0 0.0
  %51 = vmatpush.msra.mxu0 0.0
  %52 = vmatpush.msra.mxu0 0.0
  %53 = vmatpush.msra.mxu0 0.0
  %54 = vmatpush.msra.mxu0 0.0
  %55 = vmatpush.msra.mxu0 0.0
  %56 = vmatpush.msra.mxu0 0.0
  %57 = vmatpush.msra.mxu0 0.0
  %58 = vmatpush.msra.mxu0 0.0
  %59 = vmatpush.msra.mxu0 0.0
  %60 = vmatpush.msra.mxu0 0.0
  %61 = vmatpush.msra.mxu0 0.0
  %62 = vmatpush.msra.mxu0 0.0
  %63 = vmatpush.msra.mxu0 0.0
  %64 = vmatpush.msra.mxu0 0.0
  %65 = vmatpush.msra.mxu0 %v19
  %66 = vmatmul.f32.gmra.mxu0 %v28
  %v67 = vpop.f32.mrf.mxu0
  %v68 = vadd.f32 0.0, %v67
  %69 = vdwg.mxu0
  %70 = vmatpush.msra.mxu0 0.0
  %71 = vmatpush.msra.mxu0 0.0
  %72 = vmatpush.msra.mxu0 0.0
  %73 = vmatpush.msra.mxu0 0.0
  %74 = vmatpush.msra.mxu0 0.0
  %75 = vmatpush.msra.mxu0 0.0
  %76 = vmatpush.msra.mxu0 0.0
  %77 = vmatpush.msra.mxu0 0.0
  %78 = vmatpush.msra.mxu0 0.0
  %79 = vmatpush.msra.mxu0 0.0
  %80 = vmatpush.msra.mxu0 0.0
  %81 = vmatpush.msra.mxu0 0.0
  %82 = vmatpush.msra.mxu0 0.0
  %83 = vmatpush.msra.mxu0 0.0
  %84 = vmatpush.msra.mxu0 0.0
  %85 = vmatpush.msra.mxu0 %v20
  %86 = vmatmul.f32.gmra.mxu0 %v28
  %v87 = vpop.f32.mrf.mxu0
  %v88 = vadd.f32 0.0, %v87
  %89 = vdwg.mxu0
  %90 = vmatpush.msra.mxu0 0.0
  %91 = vmatpush.msra.mxu0 0.0
  %92 = vmatpush.msra.mxu0 0.0
  %93 = vmatpush.msra.mxu0 0.0
  %94 = vmatpush.msra.mxu0 0.0
  %95 = vmatpush.msra.mxu0 0.0
  %96 = vmatpush.msra.mxu0 0.0
  %97 = vmatpush.msra.mxu0 0.0
  %98 = vmatpush.msra.mxu0 0.0
  %99 = vmatpush.msra.mxu0 0.0
  %100 = vmatpush.msra.mxu0 0.0
  %101 = vmatpush.msra.mxu0 0.0
  %102 = vmatpush.msra.mxu0 0.0
  %103 = vmatpush.msra.mxu0 0.0
  %104 = vmatpush.msra.mxu0 0.0
  %105 = vmatpush.msra.mxu0 %v21
  %106 = vmatmul.f32.gmra.mxu0 %v28
  %v107 = vpop.f32.mrf.mxu0
  %v108 = vadd.f32 0.0, %v107
  %109 = vdwg.mxu0
  %110 = vmatpush.msra.mxu0 0.0
  %111 = vmatpush.msra.mxu0 0.0
  %112 = vmatpush.msra.mxu0 0.0
  %113 = vmatpush.msra.mxu0 0.0
  %114 = vmatpush.msra.mxu0 0.0
  %115 = vmatpush.msra.mxu0 0.0
  %116 = vmatpush.msra.mxu0 0.0
  %117 = vmatpush.msra.mxu0 0.0
  %118 = vmatpush.msra.mxu0 0.0
  %119 = vmatpush.msra.mxu0 0.0
  %120 = vmatpush.msra.mxu0 0.0
  %121 = vmatpush.msra.mxu0 0.0
  %122 = vmatpush.msra.mxu0 0.0
  %123 = vmatpush.msra.mxu0 0.0
  %124 = vmatpush.msra.mxu0 0.0
  %125 = vmatpush.msra.mxu0 %v22
  %126 = vmatmul.f32.gmra.mxu0 %v28
  %v127 = vpop.f32.mrf.mxu0
  %v128 = vadd.f32 0.0, %v127
  %129 = vdwg.mxu0
  %130 = vmatpush.msra.mxu0 0.0
  %131 = vmatpush.msra.mxu0 0.0
  %132 = vmatpush.msra.mxu0 0.0
  %133 = vmatpush.msra.mxu0 0.0
  %134 = vmatpush.msra.mxu0 0.0
  %135 = vmatpush.msra.mxu0 0.0
  %136 = vmatpush.msra.mxu0 0.0
  %137 = vmatpush.msra.mxu0 0.0
  %138 = vmatpush.msra.mxu0 0.0
  %139 = vmatpush.msra.mxu0 0.0
  %140 = vmatpush.msra.mxu0 0.0
  %141 = vmatpush.msra.mxu0 0.0
  %142 = vmatpush.msra.mxu0 0.0
  %143 = vmatpush.msra.mxu0 0.0
  %144 = vmatpush.msra.mxu0 0.0
  %145 = vmatpush.msra.mxu0 %v23
  %146 = vmatmul.f32.gmra.mxu0 %v28
  %v147 = vpop.f32.mrf.mxu0
  %v148 = vadd.f32 0.0, %v147
  %149 = vdwg.mxu0
  %150 = vmatpush.msra.mxu0 0.0
  %151 = vmatpush.msra.mxu0 0.0
  %152 = vmatpush.msra.mxu0 0.0
  %153 = vmatpush.msra.mxu0 0.0
  %154 = vmatpush.msra.mxu0 0.0
  %155 = vmatpush.msra.mxu0 0.0
  %156 = vmatpush.msra.mxu0 0.0
  %157 = vmatpush.msra.mxu0 0.0
  %158 = vmatpush.msra.mxu0 0.0
  %159 = vmatpush.msra.mxu0 0.0
  %160 = vmatpush.msra.mxu0 0.0
  %161 = vmatpush.msra.mxu0 0.0
  %162 = vmatpush.msra.mxu0 0.0
  %163 = vmatpush.msra.mxu0 0.0
  %164 = vmatpush.msra.mxu0 0.0
  %165 = vmatpush.msra.mxu0 %v24
  %166 = vmatmul.f32.gmra.mxu0 %v28
  %v167 = vpop.f32.mrf.mxu0
  %v168 = vadd.f32 0.0, %v167
  %169 = vdwg.mxu0
  %170 = vmatpush.msra.mxu0 0.0
  %171 = vmatpush.msra.mxu0 0.0
  %172 = vmatpush.msra.mxu0 0.0
  %173 = vmatpush.msra.mxu0 0.0
  %174 = vmatpush.msra.mxu0 0.0
  %175 = vmatpush.msra.mxu0 0.0
  %176 = vmatpush.msra.mxu0 0.0
  %177 = vmatpush.msra.mxu0 0.0
  %178 = vmatpush.msra.mxu0 0.0
  %179 = vmatpush.msra.mxu0 0.0
  %180 = vmatpush.msra.mxu0 0.0
  %181 = vmatpush.msra.mxu0 0.0
  %182 = vmatpush.msra.mxu0 0.0
  %183 = vmatpush.msra.mxu0 0.0
  %184 = vmatpush.msra.mxu0 0.0
  %185 = vmatpush.msra.mxu0 %v25
  %186 = vmatmul.f32.gmra.mxu0 %v28
  %v187 = vpop.f32.mrf.mxu0
  %v188 = vadd.f32 0.0, %v187
  %189 = vdwg.mxu0
  %v190 = vld [vmem:[%s1] sm:$0xff]
  %v191 = vld [vmem:[%s1 + $0x8] sm:$0xff]
  %v192 = vld [vmem:[%s3] sm:$0xff]
  %v193 = vld [vmem:[%s3 + $0x8] sm:$0xff]
  %v194 = vld [vmem:[%s3 + $0x10] sm:$0xff]
  %v195 = vld [vmem:[%s3 + $0x18] sm:$0xff]
  %v196 = vld [vmem:[%s3 + $0x20] sm:$0xff]
  %v197 = vld [vmem:[%s3 + $0x28] sm:$0xff]
  %v198 = vld [vmem:[%s3 + $0x30] sm:$0xff]
  %v199 = vld [vmem:[%s3 + $0x38] sm:$0xff]
  %v200 = vld [vmem:[%s3 + $0x40] sm:$0xff]
  %v201 = vld [vmem:[%s3 + $0x48] sm:$0xff]
  %v202 = vld [vmem:[%s3 + $0x50] sm:$0xff]
  %v203 = vld [vmem:[%s3 + $0x58] sm:$0xff]
  %v204 = vld [vmem:[%s3 + $0x60] sm:$0xff]
  %v205 = vld [vmem:[%s3 + $0x68] sm:$0xff]
  %v206 = vld [vmem:[%s3 + $0x70] sm:$0xff]
  %v207 = vld [vmem:[%s3 + $0x78] sm:$0xff]
  %v208 = vld [vmem:[%s3 + $0x80] sm:$0xff]
  %v209 = vld [vmem:[%s3 + $0x88] sm:$0xff]
  %v210 = vld [vmem:[%s3 + $0x90] sm:$0xff]
  %v211 = vld [vmem:[%s3 + $0x98] sm:$0xff]
  %v212 = vld [vmem:[%s3 + $0xa0] sm:$0xff]
  %v213 = vld [vmem:[%s3 + $0xa8] sm:$0xff]
  %v214 = vld [vmem:[%s3 + $0xb0] sm:$0xff]
  %v215 = vld [vmem:[%s3 + $0xb8] sm:$0xff]
  %v216 = vld [vmem:[%s3 + $0xc0] sm:$0xff]
  %v217 = vld [vmem:[%s3 + $0xc8] sm:$0xff]
  %v218 = vld [vmem:[%s3 + $0xd0] sm:$0xff]
  %v219 = vld [vmem:[%s3 + $0xd8] sm:$0xff]
  %v220 = vld [vmem:[%s3 + $0xe0] sm:$0xff]
  %v221 = vld [vmem:[%s3 + $0xe8] sm:$0xff]
  %v222 = vld [vmem:[%s3 + $0xf0] sm:$0xff]
  %v223 = vld [vmem:[%s3 + $0xf8] sm:$0xff]
  %v224 = vld [vmem:[%s3 + $0x100] sm:$0xff]
  %v225 = vld [vmem:[%s3 + $0x108] sm:$0xff]
  %v226 = vld [vmem:[%s3 + $0x110] sm:$0xff]
  %v227 = vld [vmem:[%s3 + $0x118] sm:$0xff]
  %v228 = vld [vmem:[%s3 + $0x120] sm:$0xff]
  %v229 = vld [vmem:[%s3 + $0x128] sm:$0xff]
  %v230 = vld [vmem:[%s3 + $0x130] sm:$0xff]
  %v231 = vld [vmem:[%s3 + $0x138] sm:$0xff]
  %v232 = vld [vmem:[%s3 + $0x140] sm:$0xff]
  %v233 = vld [vmem:[%s3 + $0x148] sm:$0xff]
  %v234 = vld [vmem:[%s3 + $0x150] sm:$0xff]
  %v235 = vld [vmem:[%s3 + $0x158] sm:$0xff]
  %v236 = vld [vmem:[%s3 + $0x160] sm:$0xff]
  %v237 = vld [vmem:[%s3 + $0x168] sm:$0xff]
  %v238 = vld [vmem:[%s3 + $0x170] sm:$0xff]
  %v239 = vld [vmem:[%s3 + $0x178] sm:$0xff]
  %v240 = vld [vmem:[%s3 + $0x180] sm:$0xff]
  %v241 = vld [vmem:[%s3 + $0x188] sm:$0xff]
  %v242 = vld [vmem:[%s3 + $0x190] sm:$0xff]
  %v243 = vld [vmem:[%s3 + $0x198] sm:$0xff]
  %v244 = vld [vmem:[%s3 + $0x1a0] sm:$0xff]
  %v245 = vld [vmem:[%s3 + $0x1a8] sm:$0xff]
  %v246 = vld [vmem:[%s3 + $0x1b0] sm:$0xff]
  %v247 = vld [vmem:[%s3 + $0x1b8] sm:$0xff]
  %v248 = vld [vmem:[%s3 + $0x1c0] sm:$0xff]
  %v249 = vld [vmem:[%s3 + $0x1c8] sm:$0xff]
  %v250 = vld [vmem:[%s3 + $0x1d0] sm:$0xff]
  %v251 = vld [vmem:[%s3 + $0x1d8] sm:$0xff]
  %v252 = vld [vmem:[%s3 + $0x1e0] sm:$0xff]
  %v253 = vld [vmem:[%s3 + $0x1e8] sm:$0xff]
  %v254 = vld [vmem:[%s3 + $0x1f0] sm:$0xff]
  %v255 = vld [vmem:[%s3 + $0x1f8] sm:$0xff]
  %v256 = vld [vmem:[%s3 + $0x200] sm:$0xff]
  %v257 = vld [vmem:[%s3 + $0x208] sm:$0xff]
  %v258 = vld [vmem:[%s3 + $0x210] sm:$0xff]
  %v259 = vld [vmem:[%s3 + $0x218] sm:$0xff]
  %v260 = vld [vmem:[%s3 + $0x220] sm:$0xff]
  %v261 = vld [vmem:[%s3 + $0x228] sm:$0xff]
  %v262 = vld [vmem:[%s3 + $0x230] sm:$0xff]
  %v263 = vld [vmem:[%s3 + $0x238] sm:$0xff]
  %v264 = vld [vmem:[%s3 + $0x240] sm:$0xff]
  %v265 = vld [vmem:[%s3 + $0x248] sm:$0xff]
  %v266 = vld [vmem:[%s3 + $0x250] sm:$0xff]
  %v267 = vld [vmem:[%s3 + $0x258] sm:$0xff]
  %v268 = vld [vmem:[%s3 + $0x260] sm:$0xff]
  %v269 = vld [vmem:[%s3 + $0x268] sm:$0xff]
  %v270 = vld [vmem:[%s3 + $0x270] sm:$0xff]
  %v271 = vld [vmem:[%s3 + $0x278] sm:$0xff]
  %v272 = vld [vmem:[%s3 + $0x280] sm:$0xff]
  %v273 = vld [vmem:[%s3 + $0x288] sm:$0xff]
  %v274 = vld [vmem:[%s3 + $0x290] sm:$0xff]
  %v275 = vld [vmem:[%s3 + $0x298] sm:$0xff]
  %v276 = vld [vmem:[%s3 + $0x2a0] sm:$0xff]
  %v277 = vld [vmem:[%s3 + $0x2a8] sm:$0xff]
  %v278 = vld [vmem:[%s3 + $0x2b0] sm:$0xff]
  %v279 = vld [vmem:[%s3 + $0x2b8] sm:$0xff]
  %v280 = vld [vmem:[%s3 + $0x2c0] sm:$0xff]
  %v281 = vld [vmem:[%s3 + $0x2c8] sm:$0xff]
  %v282 = vld [vmem:[%s3 + $0x2d0] sm:$0xff]
  %v283 = vld [vmem:[%s3 + $0x2d8] sm:$0xff]
  %v284 = vld [vmem:[%s3 + $0x2e0] sm:$0xff]
  %v285 = vld [vmem:[%s3 + $0x2e8] sm:$0xff]
  %v286 = vld [vmem:[%s3 + $0x2f0] sm:$0xff]
  %v287 = vld [vmem:[%s3 + $0x2f8] sm:$0xff]
  %v288 = vld [vmem:[%s3 + $0x300] sm:$0xff]
  %v289 = vld [vmem:[%s3 + $0x308] sm:$0xff]
  %v290 = vld [vmem:[%s3 + $0x310] sm:$0xff]
  %v291 = vld [vmem:[%s3 + $0x318] sm:$0xff]
  %v292 = vld [vmem:[%s3 + $0x320] sm:$0xff]
  %v293 = vld [vmem:[%s3 + $0x328] sm:$0xff]
  %v294 = vld [vmem:[%s3 + $0x330] sm:$0xff]
  %v295 = vld [vmem:[%s3 + $0x338] sm:$0xff]
  %v296 = vld [vmem:[%s3 + $0x340] sm:$0xff]
  %v297 = vld [vmem:[%s3 + $0x348] sm:$0xff]
  %v298 = vld [vmem:[%s3 + $0x350] sm:$0xff]
  %v299 = vld [vmem:[%s3 + $0x358] sm:$0xff]
  %v300 = vld [vmem:[%s3 + $0x360] sm:$0xff]
  %v301 = vld [vmem:[%s3 + $0x368] sm:$0xff]
  %v302 = vld [vmem:[%s3 + $0x370] sm:$0xff]
  %v303 = vld [vmem:[%s3 + $0x378] sm:$0xff]
  %v304 = vld [vmem:[%s3 + $0x380] sm:$0xff]
  %v305 = vld [vmem:[%s3 + $0x388] sm:$0xff]
  %v306 = vld [vmem:[%s3 + $0x390] sm:$0xff]
  %v307 = vld [vmem:[%s3 + $0x398] sm:$0xff]
  %v308 = vld [vmem:[%s3 + $0x3a0] sm:$0xff]
  %v309 = vld [vmem:[%s3 + $0x3a8] sm:$0xff]
  %v310 = vld [vmem:[%s3 + $0x3b0] sm:$0xff]
  %v311 = vld [vmem:[%s3 + $0x3b8] sm:$0xff]
  %v312 = vld [vmem:[%s3 + $0x3c0] sm:$0xff]
  %v313 = vld [vmem:[%s3 + $0x3c8] sm:$0xff]
  %v314 = vld [vmem:[%s3 + $0x3d0] sm:$0xff]
  %v315 = vld [vmem:[%s3 + $0x3d8] sm:$0xff]
  %v316 = vld [vmem:[%s3 + $0x3e0] sm:$0xff]
  %v317 = vld [vmem:[%s3 + $0x3e8] sm:$0xff]
  %v318 = vld [vmem:[%s3 + $0x3f0] sm:$0xff]
  %v319 = vld [vmem:[%s3 + $0x3f8] sm:$0xff]
  %v320 = vld [vmem:[%s3 + $0x400] sm:$0xff]
  %v321 = vld [vmem:[%s3 + $0x408] sm:$0xff]
  %v322 = vld [vmem:[%s3 + $0x410] sm:$0xff]
  %v323 = vld [vmem:[%s3 + $0x418] sm:$0xff]
  %v324 = vld [vmem:[%s3 + $0x420] sm:$0xff]
  %v325 = vld [vmem:[%s3 + $0x428] sm:$0xff]
  %v326 = vld [vmem:[%s3 + $0x430] sm:$0xff]
  %v327 = vld [vmem:[%s3 + $0x438] sm:$0xff]
  %v328 = vld [vmem:[%s3 + $0x440] sm:$0xff]
  %v329 = vld [vmem:[%s3 + $0x448] sm:$0xff]
  %v330 = vld [vmem:[%s3 + $0x450] sm:$0xff]
  %v331 = vld [vmem:[%s3 + $0x458] sm:$0xff]
  %v332 = vld [vmem:[%s3 + $0x460] sm:$0xff]
  %v333 = vld [vmem:[%s3 + $0x468] sm:$0xff]
  %v334 = vld [vmem:[%s3 + $0x470] sm:$0xff]
  %v335 = vld [vmem:[%s3 + $0x478] sm:$0xff]
  %v336 = vld [vmem:[%s3 + $0x480] sm:$0xff]
  %v337 = vld [vmem:[%s3 + $0x488] sm:$0xff]
  %v338 = vld [vmem:[%s3 + $0x490] sm:$0xff]
  %v339 = vld [vmem:[%s3 + $0x498] sm:$0xff]
  %v340 = vld [vmem:[%s3 + $0x4a0] sm:$0xff]
  %v341 = vld [vmem:[%s3 + $0x4a8] sm:$0xff]
  %v342 = vld [vmem:[%s3 + $0x4b0] sm:$0xff]
  %v343 = vld [vmem:[%s3 + $0x4b8] sm:$0xff]
  %v344 = vld [vmem:[%s3 + $0x4c0] sm:$0xff]
  %v345 = vld [vmem:[%s3 + $0x4c8] sm:$0xff]
  %v346 = vld [vmem:[%s3 + $0x4d0] sm:$0xff]
  %v347 = vld [vmem:[%s3 + $0x4d8] sm:$0xff]
  %v348 = vld [vmem:[%s3 + $0x4e0] sm:$0xff]
  %v349 = vld [vmem:[%s3 + $0x4e8] sm:$0xff]
  %v350 = vld [vmem:[%s3 + $0x4f0] sm:$0xff]
  %v351 = vld [vmem:[%s3 + $0x4f8] sm:$0xff]
  %v352 = vld [vmem:[%s3 + $0x500] sm:$0xff]
  %v353 = vld [vmem:[%s3 + $0x508] sm:$0xff]
  %v354 = vld [vmem:[%s3 + $0x510] sm:$0xff]
  %v355 = vld [vmem:[%s3 + $0x518] sm:$0xff]
  %v356 = vld [vmem:[%s3 + $0x520] sm:$0xff]
  %v357 = vld [vmem:[%s3 + $0x528] sm:$0xff]
  %v358 = vld [vmem:[%s3 + $0x530] sm:$0xff]
  %v359 = vld [vmem:[%s3 + $0x538] sm:$0xff]
  %v360 = vld [vmem:[%s3 + $0x540] sm:$0xff]
  %v361 = vld [vmem:[%s3 + $0x548] sm:$0xff]
  %v362 = vld [vmem:[%s3 + $0x550] sm:$0xff]
  %v363 = vld [vmem:[%s3 + $0x558] sm:$0xff]
  %v364 = vld [vmem:[%s3 + $0x560] sm:$0xff]
  %v365 = vld [vmem:[%s3 + $0x568] sm:$0xff]
  %v366 = vld [vmem:[%s3 + $0x570] sm:$0xff]
  %v367 = vld [vmem:[%s3 + $0x578] sm:$0xff]
  %v368 = vld [vmem:[%s3 + $0x580] sm:$0xff]
  %v369 = vld [vmem:[%s3 + $0x588] sm:$0xff]
  %v370 = vld [vmem:[%s3 + $0x590] sm:$0xff]
  %v371 = vld [vmem:[%s3 + $0x598] sm:$0xff]
  %v372 = vld [vmem:[%s3 + $0x5a0] sm:$0xff]
  %v373 = vld [vmem:[%s3 + $0x5a8] sm:$0xff]
  %v374 = vld [vmem:[%s3 + $0x5b0] sm:$0xff]
  %v375 = vld [vmem:[%s3 + $0x5b8] sm:$0xff]
  %v376 = vld [vmem:[%s3 + $0x5c0] sm:$0xff]
  %v377 = vld [vmem:[%s3 + $0x5c8] sm:$0xff]
  %v378 = vld [vmem:[%s3 + $0x5d0] sm:$0xff]
  %v379 = vld [vmem:[%s3 + $0x5d8] sm:$0xff]
  %v380 = vld [vmem:[%s3 + $0x5e0] sm:$0xff]
  %v381 = vld [vmem:[%s3 + $0x5e8] sm:$0xff]
  %v382 = vld [vmem:[%s3 + $0x5f0] sm:$0xff]
  %v383 = vld [vmem:[%s3 + $0x5f8] sm:$0xff]
  %v384 = vld [vmem:[%s3 + $0x600] sm:$0xff]
  %v385 = vld [vmem:[%s3 + $0x608] sm:$0xff]
  %v386 = vld [vmem:[%s3 + $0x610] sm:$0xff]
  %v387 = vld [vmem:[%s3 + $0x618] sm:$0xff]
  %v388 = vld [vmem:[%s3 + $0x620] sm:$0xff]
  %v389 = vld [vmem:[%s3 + $0x628] sm:$0xff]
  %v390 = vld [vmem:[%s3 + $0x630] sm:$0xff]
  %v391 = vld [vmem:[%s3 + $0x638] sm:$0xff]
  %v392 = vld [vmem:[%s3 + $0x640] sm:$0xff]
  %v393 = vld [vmem:[%s3 + $0x648] sm:$0xff]
  %v394 = vld [vmem:[%s3 + $0x650] sm:$0xff]
  %v395 = vld [vmem:[%s3 + $0x658] sm:$0xff]
  %v396 = vld [vmem:[%s3 + $0x660] sm:$0xff]
  %v397 = vld [vmem:[%s3 + $0x668] sm:$0xff]
  %v398 = vld [vmem:[%s3 + $0x670] sm:$0xff]
  %v399 = vld [vmem:[%s3 + $0x678] sm:$0xff]
  %v400 = vld [vmem:[%s3 + $0x680] sm:$0xff]
  %v401 = vld [vmem:[%s3 + $0x688] sm:$0xff]
  %v402 = vld [vmem:[%s3 + $0x690] sm:$0xff]
  %v403 = vld [vmem:[%s3 + $0x698] sm:$0xff]
  %v404 = vld [vmem:[%s3 + $0x6a0] sm:$0xff]
  %v405 = vld [vmem:[%s3 + $0x6a8] sm:$0xff]
  %v406 = vld [vmem:[%s3 + $0x6b0] sm:$0xff]
  %v407 = vld [vmem:[%s3 + $0x6b8] sm:$0xff]
  %v408 = vld [vmem:[%s3 + $0x6c0] sm:$0xff]
  %v409 = vld [vmem:[%s3 + $0x6c8] sm:$0xff]
  %v410 = vld [vmem:[%s3 + $0x6d0] sm:$0xff]
  %v411 = vld [vmem:[%s3 + $0x6d8] sm:$0xff]
  %v412 = vld [vmem:[%s3 + $0x6e0] sm:$0xff]
  %v413 = vld [vmem:[%s3 + $0x6e8] sm:$0xff]
  %v414 = vld [vmem:[%s3 + $0x6f0] sm:$0xff]
  %v415 = vld [vmem:[%s3 + $0x6f8] sm:$0xff]
  %v416 = vld [vmem:[%s3 + $0x700] sm:$0xff]
  %v417 = vld [vmem:[%s3 + $0x708] sm:$0xff]
  %v418 = vld [vmem:[%s3 + $0x710] sm:$0xff]
  %v419 = vld [vmem:[%s3 + $0x718] sm:$0xff]
  %v420 = vld [vmem:[%s3 + $0x720] sm:$0xff]
  %v421 = vld [vmem:[%s3 + $0x728] sm:$0xff]
  %v422 = vld [vmem:[%s3 + $0x730] sm:$0xff]
  %v423 = vld [vmem:[%s3 + $0x738] sm:$0xff]
  %v424 = vld [vmem:[%s3 + $0x740] sm:$0xff]
  %v425 = vld [vmem:[%s3 + $0x748] sm:$0xff]
  %v426 = vld [vmem:[%s3 + $0x750] sm:$0xff]
  %v427 = vld [vmem:[%s3 + $0x758] sm:$0xff]
  %v428 = vld [vmem:[%s3 + $0x760] sm:$0xff]
  %v429 = vld [vmem:[%s3 + $0x768] sm:$0xff]
  %v430 = vld [vmem:[%s3 + $0x770] sm:$0xff]
  %v431 = vld [vmem:[%s3 + $0x778] sm:$0xff]
  %v432 = vld [vmem:[%s3 + $0x780] sm:$0xff]
  %v433 = vld [vmem:[%s3 + $0x788] sm:$0xff]
  %v434 = vld [vmem:[%s3 + $0x790] sm:$0xff]
  %v435 = vld [vmem:[%s3 + $0x798] sm:$0xff]
  %v436 = vld [vmem:[%s3 + $0x7a0] sm:$0xff]
  %v437 = vld [vmem:[%s3 + $0x7a8] sm:$0xff]
  %v438 = vld [vmem:[%s3 + $0x7b0] sm:$0xff]
  %v439 = vld [vmem:[%s3 + $0x7b8] sm:$0xff]
  %v440 = vld [vmem:[%s3 + $0x7c0] sm:$0xff]
  %v441 = vld [vmem:[%s3 + $0x7c8] sm:$0xff]
  %v442 = vld [vmem:[%s3 + $0x7d0] sm:$0xff]
  %v443 = vld [vmem:[%s3 + $0x7d8] sm:$0xff]
  %v444 = vld [vmem:[%s3 + $0x7e0] sm:$0xff]
  %v445 = vld [vmem:[%s3 + $0x7e8] sm:$0xff]
  %v446 = vld [vmem:[%s3 + $0x7f0] sm:$0xff]
  %v447 = vld [vmem:[%s3 + $0x7f8] sm:$0xff]
  %v448 = vld [vmem:[%s3 + $0x800] sm:$0xff]
  %v449 = vld [vmem:[%s3 + $0x808] sm:$0xff]
  %v450 = vld [vmem:[%s3 + $0x810] sm:$0xff]
  %v451 = vld [vmem:[%s3 + $0x818] sm:$0xff]
  %v452 = vld [vmem:[%s3 + $0x820] sm:$0xff]
  %v453 = vld [vmem:[%s3 + $0x828] sm:$0xff]
  %v454 = vld [vmem:[%s3 + $0x830] sm:$0xff]
  %v455 = vld [vmem:[%s3 + $0x838] sm:$0xff]
  %v456 = vld [vmem:[%s3 + $0x840] sm:$0xff]
  %v457 = vld [vmem:[%s3 + $0x848] sm:$0xff]
  %v458 = vld [vmem:[%s3 + $0x850] sm:$0xff]
  %v459 = vld [vmem:[%s3 + $0x858] sm:$0xff]
  %v460 = vld [vmem:[%s3 + $0x860] sm:$0xff]
  %v461 = vld [vmem:[%s3 + $0x868] sm:$0xff]
  %v462 = vld [vmem:[%s3 + $0x870] sm:$0xff]
  %v463 = vld [vmem:[%s3 + $0x878] sm:$0xff]
  %v464 = vld [vmem:[%s3 + $0x880] sm:$0xff]
  %v465 = vld [vmem:[%s3 + $0x888] sm:$0xff]
  %v466 = vld [vmem:[%s3 + $0x890] sm:$0xff]
  %v467 = vld [vmem:[%s3 + $0x898] sm:$0xff]
  %v468 = vld [vmem:[%s3 + $0x8a0] sm:$0xff]
  %v469 = vld [vmem:[%s3 + $0x8a8] sm:$0xff]
  %v470 = vld [vmem:[%s3 + $0x8b0] sm:$0xff]
  %v471 = vld [vmem:[%s3 + $0x8b8] sm:$0xff]
  %v472 = vld [vmem:[%s3 + $0x8c0] sm:$0xff]
  %v473 = vld [vmem:[%s3 + $0x8c8] sm:$0xff]
  %v474 = vld [vmem:[%s3 + $0x8d0] sm:$0xff]
  %v475 = vld [vmem:[%s3 + $0x8d8] sm:$0xff]
  %v476 = vld [vmem:[%s3 + $0x8e0] sm:$0xff]
  %v477 = vld [vmem:[%s3 + $0x8e8] sm:$0xff]
  %v478 = vld [vmem:[%s3 + $0x8f0] sm:$0xff]
  %v479 = vld [vmem:[%s3 + $0x8f8] sm:$0xff]
  %v480 = vld [vmem:[%s3 + $0x900] sm:$0xff]
  %v481 = vld [vmem:[%s3 + $0x908] sm:$0xff]
  %v482 = vld [vmem:[%s3 + $0x910] sm:$0xff]
  %v483 = vld [vmem:[%s3 + $0x918] sm:$0xff]
  %v484 = vld [vmem:[%s3 + $0x920] sm:$0xff]
  %v485 = vld [vmem:[%s3 + $0x928] sm:$0xff]
  %v486 = vld [vmem:[%s3 + $0x930] sm:$0xff]
  %v487 = vld [vmem:[%s3 + $0x938] sm:$0xff]
  %v488 = vld [vmem:[%s3 + $0x940] sm:$0xff]
  %v489 = vld [vmem:[%s3 + $0x948] sm:$0xff]
  %v490 = vld [vmem:[%s3 + $0x950] sm:$0xff]
  %v491 = vld [vmem:[%s3 + $0x958] sm:$0xff]
  %v492 = vld [vmem:[%s3 + $0x960] sm:$0xff]
  %v493 = vld [vmem:[%s3 + $0x968] sm:$0xff]
  %v494 = vld [vmem:[%s3 + $0x970] sm:$0xff]
  %v495 = vld [vmem:[%s3 + $0x978] sm:$0xff]
  %v496 = vld [vmem:[%s3 + $0x980] sm:$0xff]
  %v497 = vld [vmem:[%s3 + $0x988] sm:$0xff]
  %v498 = vld [vmem:[%s3 + $0x990] sm:$0xff]
  %v499 = vld [vmem:[%s3 + $0x998] sm:$0xff]
  %v500 = vld [vmem:[%s3 + $0x9a0] sm:$0xff]
  %v501 = vld [vmem:[%s3 + $0x9a8] sm:$0xff]
  %v502 = vld [vmem:[%s3 + $0x9b0] sm:$0xff]
  %v503 = vld [vmem:[%s3 + $0x9b8] sm:$0xff]
  %v504 = vld [vmem:[%s3 + $0x9c0] sm:$0xff]
  %v505 = vld [vmem:[%s3 + $0x9c8] sm:$0xff]
  %v506 = vld [vmem:[%s3 + $0x9d0] sm:$0xff]
  %v507 = vld [vmem:[%s3 + $0x9d8] sm:$0xff]
  %v508 = vld [vmem:[%s3 + $0x9e0] sm:$0xff]
  %v509 = vld [vmem:[%s3 + $0x9e8] sm:$0xff]
  %v510 = vld [vmem:[%s3 + $0x9f0] sm:$0xff]
  %v511 = vld [vmem:[%s3 + $0x9f8] sm:$0xff]
  %v512 = vld [vmem:[%s3 + $0xa00] sm:$0xff]
  %v513 = vld [vmem:[%s3 + $0xa08] sm:$0xff]
  %v514 = vld [vmem:[%s3 + $0xa10] sm:$0xff]
  %v515 = vld [vmem:[%s3 + $0xa18] sm:$0xff]
  %v516 = vld [vmem:[%s3 + $0xa20] sm:$0xff]
  %v517 = vld [vmem:[%s3 + $0xa28] sm:$0xff]
  %v518 = vld [vmem:[%s3 + $0xa30] sm:$0xff]
  %v519 = vld [vmem:[%s3 + $0xa38] sm:$0xff]
  %v520 = vld [vmem:[%s3 + $0xa40] sm:$0xff]
  %v521 = vld [vmem:[%s3 + $0xa48] sm:$0xff]
  %v522 = vld [vmem:[%s3 + $0xa50] sm:$0xff]
  %v523 = vld [vmem:[%s3 + $0xa58] sm:$0xff]
  %v524 = vld [vmem:[%s3 + $0xa60] sm:$0xff]
  %v525 = vld [vmem:[%s3 + $0xa68] sm:$0xff]
  %v526 = vld [vmem:[%s3 + $0xa70] sm:$0xff]
  %v527 = vld [vmem:[%s3 + $0xa78] sm:$0xff]
  %v528 = vld [vmem:[%s3 + $0xa80] sm:$0xff]
  %v529 = vld [vmem:[%s3 + $0xa88] sm:$0xff]
  %v530 = vld [vmem:[%s3 + $0xa90] sm:$0xff]
  %v531 = vld [vmem:[%s3 + $0xa98] sm:$0xff]
  %v532 = vld [vmem:[%s3 + $0xaa0] sm:$0xff]
  %v533 = vld [vmem:[%s3 + $0xaa8] sm:$0xff]
  %v534 = vld [vmem:[%s3 + $0xab0] sm:$0xff]
  %v535 = vld [vmem:[%s3 + $0xab8] sm:$0xff]
  %v536 = vld [vmem:[%s3 + $0xac0] sm:$0xff]
  %v537 = vld [vmem:[%s3 + $0xac8] sm:$0xff]
  %v538 = vld [vmem:[%s3 + $0xad0] sm:$0xff]
  %v539 = vld [vmem:[%s3 + $0xad8] sm:$0xff]
  %v540 = vld [vmem:[%s3 + $0xae0] sm:$0xff]
  %v541 = vld [vmem:[%s3 + $0xae8] sm:$0xff]
  %v542 = vld [vmem:[%s3 + $0xaf0] sm:$0xff]
  %v543 = vld [vmem:[%s3 + $0xaf8] sm:$0xff]
  %v544 = vld [vmem:[%s3 + $0xb00] sm:$0xff]
  %v545 = vld [vmem:[%s3 + $0xb08] sm:$0xff]
  %v546 = vld [vmem:[%s3 + $0xb10] sm:$0xff]
  %v547 = vld [vmem:[%s3 + $0xb18] sm:$0xff]
  %v548 = vld [vmem:[%s3 + $0xb20] sm:$0xff]
  %v549 = vld [vmem:[%s3 + $0xb28] sm:$0xff]
  %v550 = vld [vmem:[%s3 + $0xb30] sm:$0xff]
  %v551 = vld [vmem:[%s3 + $0xb38] sm:$0xff]
  %v552 = vld [vmem:[%s3 + $0xb40] sm:$0xff]
  %v553 = vld [vmem:[%s3 + $0xb48] sm:$0xff]
  %v554 = vld [vmem:[%s3 + $0xb50] sm:$0xff]
  %v555 = vld [vmem:[%s3 + $0xb58] sm:$0xff]
  %v556 = vld [vmem:[%s3 + $0xb60] sm:$0xff]
  %v557 = vld [vmem:[%s3 + $0xb68] sm:$0xff]
  %v558 = vld [vmem:[%s3 + $0xb70] sm:$0xff]
  %v559 = vld [vmem:[%s3 + $0xb78] sm:$0xff]
  %v560 = vld [vmem:[%s3 + $0xb80] sm:$0xff]
  %v561 = vld [vmem:[%s3 + $0xb88] sm:$0xff]
  %v562 = vld [vmem:[%s3 + $0xb90] sm:$0xff]
  %v563 = vld [vmem:[%s3 + $0xb98] sm:$0xff]
  %v564 = vld [vmem:[%s3 + $0xba0] sm:$0xff]
  %v565 = vld [vmem:[%s3 + $0xba8] sm:$0xff]
  %v566 = vld [vmem:[%s3 + $0xbb0] sm:$0xff]
  %v567 = vld [vmem:[%s3 + $0xbb8] sm:$0xff]
  %v568 = vld [vmem:[%s3 + $0xbc0] sm:$0xff]
  %v569 = vld [vmem:[%s3 + $0xbc8] sm:$0xff]
  %v570 = vld [vmem:[%s3 + $0xbd0] sm:$0xff]
  %v571 = vld [vmem:[%s3 + $0xbd8] sm:$0xff]
  %v572 = vld [vmem:[%s3 + $0xbe0] sm:$0xff]
  %v573 = vld [vmem:[%s3 + $0xbe8] sm:$0xff]
  %v574 = vld [vmem:[%s3 + $0xbf0] sm:$0xff]
  %v575 = vld [vmem:[%s3 + $0xbf8] sm:$0xff]
  %v576 = vld [vmem:[%s3 + $0xc00] sm:$0xff]
  %v577 = vld [vmem:[%s3 + $0xc08] sm:$0xff]
  %v578 = vld [vmem:[%s3 + $0xc10] sm:$0xff]
  %v579 = vld [vmem:[%s3 + $0xc18] sm:$0xff]
  %v580 = vld [vmem:[%s3 + $0xc20] sm:$0xff]
  %v581 = vld [vmem:[%s3 + $0xc28] sm:$0xff]
  %v582 = vld [vmem:[%s3 + $0xc30] sm:$0xff]
  %v583 = vld [vmem:[%s3 + $0xc38] sm:$0xff]
  %v584 = vld [vmem:[%s3 + $0xc40] sm:$0xff]
  %v585 = vld [vmem:[%s3 + $0xc48] sm:$0xff]
  %v586 = vld [vmem:[%s3 + $0xc50] sm:$0xff]
  %v587 = vld [vmem:[%s3 + $0xc58] sm:$0xff]
  %v588 = vld [vmem:[%s3 + $0xc60] sm:$0xff]
  %v589 = vld [vmem:[%s3 + $0xc68] sm:$0xff]
  %v590 = vld [vmem:[%s3 + $0xc70] sm:$0xff]
  %v591 = vld [vmem:[%s3 + $0xc78] sm:$0xff]
  %v592 = vld [vmem:[%s3 + $0xc80] sm:$0xff]
  %v593 = vld [vmem:[%s3 + $0xc88] sm:$0xff]
  %v594 = vld [vmem:[%s3 + $0xc90] sm:$0xff]
  %v595 = vld [vmem:[%s3 + $0xc98] sm:$0xff]
  %v596 = vld [vmem:[%s3 + $0xca0] sm:$0xff]
  %v597 = vld [vmem:[%s3 + $0xca8] sm:$0xff]
  %v598 = vld [vmem:[%s3 + $0xcb0] sm:$0xff]
  %v599 = vld [vmem:[%s3 + $0xcb8] sm:$0xff]
  %v600 = vld [vmem:[%s3 + $0xcc0] sm:$0xff]
  %v601 = vld [vmem:[%s3 + $0xcc8] sm:$0xff]
  %v602 = vld [vmem:[%s3 + $0xcd0] sm:$0xff]
  %v603 = vld [vmem:[%s3 + $0xcd8] sm:$0xff]
  %v604 = vld [vmem:[%s3 + $0xce0] sm:$0xff]
  %v605 = vld [vmem:[%s3 + $0xce8] sm:$0xff]
  %v606 = vld [vmem:[%s3 + $0xcf0] sm:$0xff]
  %v607 = vld [vmem:[%s3 + $0xcf8] sm:$0xff]
  %v608 = vld [vmem:[%s3 + $0xd00] sm:$0xff]
  %v609 = vld [vmem:[%s3 + $0xd08] sm:$0xff]
  %v610 = vld [vmem:[%s3 + $0xd10] sm:$0xff]
  %v611 = vld [vmem:[%s3 + $0xd18] sm:$0xff]
  %v612 = vld [vmem:[%s3 + $0xd20] sm:$0xff]
  %v613 = vld [vmem:[%s3 + $0xd28] sm:$0xff]
  %v614 = vld [vmem:[%s3 + $0xd30] sm:$0xff]
  %v615 = vld [vmem:[%s3 + $0xd38] sm:$0xff]
  %v616 = vld [vmem:[%s3 + $0xd40] sm:$0xff]
  %v617 = vld [vmem:[%s3 + $0xd48] sm:$0xff]
  %v618 = vld [vmem:[%s3 + $0xd50] sm:$0xff]
  %v619 = vld [vmem:[%s3 + $0xd58] sm:$0xff]
  %v620 = vld [vmem:[%s3 + $0xd60] sm:$0xff]
  %v621 = vld [vmem:[%s3 + $0xd68] sm:$0xff]
  %v622 = vld [vmem:[%s3 + $0xd70] sm:$0xff]
  %v623 = vld [vmem:[%s3 + $0xd78] sm:$0xff]
  %v624 = vld [vmem:[%s3 + $0xd80] sm:$0xff]
  %v625 = vld [vmem:[%s3 + $0xd88] sm:$0xff]
  %v626 = vld [vmem:[%s3 + $0xd90] sm:$0xff]
  %v627 = vld [vmem:[%s3 + $0xd98] sm:$0xff]
  %v628 = vld [vmem:[%s3 + $0xda0] sm:$0xff]
  %v629 = vld [vmem:[%s3 + $0xda8] sm:$0xff]
  %v630 = vld [vmem:[%s3 + $0xdb0] sm:$0xff]
  %v631 = vld [vmem:[%s3 + $0xdb8] sm:$0xff]
  %v632 = vld [vmem:[%s3 + $0xdc0] sm:$0xff]
  %v633 = vld [vmem:[%s3 + $0xdc8] sm:$0xff]
  %v634 = vld [vmem:[%s3 + $0xdd0] sm:$0xff]
  %v635 = vld [vmem:[%s3 + $0xdd8] sm:$0xff]
  %v636 = vld [vmem:[%s3 + $0xde0] sm:$0xff]
  %v637 = vld [vmem:[%s3 + $0xde8] sm:$0xff]
  %v638 = vld [vmem:[%s3 + $0xdf0] sm:$0xff]
  %v639 = vld [vmem:[%s3 + $0xdf8] sm:$0xff]
  %v640 = vld [vmem:[%s3 + $0xe00] sm:$0xff]
  %v641 = vld [vmem:[%s3 + $0xe08] sm:$0xff]
  %v642 = vld [vmem:[%s3 + $0xe10] sm:$0xff]
  %v643 = vld [vmem:[%s3 + $0xe18] sm:$0xff]
  %v644 = vld [vmem:[%s3 + $0xe20] sm:$0xff]
  %v645 = vld [vmem:[%s3 + $0xe28] sm:$0xff]
  %v646 = vld [vmem:[%s3 + $0xe30] sm:$0xff]
  %v647 = vld [vmem:[%s3 + $0xe38] sm:$0xff]
  %v648 = vld [vmem:[%s3 + $0xe40] sm:$0xff]
  %v649 = vld [vmem:[%s3 + $0xe48] sm:$0xff]
  %v650 = vld [vmem:[%s3 + $0xe50] sm:$0xff]
  %v651 = vld [vmem:[%s3 + $0xe58] sm:$0xff]
  %v652 = vld [vmem:[%s3 + $0xe60] sm:$0xff]
  %v653 = vld [vmem:[%s3 + $0xe68] sm:$0xff]
  %v654 = vld [vmem:[%s3 + $0xe70] sm:$0xff]
  %v655 = vld [vmem:[%s3 + $0xe78] sm:$0xff]
  %v656 = vld [vmem:[%s3 + $0xe80] sm:$0xff]
  %v657 = vld [vmem:[%s3 + $0xe88] sm:$0xff]
  %v658 = vld [vmem:[%s3 + $0xe90] sm:$0xff]
  %v659 = vld [vmem:[%s3 + $0xe98] sm:$0xff]
  %v660 = vld [vmem:[%s3 + $0xea0] sm:$0xff]
  %v661 = vld [vmem:[%s3 + $0xea8] sm:$0xff]
  %v662 = vld [vmem:[%s3 + $0xeb0] sm:$0xff]
  %v663 = vld [vmem:[%s3 + $0xeb8] sm:$0xff]
  %v664 = vld [vmem:[%s3 + $0xec0] sm:$0xff]
  %v665 = vld [vmem:[%s3 + $0xec8] sm:$0xff]
  %v666 = vld [vmem:[%s3 + $0xed0] sm:$0xff]
  %v667 = vld [vmem:[%s3 + $0xed8] sm:$0xff]
  %v668 = vld [vmem:[%s3 + $0xee0] sm:$0xff]
  %v669 = vld [vmem:[%s3 + $0xee8] sm:$0xff]
  %v670 = vld [vmem:[%s3 + $0xef0] sm:$0xff]
  %v671 = vld [vmem:[%s3 + $0xef8] sm:$0xff]
  %v672 = vld [vmem:[%s3 + $0xf00] sm:$0xff]
  %v673 = vld [vmem:[%s3 + $0xf08] sm:$0xff]
  %v674 = vld [vmem:[%s3 + $0xf10] sm:$0xff]
  %v675 = vld [vmem:[%s3 + $0xf18] sm:$0xff]
  %v676 = vld [vmem:[%s3 + $0xf20] sm:$0xff]
  %v677 = vld [vmem:[%s3 + $0xf28] sm:$0xff]
  %v678 = vld [vmem:[%s3 + $0xf30] sm:$0xff]
  %v679 = vld [vmem:[%s3 + $0xf38] sm:$0xff]
  %v680 = vld [vmem:[%s3 + $0xf40] sm:$0xff]
  %v681 = vld [vmem:[%s3 + $0xf48] sm:$0xff]
  %v682 = vld [vmem:[%s3 + $0xf50] sm:$0xff]
  %v683 = vld [vmem:[%s3 + $0xf58] sm:$0xff]
  %v684 = vld [vmem:[%s3 + $0xf60] sm:$0xff]
  %v685 = vld [vmem:[%s3 + $0xf68] sm:$0xff]
  %v686 = vld [vmem:[%s3 + $0xf70] sm:$0xff]
  %v687 = vld [vmem:[%s3 + $0xf78] sm:$0xff]
  %v688 = vld [vmem:[%s3 + $0xf80] sm:$0xff]
  %v689 = vld [vmem:[%s3 + $0xf88] sm:$0xff]
  %v690 = vld [vmem:[%s3 + $0xf90] sm:$0xff]
  %v691 = vld [vmem:[%s3 + $0xf98] sm:$0xff]
  %v692 = vld [vmem:[%s3 + $0xfa0] sm:$0xff]
  %v693 = vld [vmem:[%s3 + $0xfa8] sm:$0xff]
  %v694 = vld [vmem:[%s3 + $0xfb0] sm:$0xff]
  %v695 = vld [vmem:[%s3 + $0xfb8] sm:$0xff]
  %v696 = vld [vmem:[%s3 + $0xfc0] sm:$0xff]
  %v697 = vld [vmem:[%s3 + $0xfc8] sm:$0xff]
  %v698 = vld [vmem:[%s3 + $0xfd0] sm:$0xff]
  %v699 = vld [vmem:[%s3 + $0xfd8] sm:$0xff]
  %v700 = vld [vmem:[%s3 + $0xfe0] sm:$0xff]
  %v701 = vld [vmem:[%s3 + $0xfe8] sm:$0xff]
  %v702 = vld [vmem:[%s3 + $0xff0] sm:$0xff]
  %v703 = vld [vmem:[%s3 + $0xff8] sm:$0xff]
  %v704 = vld [vmem:[%s3 + $0x1000] sm:$0xff]
  %v705 = vld [vmem:[%s3 + $0x1008] sm:$0xff]
  %v706 = vld [vmem:[%s3 + $0x1010] sm:$0xff]
  %v707 = vld [vmem:[%s3 + $0x1018] sm:$0xff]
  %v708 = vld [vmem:[%s3 + $0x1020] sm:$0xff]
  %v709 = vld [vmem:[%s3 + $0x1028] sm:$0xff]
  %v710 = vld [vmem:[%s3 + $0x1030] sm:$0xff]
  %v711 = vld [vmem:[%s3 + $0x1038] sm:$0xff]
  %v712 = vld [vmem:[%s3 + $0x1040] sm:$0xff]
  %v713 = vld [vmem:[%s3 + $0x1048] sm:$0xff]
  %v714 = vld [vmem:[%s3 + $0x1050] sm:$0xff]
  %v715 = vld [vmem:[%s3 + $0x1058] sm:$0xff]
  %v716 = vld [vmem:[%s3 + $0x1060] sm:$0xff]
  %v717 = vld [vmem:[%s3 + $0x1068] sm:$0xff]
  %v718 = vld [vmem:[%s3 + $0x1070] sm:$0xff]
  %v719 = vld [vmem:[%s3 + $0x1078] sm:$0xff]
  %v720 = vld [vmem:[%s3 + $0x1080] sm:$0xff]
  %v721 = vld [vmem:[%s3 + $0x1088] sm:$0xff]
  %v722 = vld [vmem:[%s3 + $0x1090] sm:$0xff]
  %v723 = vld [vmem:[%s3 + $0x1098] sm:$0xff]
  %v724 = vld [vmem:[%s3 + $0x10a0] sm:$0xff]
  %v725 = vld [vmem:[%s3 + $0x10a8] sm:$0xff]
  %v726 = vld [vmem:[%s3 + $0x10b0] sm:$0xff]
  %v727 = vld [vmem:[%s3 + $0x10b8] sm:$0xff]
  %v728 = vld [vmem:[%s3 + $0x10c0] sm:$0xff]
  %v729 = vld [vmem:[%s3 + $0x10c8] sm:$0xff]
  %v730 = vld [vmem:[%s3 + $0x10d0] sm:$0xff]
  %v731 = vld [vmem:[%s3 + $0x10d8] sm:$0xff]
  %v732 = vld [vmem:[%s3 + $0x10e0] sm:$0xff]
  %v733 = vld [vmem:[%s3 + $0x10e8] sm:$0xff]
  %v734 = vld [vmem:[%s3 + $0x10f0] sm:$0xff]
  %v735 = vld [vmem:[%s3 + $0x10f8] sm:$0xff]
  %v736 = vld [vmem:[%s3 + $0x1100] sm:$0xff]
  %v737 = vld [vmem:[%s3 + $0x1108] sm:$0xff]
  %v738 = vld [vmem:[%s3 + $0x1110] sm:$0xff]
  %v739 = vld [vmem:[%s3 + $0x1118] sm:$0xff]
  %v740 = vld [vmem:[%s3 + $0x1120] sm:$0xff]
  %v741 = vld [vmem:[%s3 + $0x1128] sm:$0xff]
  %v742 = vld [vmem:[%s3 + $0x1130] sm:$0xff]
  %v743 = vld [vmem:[%s3 + $0x1138] sm:$0xff]
  %v744 = vld [vmem:[%s3 + $0x1140] sm:$0xff]
  %v745 = vld [vmem:[%s3 + $0x1148] sm:$0xff]
  %v746 = vld [vmem:[%s3 + $0x1150] sm:$0xff]
  %v747 = vld [vmem:[%s3 + $0x1158] sm:$0xff]
  %v748 = vld [vmem:[%s3 + $0x1160] sm:$0xff]
  %v749 = vld [vmem:[%s3 + $0x1168] sm:$0xff]
  %v750 = vld [vmem:[%s3 + $0x1170] sm:$0xff]
  %v751 = vld [vmem:[%s3 + $0x1178] sm:$0xff]
  %v752 = vld [vmem:[%s3 + $0x1180] sm:$0xff]
  %v753 = vld [vmem:[%s3 + $0x1188] sm:$0xff]
  %v754 = vld [vmem:[%s3 + $0x1190] sm:$0xff]
  %v755 = vld [vmem:[%s3 + $0x1198] sm:$0xff]
  %v756 = vld [vmem:[%s3 + $0x11a0] sm:$0xff]
  %v757 = vld [vmem:[%s3 + $0x11a8] sm:$0xff]
  %v758 = vld [vmem:[%s3 + $0x11b0] sm:$0xff]
  %v759 = vld [vmem:[%s3 + $0x11b8] sm:$0xff]
  %v760 = vld [vmem:[%s3 + $0x11c0] sm:$0xff]
  %v761 = vld [vmem:[%s3 + $0x11c8] sm:$0xff]
  %v762 = vld [vmem:[%s3 + $0x11d0] sm:$0xff]
  %v763 = vld [vmem:[%s3 + $0x11d8] sm:$0xff]
  %v764 = vld [vmem:[%s3 + $0x11e0] sm:$0xff]
  %v765 = vld [vmem:[%s3 + $0x11e8] sm:$0xff]
  %v766 = vld [vmem:[%s3 + $0x11f0] sm:$0xff]
  %v767 = vld [vmem:[%s3 + $0x11f8] sm:$0xff]
  %v768 = vld [vmem:[%s3 + $0x1200] sm:$0xff]
  %v769 = vld [vmem:[%s3 + $0x1208] sm:$0xff]
  %v770 = vld [vmem:[%s3 + $0x1210] sm:$0xff]
  %v771 = vld [vmem:[%s3 + $0x1218] sm:$0xff]
  %v772 = vld [vmem:[%s3 + $0x1220] sm:$0xff]
  %v773 = vld [vmem:[%s3 + $0x1228] sm:$0xff]
  %v774 = vld [vmem:[%s3 + $0x1230] sm:$0xff]
  %v775 = vld [vmem:[%s3 + $0x1238] sm:$0xff]
  %v776 = vld [vmem:[%s3 + $0x1240] sm:$0xff]
  %v777 = vld [vmem:[%s3 + $0x1248] sm:$0xff]
  %v778 = vld [vmem:[%s3 + $0x1250] sm:$0xff]
  %v779 = vld [vmem:[%s3 + $0x1258] sm:$0xff]
  %v780 = vld [vmem:[%s3 + $0x1260] sm:$0xff]
  %v781 = vld [vmem:[%s3 + $0x1268] sm:$0xff]
  %v782 = vld [vmem:[%s3 + $0x1270] sm:$0xff]
  %v783 = vld [vmem:[%s3 + $0x1278] sm:$0xff]
  %v784 = vld [vmem:[%s3 + $0x1280] sm:$0xff]
  %v785 = vld [vmem:[%s3 + $0x1288] sm:$0xff]
  %v786 = vld [vmem:[%s3 + $0x1290] sm:$0xff]
  %v787 = vld [vmem:[%s3 + $0x1298] sm:$0xff]
  %v788 = vld [vmem:[%s3 + $0x12a0] sm:$0xff]
  %v789 = vld [vmem:[%s3 + $0x12a8] sm:$0xff]
  %v790 = vld [vmem:[%s3 + $0x12b0] sm:$0xff]
  %v791 = vld [vmem:[%s3 + $0x12b8] sm:$0xff]
  %v792 = vld [vmem:[%s3 + $0x12c0] sm:$0xff]
  %v793 = vld [vmem:[%s3 + $0x12c8] sm:$0xff]
  %v794 = vld [vmem:[%s3 + $0x12d0] sm:$0xff]
  %v795 = vld [vmem:[%s3 + $0x12d8] sm:$0xff]
  %v796 = vld [vmem:[%s3 + $0x12e0] sm:$0xff]
  %v797 = vld [vmem:[%s3 + $0x12e8] sm:$0xff]
  %v798 = vld [vmem:[%s3 + $0x12f0] sm:$0xff]
  %v799 = vld [vmem:[%s3 + $0x12f8] sm:$0xff]
  %v800 = vld [vmem:[%s3 + $0x1300] sm:$0xff]
  %v801 = vld [vmem:[%s3 + $0x1308] sm:$0xff]
  %v802 = vld [vmem:[%s3 + $0x1310] sm:$0xff]
  %v803 = vld [vmem:[%s3 + $0x1318] sm:$0xff]
  %v804 = vld [vmem:[%s3 + $0x1320] sm:$0xff]
  %v805 = vld [vmem:[%s3 + $0x1328] sm:$0xff]
  %v806 = vld [vmem:[%s3 + $0x1330] sm:$0xff]
  %v807 = vld [vmem:[%s3 + $0x1338] sm:$0xff]
  %v808 = vld [vmem:[%s3 + $0x1340] sm:$0xff]
  %v809 = vld [vmem:[%s3 + $0x1348] sm:$0xff]
  %v810 = vld [vmem:[%s3 + $0x1350] sm:$0xff]
  %v811 = vld [vmem:[%s3 + $0x1358] sm:$0xff]
  %v812 = vld [vmem:[%s3 + $0x1360] sm:$0xff]
  %v813 = vld [vmem:[%s3 + $0x1368] sm:$0xff]
  %v814 = vld [vmem:[%s3 + $0x1370] sm:$0xff]
  %v815 = vld [vmem:[%s3 + $0x1378] sm:$0xff]
  %v816 = vld [vmem:[%s3 + $0x1380] sm:$0xff]
  %v817 = vld [vmem:[%s3 + $0x1388] sm:$0xff]
  %v818 = vld [vmem:[%s3 + $0x1390] sm:$0xff]
  %v819 = vld [vmem:[%s3 + $0x1398] sm:$0xff]
  %v820 = vld [vmem:[%s3 + $0x13a0] sm:$0xff]
  %v821 = vld [vmem:[%s3 + $0x13a8] sm:$0xff]
  %v822 = vld [vmem:[%s3 + $0x13b0] sm:$0xff]
  %v823 = vld [vmem:[%s3 + $0x13b8] sm:$0xff]
  %v824 = vld [vmem:[%s3 + $0x13c0] sm:$0xff]
  %v825 = vld [vmem:[%s3 + $0x13c8] sm:$0xff]
  %v826 = vld [vmem:[%s3 + $0x13d0] sm:$0xff]
  %v827 = vld [vmem:[%s3 + $0x13d8] sm:$0xff]
  %v828 = vld [vmem:[%s3 + $0x13e0] sm:$0xff]
  %v829 = vld [vmem:[%s3 + $0x13e8] sm:$0xff]
  %v830 = vld [vmem:[%s3 + $0x13f0] sm:$0xff]
  %v831 = vld [vmem:[%s3 + $0x13f8] sm:$0xff]
  %v832 = vld [vmem:[%s3 + $0x1400] sm:$0xff]
  %v833 = vld [vmem:[%s3 + $0x1408] sm:$0xff]
  %v834 = vld [vmem:[%s3 + $0x1410] sm:$0xff]
  %v835 = vld [vmem:[%s3 + $0x1418] sm:$0xff]
  %v836 = vld [vmem:[%s3 + $0x1420] sm:$0xff]
  %v837 = vld [vmem:[%s3 + $0x1428] sm:$0xff]
  %v838 = vld [vmem:[%s3 + $0x1430] sm:$0xff]
  %v839 = vld [vmem:[%s3 + $0x1438] sm:$0xff]
  %v840 = vld [vmem:[%s3 + $0x1440] sm:$0xff]
  %v841 = vld [vmem:[%s3 + $0x1448] sm:$0xff]
  %v842 = vld [vmem:[%s3 + $0x1450] sm:$0xff]
  %v843 = vld [vmem:[%s3 + $0x1458] sm:$0xff]
  %v844 = vld [vmem:[%s3 + $0x1460] sm:$0xff]
  %v845 = vld [vmem:[%s3 + $0x1468] sm:$0xff]
  %v846 = vld [vmem:[%s3 + $0x1470] sm:$0xff]
  %v847 = vld [vmem:[%s3 + $0x1478] sm:$0xff]
  %v848 = vld [vmem:[%s3 + $0x1480] sm:$0xff]
  %v849 = vld [vmem:[%s3 + $0x1488] sm:$0xff]
  %v850 = vld [vmem:[%s3 + $0x1490] sm:$0xff]
  %v851 = vld [vmem:[%s3 + $0x1498] sm:$0xff]
  %v852 = vld [vmem:[%s3 + $0x14a0] sm:$0xff]
  %v853 = vld [vmem:[%s3 + $0x14a8] sm:$0xff]
  %v854 = vld [vmem:[%s3 + $0x14b0] sm:$0xff]
  %v855 = vld [vmem:[%s3 + $0x14b8] sm:$0xff]
  %v856 = vld [vmem:[%s3 + $0x14c0] sm:$0xff]
  %v857 = vld [vmem:[%s3 + $0x14c8] sm:$0xff]
  %v858 = vld [vmem:[%s3 + $0x14d0] sm:$0xff]
  %v859 = vld [vmem:[%s3 + $0x14d8] sm:$0xff]
  %v860 = vld [vmem:[%s3 + $0x14e0] sm:$0xff]
  %v861 = vld [vmem:[%s3 + $0x14e8] sm:$0xff]
  %v862 = vld [vmem:[%s3 + $0x14f0] sm:$0xff]
  %v863 = vld [vmem:[%s3 + $0x14f8] sm:$0xff]
  %v864 = vld [vmem:[%s3 + $0x1500] sm:$0xff]
  %v865 = vld [vmem:[%s3 + $0x1508] sm:$0xff]
  %v866 = vld [vmem:[%s3 + $0x1510] sm:$0xff]
  %v867 = vld [vmem:[%s3 + $0x1518] sm:$0xff]
  %v868 = vld [vmem:[%s3 + $0x1520] sm:$0xff]
  %v869 = vld [vmem:[%s3 + $0x1528] sm:$0xff]
  %v870 = vld [vmem:[%s3 + $0x1530] sm:$0xff]
  %v871 = vld [vmem:[%s3 + $0x1538] sm:$0xff]
  %v872 = vld [vmem:[%s3 + $0x1540] sm:$0xff]
  %v873 = vld [vmem:[%s3 + $0x1548] sm:$0xff]
  %v874 = vld [vmem:[%s3 + $0x1550] sm:$0xff]
  %v875 = vld [vmem:[%s3 + $0x1558] sm:$0xff]
  %v876 = vld [vmem:[%s3 + $0x1560] sm:$0xff]
  %v877 = vld [vmem:[%s3 + $0x1568] sm:$0xff]
  %v878 = vld [vmem:[%s3 + $0x1570] sm:$0xff]
  %v879 = vld [vmem:[%s3 + $0x1578] sm:$0xff]
  %v880 = vld [vmem:[%s3 + $0x1580] sm:$0xff]
  %v881 = vld [vmem:[%s3 + $0x1588] sm:$0xff]
  %v882 = vld [vmem:[%s3 + $0x1590] sm:$0xff]
  %v883 = vld [vmem:[%s3 + $0x1598] sm:$0xff]
  %v884 = vld [vmem:[%s3 + $0x15a0] sm:$0xff]
  %v885 = vld [vmem:[%s3 + $0x15a8] sm:$0xff]
  %v886 = vld [vmem:[%s3 + $0x15b0] sm:$0xff]
  %v887 = vld [vmem:[%s3 + $0x15b8] sm:$0xff]
  %v888 = vld [vmem:[%s3 + $0x15c0] sm:$0xff]
  %v889 = vld [vmem:[%s3 + $0x15c8] sm:$0xff]
  %v890 = vld [vmem:[%s3 + $0x15d0] sm:$0xff]
  %v891 = vld [vmem:[%s3 + $0x15d8] sm:$0xff]
  %v892 = vld [vmem:[%s3 + $0x15e0] sm:$0xff]
  %v893 = vld [vmem:[%s3 + $0x15e8] sm:$0xff]
  %v894 = vld [vmem:[%s3 + $0x15f0] sm:$0xff]
  %v895 = vld [vmem:[%s3 + $0x15f8] sm:$0xff]
  %v896 = vld [vmem:[%s3 + $0x1600] sm:$0xff]
  %v897 = vld [vmem:[%s3 + $0x1608] sm:$0xff]
  %v898 = vld [vmem:[%s3 + $0x1610] sm:$0xff]
  %v899 = vld [vmem:[%s3 + $0x1618] sm:$0xff]
  %v900 = vld [vmem:[%s3 + $0x1620] sm:$0xff]
  %v901 = vld [vmem:[%s3 + $0x1628] sm:$0xff]
  %v902 = vld [vmem:[%s3 + $0x1630] sm:$0xff]
  %v903 = vld [vmem:[%s3 + $0x1638] sm:$0xff]
  %v904 = vld [vmem:[%s3 + $0x1640] sm:$0xff]
  %v905 = vld [vmem:[%s3 + $0x1648] sm:$0xff]
  %v906 = vld [vmem:[%s3 + $0x1650] sm:$0xff]
  %v907 = vld [vmem:[%s3 + $0x1658] sm:$0xff]
  %v908 = vld [vmem:[%s3 + $0x1660] sm:$0xff]
  %v909 = vld [vmem:[%s3 + $0x1668] sm:$0xff]
  %v910 = vld [vmem:[%s3 + $0x1670] sm:$0xff]
  %v911 = vld [vmem:[%s3 + $0x1678] sm:$0xff]
  %v912 = vld [vmem:[%s3 + $0x1680] sm:$0xff]
  %v913 = vld [vmem:[%s3 + $0x1688] sm:$0xff]
  %v914 = vld [vmem:[%s3 + $0x1690] sm:$0xff]
  %v915 = vld [vmem:[%s3 + $0x1698] sm:$0xff]
  %v916 = vld [vmem:[%s3 + $0x16a0] sm:$0xff]
  %v917 = vld [vmem:[%s3 + $0x16a8] sm:$0xff]
  %v918 = vld [vmem:[%s3 + $0x16b0] sm:$0xff]
  %v919 = vld [vmem:[%s3 + $0x16b8] sm:$0xff]
  %v920 = vld [vmem:[%s3 + $0x16c0] sm:$0xff]
  %v921 = vld [vmem:[%s3 + $0x16c8] sm:$0xff]
  %v922 = vld [vmem:[%s3 + $0x16d0] sm:$0xff]
  %v923 = vld [vmem:[%s3 + $0x16d8] sm:$0xff]
  %v924 = vld [vmem:[%s3 + $0x16e0] sm:$0xff]
  %v925 = vld [vmem:[%s3 + $0x16e8] sm:$0xff]
  %v926 = vld [vmem:[%s3 + $0x16f0] sm:$0xff]
  %v927 = vld [vmem:[%s3 + $0x16f8] sm:$0xff]
  %v928 = vld [vmem:[%s3 + $0x1700] sm:$0xff]
  %v929 = vld [vmem:[%s3 + $0x1708] sm:$0xff]
  %v930 = vld [vmem:[%s3 + $0x1710] sm:$0xff]
  %v931 = vld [vmem:[%s3 + $0x1718] sm:$0xff]
  %v932 = vld [vmem:[%s3 + $0x1720] sm:$0xff]
  %v933 = vld [vmem:[%s3 + $0x1728] sm:$0xff]
  %v934 = vld [vmem:[%s3 + $0x1730] sm:$0xff]
  %v935 = vld [vmem:[%s3 + $0x1738] sm:$0xff]
  %v936 = vld [vmem:[%s3 + $0x1740] sm:$0xff]
  %v937 = vld [vmem:[%s3 + $0x1748] sm:$0xff]
  %v938 = vld [vmem:[%s3 + $0x1750] sm:$0xff]
  %v939 = vld [vmem:[%s3 + $0x1758] sm:$0xff]
  %v940 = vld [vmem:[%s3 + $0x1760] sm:$0xff]
  %v941 = vld [vmem:[%s3 + $0x1768] sm:$0xff]
  %v942 = vld [vmem:[%s3 + $0x1770] sm:$0xff]
  %v943 = vld [vmem:[%s3 + $0x1778] sm:$0xff]
  %v944 = vld [vmem:[%s3 + $0x1780] sm:$0xff]
  %v945 = vld [vmem:[%s3 + $0x1788] sm:$0xff]
  %v946 = vld [vmem:[%s3 + $0x1790] sm:$0xff]
  %v947 = vld [vmem:[%s3 + $0x1798] sm:$0xff]
  %v948 = vld [vmem:[%s3 + $0x17a0] sm:$0xff]
  %v949 = vld [vmem:[%s3 + $0x17a8] sm:$0xff]
  %v950 = vld [vmem:[%s3 + $0x17b0] sm:$0xff]
  %v951 = vld [vmem:[%s3 + $0x17b8] sm:$0xff]
  %v952 = vld [vmem:[%s3 + $0x17c0] sm:$0xff]
  %v953 = vld [vmem:[%s3 + $0x17c8] sm:$0xff]
  %v954 = vld [vmem:[%s3 + $0x17d0] sm:$0xff]
  %v955 = vld [vmem:[%s3 + $0x17d8] sm:$0xff]
  %v956 = vld [vmem:[%s3 + $0x17e0] sm:$0xff]
  %v957 = vld [vmem:[%s3 + $0x17e8] sm:$0xff]
  %v958 = vld [vmem:[%s3 + $0x17f0] sm:$0xff]
  %v959 = vld [vmem:[%s3 + $0x17f8] sm:$0xff]
  %v960 = vld [vmem:[%s3 + $0x1800] sm:$0xff]
  %v961 = vld [vmem:[%s3 + $0x1808] sm:$0xff]
  %v962 = vld [vmem:[%s3 + $0x1810] sm:$0xff]
  %v963 = vld [vmem:[%s3 + $0x1818] sm:$0xff]
  %v964 = vld [vmem:[%s3 + $0x1820] sm:$0xff]
  %v965 = vld [vmem:[%s3 + $0x1828] sm:$0xff]
  %v966 = vld [vmem:[%s3 + $0x1830] sm:$0xff]
  %v967 = vld [vmem:[%s3 + $0x1838] sm:$0xff]
  %v968 = vld [vmem:[%s3 + $0x1840] sm:$0xff]
  %v969 = vld [vmem:[%s3 + $0x1848] sm:$0xff]
  %v970 = vld [vmem:[%s3 + $0x1850] sm:$0xff]
  %v971 = vld [vmem:[%s3 + $0x1858] sm:$0xff]
  %v972 = vld [vmem:[%s3 + $0x1860] sm:$0xff]
  %v973 = vld [vmem:[%s3 + $0x1868] sm:$0xff]
  %v974 = vld [vmem:[%s3 + $0x1870] sm:$0xff]
  %v975 = vld [vmem:[%s3 + $0x1878] sm:$0xff]
  %v976 = vld [vmem:[%s3 + $0x1880] sm:$0xff]
  %v977 = vld [vmem:[%s3 + $0x1888] sm:$0xff]
  %v978 = vld [vmem:[%s3 + $0x1890] sm:$0xff]
  %v979 = vld [vmem:[%s3 + $0x1898] sm:$0xff]
  %v980 = vld [vmem:[%s3 + $0x18a0] sm:$0xff]
  %v981 = vld [vmem:[%s3 + $0x18a8] sm:$0xff]
  %v982 = vld [vmem:[%s3 + $0x18b0] sm:$0xff]
  %v983 = vld [vmem:[%s3 + $0x18b8] sm:$0xff]
  %v984 = vld [vmem:[%s3 + $0x18c0] sm:$0xff]
  %v985 = vld [vmem:[%s3 + $0x18c8] sm:$0xff]
  %v986 = vld [vmem:[%s3 + $0x18d0] sm:$0xff]
  %v987 = vld [vmem:[%s3 + $0x18d8] sm:$0xff]
  %v988 = vld [vmem:[%s3 + $0x18e0] sm:$0xff]
  %v989 = vld [vmem:[%s3 + $0x18e8] sm:$0xff]
  %v990 = vld [vmem:[%s3 + $0x18f0] sm:$0xff]
  %v991 = vld [vmem:[%s3 + $0x18f8] sm:$0xff]
  %v992 = vld [vmem:[%s3 + $0x1900] sm:$0xff]
  %v993 = vld [vmem:[%s3 + $0x1908] sm:$0xff]
  %v994 = vld [vmem:[%s3 + $0x1910] sm:$0xff]
  %v995 = vld [vmem:[%s3 + $0x1918] sm:$0xff]
  %v996 = vld [vmem:[%s3 + $0x1920] sm:$0xff]
  %v997 = vld [vmem:[%s3 + $0x1928] sm:$0xff]
  %v998 = vld [vmem:[%s3 + $0x1930] sm:$0xff]
  %v999 = vld [vmem:[%s3 + $0x1938] sm:$0xff]
  %v1000 = vld [vmem:[%s3 + $0x1940] sm:$0xff]
  %v1001 = vld [vmem:[%s3 + $0x1948] sm:$0xff]
  %v1002 = vld [vmem:[%s3 + $0x1950] sm:$0xff]
  %v1003 = vld [vmem:[%s3 + $0x1958] sm:$0xff]
  %v1004 = vld [vmem:[%s3 + $0x1960] sm:$0xff]
  %v1005 = vld [vmem:[%s3 + $0x1968] sm:$0xff]
  %v1006 = vld [vmem:[%s3 + $0x1970] sm:$0xff]
  %v1007 = vld [vmem:[%s3 + $0x1978] sm:$0xff]
  %v1008 = vld [vmem:[%s3 + $0x1980] sm:$0xff]
  %v1009 = vld [vmem:[%s3 + $0x1988] sm:$0xff]
  %v1010 = vld [vmem:[%s3 + $0x1990] sm:$0xff]
  %v1011 = vld [vmem:[%s3 + $0x1998] sm:$0xff]
  %v1012 = vld [vmem:[%s3 + $0x19a0] sm:$0xff]
  %v1013 = vld [vmem:[%s3 + $0x19a8] sm:$0xff]
  %v1014 = vld [vmem:[%s3 + $0x19b0] sm:$0xff]
  %v1015 = vld [vmem:[%s3 + $0x19b8] sm:$0xff]
  %v1016 = vld [vmem:[%s3 + $0x19c0] sm:$0xff]
  %v1017 = vld [vmem:[%s3 + $0x19c8] sm:$0xff]
  %v1018 = vld [vmem:[%s3 + $0x19d0] sm:$0xff]
  %v1019 = vld [vmem:[%s3 + $0x19d8] sm:$0xff]
  %v1020 = vld [vmem:[%s3 + $0x19e0] sm:$0xff]
  %v1021 = vld [vmem:[%s3 + $0x19e8] sm:$0xff]
  %v1022 = vld [vmem:[%s3 + $0x19f0] sm:$0xff]
  %v1023 = vld [vmem:[%s3 + $0x19f8] sm:$0xff]
  %v1024 = vld [vmem:[%s3 + $0x1a00] sm:$0xff]
  %v1025 = vld [vmem:[%s3 + $0x1a08] sm:$0xff]
  %v1026 = vld [vmem:[%s3 + $0x1a10] sm:$0xff]
  %v1027 = vld [vmem:[%s3 + $0x1a18] sm:$0xff]
  %v1028 = vld [vmem:[%s3 + $0x1a20] sm:$0xff]
  %v1029 = vld [vmem:[%s3 + $0x1a28] sm:$0xff]
  %v1030 = vld [vmem:[%s3 + $0x1a30] sm:$0xff]
  %v1031 = vld [vmem:[%s3 + $0x1a38] sm:$0xff]
  %v1032 = vld [vmem:[%s3 + $0x1a40] sm:$0xff]
  %v1033 = vld [vmem:[%s3 + $0x1a48] sm:$0xff]
  %v1034 = vld [vmem:[%s3 + $0x1a50] sm:$0xff]
  %v1035 = vld [vmem:[%s3 + $0x1a58] sm:$0xff]
  %v1036 = vld [vmem:[%s3 + $0x1a60] sm:$0xff]
  %v1037 = vld [vmem:[%s3 + $0x1a68] sm:$0xff]
  %v1038 = vld [vmem:[%s3 + $0x1a70] sm:$0xff]
  %v1039 = vld [vmem:[%s3 + $0x1a78] sm:$0xff]
  %v1040 = vld [vmem:[%s3 + $0x1a80] sm:$0xff]
  %v1041 = vld [vmem:[%s3 + $0x1a88] sm:$0xff]
  %v1042 = vld [vmem:[%s3 + $0x1a90] sm:$0xff]
  %v1043 = vld [vmem:[%s3 + $0x1a98] sm:$0xff]
  %v1044 = vld [vmem:[%s3 + $0x1aa0] sm:$0xff]
  %v1045 = vld [vmem:[%s3 + $0x1aa8] sm:$0xff]
  %v1046 = vld [vmem:[%s3 + $0x1ab0] sm:$0xff]
  %v1047 = vld [vmem:[%s3 + $0x1ab8] sm:$0xff]
  %v1048 = vld [vmem:[%s3 + $0x1ac0] sm:$0xff]
  %v1049 = vld [vmem:[%s3 + $0x1ac8] sm:$0xff]
  %v1050 = vld [vmem:[%s3 + $0x1ad0] sm:$0xff]
  %v1051 = vld [vmem:[%s3 + $0x1ad8] sm:$0xff]
  %v1052 = vld [vmem:[%s3 + $0x1ae0] sm:$0xff]
  %v1053 = vld [vmem:[%s3 + $0x1ae8] sm:$0xff]
  %v1054 = vld [vmem:[%s3 + $0x1af0] sm:$0xff]
  %v1055 = vld [vmem:[%s3 + $0x1af8] sm:$0xff]
  %v1056 = vld [vmem:[%s3 + $0x1b00] sm:$0xff]
  %v1057 = vld [vmem:[%s3 + $0x1b08] sm:$0xff]
  %v1058 = vld [vmem:[%s3 + $0x1b10] sm:$0xff]
  %v1059 = vld [vmem:[%s3 + $0x1b18] sm:$0xff]
  %v1060 = vld [vmem:[%s3 + $0x1b20] sm:$0xff]
  %v1061 = vld [vmem:[%s3 + $0x1b28] sm:$0xff]
  %v1062 = vld [vmem:[%s3 + $0x1b30] sm:$0xff]
  %v1063 = vld [vmem:[%s3 + $0x1b38] sm:$0xff]
  %v1064 = vld [vmem:[%s3 + $0x1b40] sm:$0xff]
  %v1065 = vld [vmem:[%s3 + $0x1b48] sm:$0xff]
  %v1066 = vld [vmem:[%s3 + $0x1b50] sm:$0xff]
  %v1067 = vld [vmem:[%s3 + $0x1b58] sm:$0xff]
  %v1068 = vld [vmem:[%s3 + $0x1b60] sm:$0xff]
  %v1069 = vld [vmem:[%s3 + $0x1b68] sm:$0xff]
  %v1070 = vld [vmem:[%s3 + $0x1b70] sm:$0xff]
  %v1071 = vld [vmem:[%s3 + $0x1b78] sm:$0xff]
  %v1072 = vld [vmem:[%s3 + $0x1b80] sm:$0xff]
  %v1073 = vld [vmem:[%s3 + $0x1b88] sm:$0xff]
  %v1074 = vld [vmem:[%s3 + $0x1b90] sm:$0xff]
  %v1075 = vld [vmem:[%s3 + $0x1b98] sm:$0xff]
  %v1076 = vld [vmem:[%s3 + $0x1ba0] sm:$0xff]
  %v1077 = vld [vmem:[%s3 + $0x1ba8] sm:$0xff]
  %v1078 = vld [vmem:[%s3 + $0x1bb0] sm:$0xff]
  %v1079 = vld [vmem:[%s3 + $0x1bb8] sm:$0xff]
  %v1080 = vld [vmem:[%s3 + $0x1bc0] sm:$0xff]
  %v1081 = vld [vmem:[%s3 + $0x1bc8] sm:$0xff]
  %v1082 = vld [vmem:[%s3 + $0x1bd0] sm:$0xff]
  %v1083 = vld [vmem:[%s3 + $0x1bd8] sm:$0xff]
  %v1084 = vld [vmem:[%s3 + $0x1be0] sm:$0xff]
  %v1085 = vld [vmem:[%s3 + $0x1be8] sm:$0xff]
  %v1086 = vld [vmem:[%s3 + $0x1bf0] sm:$0xff]
  %v1087 = vld [vmem:[%s3 + $0x1bf8] sm:$0xff]
  %v1088 = vld [vmem:[%s3 + $0x1c00] sm:$0xff]
  %v1089 = vld [vmem:[%s3 + $0x1c08] sm:$0xff]
  %v1090 = vld [vmem:[%s3 + $0x1c10] sm:$0xff]
  %v1091 = vld [vmem:[%s3 + $0x1c18] sm:$0xff]
  %v1092 = vld [vmem:[%s3 + $0x1c20] sm:$0xff]
  %v1093 = vld [vmem:[%s3 + $0x1c28] sm:$0xff]
  %v1094 = vld [vmem:[%s3 + $0x1c30] sm:$0xff]
  %v1095 = vld [vmem:[%s3 + $0x1c38] sm:$0xff]
  %v1096 = vld [vmem:[%s3 + $0x1c40] sm:$0xff]
  %v1097 = vld [vmem:[%s3 + $0x1c48] sm:$0xff]
  %v1098 = vld [vmem:[%s3 + $0x1c50] sm:$0xff]
  %v1099 = vld [vmem:[%s3 + $0x1c58] sm:$0xff]
  %v1100 = vld [vmem:[%s3 + $0x1c60] sm:$0xff]
  %v1101 = vld [vmem:[%s3 + $0x1c68] sm:$0xff]
  %v1102 = vld [vmem:[%s3 + $0x1c70] sm:$0xff]
  %v1103 = vld [vmem:[%s3 + $0x1c78] sm:$0xff]
  %v1104 = vld [vmem:[%s3 + $0x1c80] sm:$0xff]
  %v1105 = vld [vmem:[%s3 + $0x1c88] sm:$0xff]
  %v1106 = vld [vmem:[%s3 + $0x1c90] sm:$0xff]
  %v1107 = vld [vmem:[%s3 + $0x1c98] sm:$0xff]
  %v1108 = vld [vmem:[%s3 + $0x1ca0] sm:$0xff]
  %v1109 = vld [vmem:[%s3 + $0x1ca8] sm:$0xff]
  %v1110 = vld [vmem:[%s3 + $0x1cb0] sm:$0xff]
  %v1111 = vld [vmem:[%s3 + $0x1cb8] sm:$0xff]
  %v1112 = vld [vmem:[%s3 + $0x1cc0] sm:$0xff]
  %v1113 = vld [vmem:[%s3 + $0x1cc8] sm:$0xff]
  %v1114 = vld [vmem:[%s3 + $0x1cd0] sm:$0xff]
  %v1115 = vld [vmem:[%s3 + $0x1cd8] sm:$0xff]
  %v1116 = vld [vmem:[%s3 + $0x1ce0] sm:$0xff]
  %v1117 = vld [vmem:[%s3 + $0x1ce8] sm:$0xff]
  %v1118 = vld [vmem:[%s3 + $0x1cf0] sm:$0xff]
  %v1119 = vld [vmem:[%s3 + $0x1cf8] sm:$0xff]
  %v1120 = vld [vmem:[%s3 + $0x1d00] sm:$0xff]
  %v1121 = vld [vmem:[%s3 + $0x1d08] sm:$0xff]
  %v1122 = vld [vmem:[%s3 + $0x1d10] sm:$0xff]
  %v1123 = vld [vmem:[%s3 + $0x1d18] sm:$0xff]
  %v1124 = vld [vmem:[%s3 + $0x1d20] sm:$0xff]
  %v1125 = vld [vmem:[%s3 + $0x1d28] sm:$0xff]
  %v1126 = vld [vmem:[%s3 + $0x1d30] sm:$0xff]
  %v1127 = vld [vmem:[%s3 + $0x1d38] sm:$0xff]
  %v1128 = vld [vmem:[%s3 + $0x1d40] sm:$0xff]
  %v1129 = vld [vmem:[%s3 + $0x1d48] sm:$0xff]
  %v1130 = vld [vmem:[%s3 + $0x1d50] sm:$0xff]
  %v1131 = vld [vmem:[%s3 + $0x1d58] sm:$0xff]
  %v1132 = vld [vmem:[%s3 + $0x1d60] sm:$0xff]
  %v1133 = vld [vmem:[%s3 + $0x1d68] sm:$0xff]
  %v1134 = vld [vmem:[%s3 + $0x1d70] sm:$0xff]
  %v1135 = vld [vmem:[%s3 + $0x1d78] sm:$0xff]
  %v1136 = vld [vmem:[%s3 + $0x1d80] sm:$0xff]
  %v1137 = vld [vmem:[%s3 + $0x1d88] sm:$0xff]
  %v1138 = vld [vmem:[%s3 + $0x1d90] sm:$0xff]
  %v1139 = vld [vmem:[%s3 + $0x1d98] sm:$0xff]
  %v1140 = vld [vmem:[%s3 + $0x1da0] sm:$0xff]
  %v1141 = vld [vmem:[%s3 + $0x1da8] sm:$0xff]
  %v1142 = vld [vmem:[%s3 + $0x1db0] sm:$0xff]
  %v1143 = vld [vmem:[%s3 + $0x1db8] sm:$0xff]
  %v1144 = vld [vmem:[%s3 + $0x1dc0] sm:$0xff]
  %v1145 = vld [vmem:[%s3 + $0x1dc8] sm:$0xff]
  %v1146 = vld [vmem:[%s3 + $0x1dd0] sm:$0xff]
  %v1147 = vld [vmem:[%s3 + $0x1dd8] sm:$0xff]
  %v1148 = vld [vmem:[%s3 + $0x1de0] sm:$0xff]
  %v1149 = vld [vmem:[%s3 + $0x1de8] sm:$0xff]
  %v1150 = vld [vmem:[%s3 + $0x1df0] sm:$0xff]
  %v1151 = vld [vmem:[%s3 + $0x1df8] sm:$0xff]
  %v1152 = vld [vmem:[%s3 + $0x1e00] sm:$0xff]
  %v1153 = vld [vmem:[%s3 + $0x1e08] sm:$0xff]
  %v1154 = vld [vmem:[%s3 + $0x1e10] sm:$0xff]
  %v1155 = vld [vmem:[%s3 + $0x1e18] sm:$0xff]
  %v1156 = vld [vmem:[%s3 + $0x1e20] sm:$0xff]
  %v1157 = vld [vmem:[%s3 + $0x1e28] sm:$0xff]
  %v1158 = vld [vmem:[%s3 + $0x1e30] sm:$0xff]
  %v1159 = vld [vmem:[%s3 + $0x1e38] sm:$0xff]
  %v1160 = vld [vmem:[%s3 + $0x1e40] sm:$0xff]
  %v1161 = vld [vmem:[%s3 + $0x1e48] sm:$0xff]
  %v1162 = vld [vmem:[%s3 + $0x1e50] sm:$0xff]
  %v1163 = vld [vmem:[%s3 + $0x1e58] sm:$0xff]
  %v1164 = vld [vmem:[%s3 + $0x1e60] sm:$0xff]
  %v1165 = vld [vmem:[%s3 + $0x1e68] sm:$0xff]
  %v1166 = vld [vmem:[%s3 + $0x1e70] sm:$0xff]
  %v1167 = vld [vmem:[%s3 + $0x1e78] sm:$0xff]
  %v1168 = vld [vmem:[%s3 + $0x1e80] sm:$0xff]
  %v1169 = vld [vmem:[%s3 + $0x1e88] sm:$0xff]
  %v1170 = vld [vmem:[%s3 + $0x1e90] sm:$0xff]
  %v1171 = vld [vmem:[%s3 + $0x1e98] sm:$0xff]
  %v1172 = vld [vmem:[%s3 + $0x1ea0] sm:$0xff]
  %v1173 = vld [vmem:[%s3 + $0x1ea8] sm:$0xff]
  %v1174 = vld [vmem:[%s3 + $0x1eb0] sm:$0xff]
  %v1175 = vld [vmem:[%s3 + $0x1eb8] sm:$0xff]
  %v1176 = vld [vmem:[%s3 + $0x1ec0] sm:$0xff]
  %v1177 = vld [vmem:[%s3 + $0x1ec8] sm:$0xff]
  %v1178 = vld [vmem:[%s3 + $0x1ed0] sm:$0xff]
  %v1179 = vld [vmem:[%s3 + $0x1ed8] sm:$0xff]
  %v1180 = vld [vmem:[%s3 + $0x1ee0] sm:$0xff]
  %v1181 = vld [vmem:[%s3 + $0x1ee8] sm:$0xff]
  %v1182 = vld [vmem:[%s3 + $0x1ef0] sm:$0xff]
  %v1183 = vld [vmem:[%s3 + $0x1ef8] sm:$0xff]
  %v1184 = vld [vmem:[%s3 + $0x1f00] sm:$0xff]
  %v1185 = vld [vmem:[%s3 + $0x1f08] sm:$0xff]
  %v1186 = vld [vmem:[%s3 + $0x1f10] sm:$0xff]
  %v1187 = vld [vmem:[%s3 + $0x1f18] sm:$0xff]
  %v1188 = vld [vmem:[%s3 + $0x1f20] sm:$0xff]
  %v1189 = vld [vmem:[%s3 + $0x1f28] sm:$0xff]
  %v1190 = vld [vmem:[%s3 + $0x1f30] sm:$0xff]
  %v1191 = vld [vmem:[%s3 + $0x1f38] sm:$0xff]
  %v1192 = vld [vmem:[%s3 + $0x1f40] sm:$0xff]
  %v1193 = vld [vmem:[%s3 + $0x1f48] sm:$0xff]
  %v1194 = vld [vmem:[%s3 + $0x1f50] sm:$0xff]
  %v1195 = vld [vmem:[%s3 + $0x1f58] sm:$0xff]
  %v1196 = vld [vmem:[%s3 + $0x1f60] sm:$0xff]
  %v1197 = vld [vmem:[%s3 + $0x1f68] sm:$0xff]
  %v1198 = vld [vmem:[%s3 + $0x1f70] sm:$0xff]
  %v1199 = vld [vmem:[%s3 + $0x1f78] sm:$0xff]
  %v1200 = vld [vmem:[%s3 + $0x1f80] sm:$0xff]
  %v1201 = vld [vmem:[%s3 + $0x1f88] sm:$0xff]
  %v1202 = vld [vmem:[%s3 + $0x1f90] sm:$0xff]
  %v1203 = vld [vmem:[%s3 + $0x1f98] sm:$0xff]
  %v1204 = vld [vmem:[%s3 + $0x1fa0] sm:$0xff]
  %v1205 = vld [vmem:[%s3 + $0x1fa8] sm:$0xff]
  %v1206 = vld [vmem:[%s3 + $0x1fb0] sm:$0xff]
  %v1207 = vld [vmem:[%s3 + $0x1fb8] sm:$0xff]
  %v1208 = vld [vmem:[%s3 + $0x1fc0] sm:$0xff]
  %v1209 = vld [vmem:[%s3 + $0x1fc8] sm:$0xff]
  %v1210 = vld [vmem:[%s3 + $0x1fd0] sm:$0xff]
  %v1211 = vld [vmem:[%s3 + $0x1fd8] sm:$0xff]
  %v1212 = vld [vmem:[%s3 + $0x1fe0] sm:$0xff]
  %v1213 = vld [vmem:[%s3 + $0x1fe8] sm:$0xff]
  %v1214 = vld [vmem:[%s3 + $0x1ff0] sm:$0xff]
  %v1215 = vld [vmem:[%s3 + $0x1ff8] sm:$0xff]
  %1218 = vst [vmem:[#allocation1] ss:$4 sm:$0xff] %v190
  %s1219 = scalar_lea.vmem [#allocation1], 32
  %1220 = vst [vmem:[%s1219] ss:$4 sm:$0xff] %v191
  %v1221 = vld.sshfl [vmem:[#allocation1] sm:$0xff pattern:$0x73625140]
  %v1222 = vld.sshfl [vmem:[#allocation1 + $0x8] sm:$0xff pattern:$0x73625140]
  %v1223 = vld.sshfl [vmem:[#allocation1 + $0x10] sm:$0xff pattern:$0x73625140]
  %v1224 = vld.sshfl [vmem:[#allocation1 + $0x18] sm:$0xff pattern:$0x73625140]
  %v1225 = vld.sshfl [vmem:[#allocation1 + $0x20] sm:$0xff pattern:$0x73625140]
  %v1226 = vld.sshfl [vmem:[#allocation1 + $0x28] sm:$0xff pattern:$0x73625140]
  %v1227 = vld.sshfl [vmem:[#allocation1 + $0x30] sm:$0xff pattern:$0x73625140]
  %v1228 = vld.sshfl [vmem:[#allocation1 + $0x38] sm:$0xff pattern:$0x73625140]
  %1237 = vmatpush.msra.mxu0 %v312
  %1238 = vmatpush.msra.mxu0 %v304
  %1239 = vmatpush.msra.mxu0 %v296
  %1240 = vmatpush.msra.mxu0 %v288
  %1241 = vmatpush.msra.mxu0 %v280
  %1242 = vmatpush.msra.mxu0 %v272
  %1243 = vmatpush.msra.mxu0 %v264
  %1244 = vmatpush.msra.mxu0 %v256
  %1245 = vmatpush.msra.mxu0 %v248
  %1246 = vmatpush.msra.mxu0 %v240
  %1247 = vmatpush.msra.mxu0 %v232
  %1248 = vmatpush.msra.mxu0 %v224
  %1249 = vmatpush.msra.mxu0 %v216
  %1250 = vmatpush.msra.mxu0 %v208
  %1251 = vmatpush.msra.mxu0 %v200
  %1252 = vmatpush.msra.mxu0 %v192
  %1253 = vmatmul.f32.gmra.mxu0 %v1221
  %v1254 = vpop.f32.mrf.mxu0
  %v1255 = vadd.f32 0.0, %v1254
  %1256 = vdwg.mxu0
  %1257 = vmatpush.msra.mxu0 %v440
  %1258 = vmatpush.msra.mxu0 %v432
  %1259 = vmatpush.msra.mxu0 %v424
  %1260 = vmatpush.msra.mxu0 %v416
  %1261 = vmatpush.msra.mxu0 %v408
  %1262 = vmatpush.msra.mxu0 %v400
  %1263 = vmatpush.msra.mxu0 %v392
  %1264 = vmatpush.msra.mxu0 %v384
  %1265 = vmatpush.msra.mxu0 %v376
  %1266 = vmatpush.msra.mxu0 %v368
  %1267 = vmatpush.msra.mxu0 %v360
  %1268 = vmatpush.msra.mxu0 %v352
  %1269 = vmatpush.msra.mxu0 %v344
  %1270 = vmatpush.msra.mxu0 %v336
  %1271 = vmatpush.msra.mxu0 %v328
  %1272 = vmatpush.msra.mxu0 %v320
  %1273 = vmatmul.f32.gmra.mxu0 %v1222
  %v1274 = vpop.f32.mrf.mxu0
  %v1275 = vadd.f32 %v1255, %v1274
  %1276 = vdwg.mxu0
  %1277 = vmatpush.msra.mxu0 %v568
  %1278 = vmatpush.msra.mxu0 %v560
  %1279 = vmatpush.msra.mxu0 %v552
  %1280 = vmatpush.msra.mxu0 %v544
  %1281 = vmatpush.msra.mxu0 %v536
  %1282 = vmatpush.msra.mxu0 %v528
  %1283 = vmatpush.msra.mxu0 %v520
  %1284 = vmatpush.msra.mxu0 %v512
  %1285 = vmatpush.msra.mxu0 %v504
  %1286 = vmatpush.msra.mxu0 %v496
  %1287 = vmatpush.msra.mxu0 %v488
  %1288 = vmatpush.msra.mxu0 %v480
  %1289 = vmatpush.msra.mxu0 %v472
  %1290 = vmatpush.msra.mxu0 %v464
  %1291 = vmatpush.msra.mxu0 %v456
  %1292 = vmatpush.msra.mxu0 %v448
  %1293 = vmatmul.f32.gmra.mxu0 %v1223
  %v1294 = vpop.f32.mrf.mxu0
  %v1295 = vadd.f32 %v1275, %v1294
  %1296 = vdwg.mxu0
  %1297 = vmatpush.msra.mxu0 %v696
  %1298 = vmatpush.msra.mxu0 %v688
  %1299 = vmatpush.msra.mxu0 %v680
  %1300 = vmatpush.msra.mxu0 %v672
  %1301 = vmatpush.msra.mxu0 %v664
  %1302 = vmatpush.msra.mxu0 %v656
  %1303 = vmatpush.msra.mxu0 %v648
  %1304 = vmatpush.msra.mxu0 %v640
  %1305 = vmatpush.msra.mxu0 %v632
  %1306 = vmatpush.msra.mxu0 %v624
  %1307 = vmatpush.msra.mxu0 %v616
  %1308 = vmatpush.msra.mxu0 %v608
  %1309 = vmatpush.msra.mxu0 %v600
  %1310 = vmatpush.msra.mxu0 %v592
  %1311 = vmatpush.msra.mxu0 %v584
  %1312 = vmatpush.msra.mxu0 %v576
  %1313 = vmatmul.f32.gmra.mxu0 %v1224
  %v1314 = vpop.f32.mrf.mxu0
  %v1315 = vadd.f32 %v1295, %v1314
  %1316 = vdwg.mxu0
  %1317 = vmatpush.msra.mxu0 %v824
  %1318 = vmatpush.msra.mxu0 %v816
  %1319 = vmatpush.msra.mxu0 %v808
  %1320 = vmatpush.msra.mxu0 %v800
  %1321 = vmatpush.msra.mxu0 %v792
  %1322 = vmatpush.msra.mxu0 %v784
  %1323 = vmatpush.msra.mxu0 %v776
  %1324 = vmatpush.msra.mxu0 %v768
  %1325 = vmatpush.msra.mxu0 %v760
  %1326 = vmatpush.msra.mxu0 %v752
  %1327 = vmatpush.msra.mxu0 %v744
  %1328 = vmatpush.msra.mxu0 %v736
  %1329 = vmatpush.msra.mxu0 %v728
  %1330 = vmatpush.msra.mxu0 %v720
  %1331 = vmatpush.msra.mxu0 %v712
  %1332 = vmatpush.msra.mxu0 %v704
  %1333 = vmatmul.f32.gmra.mxu0 %v1225
  %v1334 = vpop.f32.mrf.mxu0
  %v1335 = vadd.f32 %v1315, %v1334
  %1336 = vdwg.mxu0
  %1337 = vmatpush.msra.mxu0 %v952
  %1338 = vmatpush.msra.mxu0 %v944
  %1339 = vmatpush.msra.mxu0 %v936
  %1340 = vmatpush.msra.mxu0 %v928
  %1341 = vmatpush.msra.mxu0 %v920
  %1342 = vmatpush.msra.mxu0 %v912
  %1343 = vmatpush.msra.mxu0 %v904
  %1344 = vmatpush.msra.mxu0 %v896
  %1345 = vmatpush.msra.mxu0 %v888
  %1346 = vmatpush.msra.mxu0 %v880
  %1347 = vmatpush.msra.mxu0 %v872
  %1348 = vmatpush.msra.mxu0 %v864
  %1349 = vmatpush.msra.mxu0 %v856
  %1350 = vmatpush.msra.mxu0 %v848
  %1351 = vmatpush.msra.mxu0 %v840
  %1352 = vmatpush.msra.mxu0 %v832
  %1353 = vmatmul.f32.gmra.mxu0 %v1226
  %v1354 = vpop.f32.mrf.mxu0
  %v1355 = vadd.f32 %v1335, %v1354
  %1356 = vdwg.mxu0
  %1357 = vmatpush.msra.mxu0 %v1080
  %1358 = vmatpush.msra.mxu0 %v1072
  %1359 = vmatpush.msra.mxu0 %v1064
  %1360 = vmatpush.msra.mxu0 %v1056
  %1361 = vmatpush.msra.mxu0 %v1048
  %1362 = vmatpush.msra.mxu0 %v1040
  %1363 = vmatpush.msra.mxu0 %v1032
  %1364 = vmatpush.msra.mxu0 %v1024
  %1365 = vmatpush.msra.mxu0 %v1016
  %1366 = vmatpush.msra.mxu0 %v1008
  %1367 = vmatpush.msra.mxu0 %v1000
  %1368 = vmatpush.msra.mxu0 %v992
  %1369 = vmatpush.msra.mxu0 %v984
  %1370 = vmatpush.msra.mxu0 %v976
  %1371 = vmatpush.msra.mxu0 %v968
  %1372 = vmatpush.msra.mxu0 %v960
  %1373 = vmatmul.f32.gmra.mxu0 %v1227
  %v1374 = vpop.f32.mrf.mxu0
  %v1375 = vadd.f32 %v1355, %v1374
  %1376 = vdwg.mxu0
  %1377 = vmatpush.msra.mxu0 %v1208
  %1378 = vmatpush.msra.mxu0 %v1200
  %1379 = vmatpush.msra.mxu0 %v1192
  %1380 = vmatpush.msra.mxu0 %v1184
  %1381 = vmatpush.msra.mxu0 %v1176
  %1382 = vmatpush.msra.mxu0 %v1168
  %1383 = vmatpush.msra.mxu0 %v1160
  %1384 = vmatpush.msra.mxu0 %v1152
  %1385 = vmatpush.msra.mxu0 %v1144
  %1386 = vmatpush.msra.mxu0 %v1136
  %1387 = vmatpush.msra.mxu0 %v1128
  %1388 = vmatpush.msra.mxu0 %v1120
  %1389 = vmatpush.msra.mxu0 %v1112
  %1390 = vmatpush.msra.mxu0 %v1104
  %1391 = vmatpush.msra.mxu0 %v1096
  %1392 = vmatpush.msra.mxu0 %v1088
  %1393 = vmatmul.f32.gmra.mxu0 %v1228
  %v1394 = vpop.f32.mrf.mxu0
  %v1395 = vadd.f32 %v1375, %v1394
  %1396 = vdwg.mxu0
  %1397 = vmatpush.msra.mxu0 %v313
  %1398 = vmatpush.msra.mxu0 %v305
  %1399 = vmatpush.msra.mxu0 %v297
  %1400 = vmatpush.msra.mxu0 %v289
  %1401 = vmatpush.msra.mxu0 %v281
  %1402 = vmatpush.msra.mxu0 %v273
  %1403 = vmatpush.msra.mxu0 %v265
  %1404 = vmatpush.msra.mxu0 %v257
  %1405 = vmatpush.msra.mxu0 %v249
  %1406 = vmatpush.msra.mxu0 %v241
  %1407 = vmatpush.msra.mxu0 %v233
  %1408 = vmatpush.msra.mxu0 %v225
  %1409 = vmatpush.msra.mxu0 %v217
  %1410 = vmatpush.msra.mxu0 %v209
  %1411 = vmatpush.msra.mxu0 %v201
  %1412 = vmatpush.msra.mxu0 %v193
  %1413 = vmatmul.f32.gmra.mxu0 %v1221
  %v1414 = vpop.f32.mrf.mxu0
  %v1415 = vadd.f32 0.0, %v1414
  %1416 = vdwg.mxu0
  %1417 = vmatpush.msra.mxu0 %v441
  %1418 = vmatpush.msra.mxu0 %v433
  %1419 = vmatpush.msra.mxu0 %v425
  %1420 = vmatpush.msra.mxu0 %v417
  %1421 = vmatpush.msra.mxu0 %v409
  %1422 = vmatpush.msra.mxu0 %v401
  %1423 = vmatpush.msra.mxu0 %v393
  %1424 = vmatpush.msra.mxu0 %v385
  %1425 = vmatpush.msra.mxu0 %v377
  %1426 = vmatpush.msra.mxu0 %v369
  %1427 = vmatpush.msra.mxu0 %v361
  %1428 = vmatpush.msra.mxu0 %v353
  %1429 = vmatpush.msra.mxu0 %v345
  %1430 = vmatpush.msra.mxu0 %v337
  %1431 = vmatpush.msra.mxu0 %v329
  %1432 = vmatpush.msra.mxu0 %v321
  %1433 = vmatmul.f32.gmra.mxu0 %v1222
  %v1434 = vpop.f32.mrf.mxu0
  %v1435 = vadd.f32 %v1415, %v1434
  %1436 = vdwg.mxu0
  %1437 = vmatpush.msra.mxu0 %v569
  %1438 = vmatpush.msra.mxu0 %v561
  %1439 = vmatpush.msra.mxu0 %v553
  %1440 = vmatpush.msra.mxu0 %v545
  %1441 = vmatpush.msra.mxu0 %v537
  %1442 = vmatpush.msra.mxu0 %v529
  %1443 = vmatpush.msra.mxu0 %v521
  %1444 = vmatpush.msra.mxu0 %v513
  %1445 = vmatpush.msra.mxu0 %v505
  %1446 = vmatpush.msra.mxu0 %v497
  %1447 = vmatpush.msra.mxu0 %v489
  %1448 = vmatpush.msra.mxu0 %v481
  %1449 = vmatpush.msra.mxu0 %v473
  %1450 = vmatpush.msra.mxu0 %v465
  %1451 = vmatpush.msra.mxu0 %v457
  %1452 = vmatpush.msra.mxu0 %v449
  %1453 = vmatmul.f32.gmra.mxu0 %v1223
  %v1454 = vpop.f32.mrf.mxu0
  %v1455 = vadd.f32 %v1435, %v1454
  %1456 = vdwg.mxu0
  %1457 = vmatpush.msra.mxu0 %v697
  %1458 = vmatpush.msra.mxu0 %v689
  %1459 = vmatpush.msra.mxu0 %v681
  %1460 = vmatpush.msra.mxu0 %v673
  %1461 = vmatpush.msra.mxu0 %v665
  %1462 = vmatpush.msra.mxu0 %v657
  %1463 = vmatpush.msra.mxu0 %v649
  %1464 = vmatpush.msra.mxu0 %v641
  %1465 = vmatpush.msra.mxu0 %v633
  %1466 = vmatpush.msra.mxu0 %v625
  %1467 = vmatpush.msra.mxu0 %v617
  %1468 = vmatpush.msra.mxu0 %v609
  %1469 = vmatpush.msra.mxu0 %v601
  %1470 = vmatpush.msra.mxu0 %v593
  %1471 = vmatpush.msra.mxu0 %v585
  %1472 = vmatpush.msra.mxu0 %v577
  %1473 = vmatmul.f32.gmra.mxu0 %v1224
  %v1474 = vpop.f32.mrf.mxu0
  %v1475 = vadd.f32 %v1455, %v1474
  %1476 = vdwg.mxu0
  %1477 = vmatpush.msra.mxu0 %v825
  %1478 = vmatpush.msra.mxu0 %v817
  %1479 = vmatpush.msra.mxu0 %v809
  %1480 = vmatpush.msra.mxu0 %v801
  %1481 = vmatpush.msra.mxu0 %v793
  %1482 = vmatpush.msra.mxu0 %v785
  %1483 = vmatpush.msra.mxu0 %v777
  %1484 = vmatpush.msra.mxu0 %v769
  %1485 = vmatpush.msra.mxu0 %v761
  %1486 = vmatpush.msra.mxu0 %v753
  %1487 = vmatpush.msra.mxu0 %v745
  %1488 = vmatpush.msra.mxu0 %v737
  %1489 = vmatpush.msra.mxu0 %v729
  %1490 = vmatpush.msra.mxu0 %v721
  %1491 = vmatpush.msra.mxu0 %v713
  %1492 = vmatpush.msra.mxu0 %v705
  %1493 = vmatmul.f32.gmra.mxu0 %v1225
  %v1494 = vpop.f32.mrf.mxu0
  %v1495 = vadd.f32 %v1475, %v1494
  %1496 = vdwg.mxu0
  %1497 = vmatpush.msra.mxu0 %v953
  %1498 = vmatpush.msra.mxu0 %v945
  %1499 = vmatpush.msra.mxu0 %v937
  %1500 = vmatpush.msra.mxu0 %v929
  %1501 = vmatpush.msra.mxu0 %v921
  %1502 = vmatpush.msra.mxu0 %v913
  %1503 = vmatpush.msra.mxu0 %v905
  %1504 = vmatpush.msra.mxu0 %v897
  %1505 = vmatpush.msra.mxu0 %v889
  %1506 = vmatpush.msra.mxu0 %v881
  %1507 = vmatpush.msra.mxu0 %v873
  %1508 = vmatpush.msra.mxu0 %v865
  %1509 = vmatpush.msra.mxu0 %v857
  %1510 = vmatpush.msra.mxu0 %v849
  %1511 = vmatpush.msra.mxu0 %v841
  %1512 = vmatpush.msra.mxu0 %v833
  %1513 = vmatmul.f32.gmra.mxu0 %v1226
  %v1514 = vpop.f32.mrf.mxu0
  %v1515 = vadd.f32 %v1495, %v1514
  %1516 = vdwg.mxu0
  %1517 = vmatpush.msra.mxu0 %v1081
  %1518 = vmatpush.msra.mxu0 %v1073
  %1519 = vmatpush.msra.mxu0 %v1065
  %1520 = vmatpush.msra.mxu0 %v1057
  %1521 = vmatpush.msra.mxu0 %v1049
  %1522 = vmatpush.msra.mxu0 %v1041
  %1523 = vmatpush.msra.mxu0 %v1033
  %1524 = vmatpush.msra.mxu0 %v1025
  %1525 = vmatpush.msra.mxu0 %v1017
  %1526 = vmatpush.msra.mxu0 %v1009
  %1527 = vmatpush.msra.mxu0 %v1001
  %1528 = vmatpush.msra.mxu0 %v993
  %1529 = vmatpush.msra.mxu0 %v985
  %1530 = vmatpush.msra.mxu0 %v977
  %1531 = vmatpush.msra.mxu0 %v969
  %1532 = vmatpush.msra.mxu0 %v961
  %1533 = vmatmul.f32.gmra.mxu0 %v1227
  %v1534 = vpop.f32.mrf.mxu0
  %v1535 = vadd.f32 %v1515, %v1534
  %1536 = vdwg.mxu0
  %1537 = vmatpush.msra.mxu0 %v1209
  %1538 = vmatpush.msra.mxu0 %v1201
  %1539 = vmatpush.msra.mxu0 %v1193
  %1540 = vmatpush.msra.mxu0 %v1185
  %1541 = vmatpush.msra.mxu0 %v1177
  %1542 = vmatpush.msra.mxu0 %v1169
  %1543 = vmatpush.msra.mxu0 %v1161
  %1544 = vmatpush.msra.mxu0 %v1153
  %1545 = vmatpush.msra.mxu0 %v1145
  %1546 = vmatpush.msra.mxu0 %v1137
  %1547 = vmatpush.msra.mxu0 %v1129
  %1548 = vmatpush.msra.mxu0 %v1121
  %1549 = vmatpush.msra.mxu0 %v1113
  %1550 = vmatpush.msra.mxu0 %v1105
  %1551 = vmatpush.msra.mxu0 %v1097
  %1552 = vmatpush.msra.mxu0 %v1089
  %1553 = vmatmul.f32.gmra.mxu0 %v1228
  %v1554 = vpop.f32.mrf.mxu0
  %v1555 = vadd.f32 %v1535, %v1554
  %1556 = vdwg.mxu0
  %1557 = vmatpush.msra.mxu0 %v314
  %1558 = vmatpush.msra.mxu0 %v306
  %1559 = vmatpush.msra.mxu0 %v298
  %1560 = vmatpush.msra.mxu0 %v290
  %1561 = vmatpush.msra.mxu0 %v282
  %1562 = vmatpush.msra.mxu0 %v274
  %1563 = vmatpush.msra.mxu0 %v266
  %1564 = vmatpush.msra.mxu0 %v258
  %1565 = vmatpush.msra.mxu0 %v250
  %1566 = vmatpush.msra.mxu0 %v242
  %1567 = vmatpush.msra.mxu0 %v234
  %1568 = vmatpush.msra.mxu0 %v226
  %1569 = vmatpush.msra.mxu0 %v218
  %1570 = vmatpush.msra.mxu0 %v210
  %1571 = vmatpush.msra.mxu0 %v202
  %1572 = vmatpush.msra.mxu0 %v194
  %1573 = vmatmul.f32.gmra.mxu0 %v1221
  %v1574 = vpop.f32.mrf.mxu0
  %v1575 = vadd.f32 0.0, %v1574
  %1576 = vdwg.mxu0
  %1577 = vmatpush.msra.mxu0 %v442
  %1578 = vmatpush.msra.mxu0 %v434
  %1579 = vmatpush.msra.mxu0 %v426
  %1580 = vmatpush.msra.mxu0 %v418
  %1581 = vmatpush.msra.mxu0 %v410
  %1582 = vmatpush.msra.mxu0 %v402
  %1583 = vmatpush.msra.mxu0 %v394
  %1584 = vmatpush.msra.mxu0 %v386
  %1585 = vmatpush.msra.mxu0 %v378
  %1586 = vmatpush.msra.mxu0 %v370
  %1587 = vmatpush.msra.mxu0 %v362
  %1588 = vmatpush.msra.mxu0 %v354
  %1589 = vmatpush.msra.mxu0 %v346
  %1590 = vmatpush.msra.mxu0 %v338
  %1591 = vmatpush.msra.mxu0 %v330
  %1592 = vmatpush.msra.mxu0 %v322
  %1593 = vmatmul.f32.gmra.mxu0 %v1222
  %v1594 = vpop.f32.mrf.mxu0
  %v1595 = vadd.f32 %v1575, %v1594
  %1596 = vdwg.mxu0
  %1597 = vmatpush.msra.mxu0 %v570
  %1598 = vmatpush.msra.mxu0 %v562
  %1599 = vmatpush.msra.mxu0 %v554
  %1600 = vmatpush.msra.mxu0 %v546
  %1601 = vmatpush.msra.mxu0 %v538
  %1602 = vmatpush.msra.mxu0 %v530
  %1603 = vmatpush.msra.mxu0 %v522
  %1604 = vmatpush.msra.mxu0 %v514
  %1605 = vmatpush.msra.mxu0 %v506
  %1606 = vmatpush.msra.mxu0 %v498
  %1607 = vmatpush.msra.mxu0 %v490
  %1608 = vmatpush.msra.mxu0 %v482
  %1609 = vmatpush.msra.mxu0 %v474
  %1610 = vmatpush.msra.mxu0 %v466
  %1611 = vmatpush.msra.mxu0 %v458
  %1612 = vmatpush.msra.mxu0 %v450
  %1613 = vmatmul.f32.gmra.mxu0 %v1223
  %v1614 = vpop.f32.mrf.mxu0
  %v1615 = vadd.f32 %v1595, %v1614
  %1616 = vdwg.mxu0
  %1617 = vmatpush.msra.mxu0 %v698
  %1618 = vmatpush.msra.mxu0 %v690
  %1619 = vmatpush.msra.mxu0 %v682
  %1620 = vmatpush.msra.mxu0 %v674
  %1621 = vmatpush.msra.mxu0 %v666
  %1622 = vmatpush.msra.mxu0 %v658
  %1623 = vmatpush.msra.mxu0 %v650
  %1624 = vmatpush.msra.mxu0 %v642
  %1625 = vmatpush.msra.mxu0 %v634
  %1626 = vmatpush.msra.mxu0 %v626
  %1627 = vmatpush.msra.mxu0 %v618
  %1628 = vmatpush.msra.mxu0 %v610
  %1629 = vmatpush.msra.mxu0 %v602
  %1630 = vmatpush.msra.mxu0 %v594
  %1631 = vmatpush.msra.mxu0 %v586
  %1632 = vmatpush.msra.mxu0 %v578
  %1633 = vmatmul.f32.gmra.mxu0 %v1224
  %v1634 = vpop.f32.mrf.mxu0
  %v1635 = vadd.f32 %v1615, %v1634
  %1636 = vdwg.mxu0
  %1637 = vmatpush.msra.mxu0 %v826
  %1638 = vmatpush.msra.mxu0 %v818
  %1639 = vmatpush.msra.mxu0 %v810
  %1640 = vmatpush.msra.mxu0 %v802
  %1641 = vmatpush.msra.mxu0 %v794
  %1642 = vmatpush.msra.mxu0 %v786
  %1643 = vmatpush.msra.mxu0 %v778
  %1644 = vmatpush.msra.mxu0 %v770
  %1645 = vmatpush.msra.mxu0 %v762
  %1646 = vmatpush.msra.mxu0 %v754
  %1647 = vmatpush.msra.mxu0 %v746
  %1648 = vmatpush.msra.mxu0 %v738
  %1649 = vmatpush.msra.mxu0 %v730
  %1650 = vmatpush.msra.mxu0 %v722
  %1651 = vmatpush.msra.mxu0 %v714
  %1652 = vmatpush.msra.mxu0 %v706
  %1653 = vmatmul.f32.gmra.mxu0 %v1225
  %v1654 = vpop.f32.mrf.mxu0
  %v1655 = vadd.f32 %v1635, %v1654
  %1656 = vdwg.mxu0
  %1657 = vmatpush.msra.mxu0 %v954
  %1658 = vmatpush.msra.mxu0 %v946
  %1659 = vmatpush.msra.mxu0 %v938
  %1660 = vmatpush.msra.mxu0 %v930
  %1661 = vmatpush.msra.mxu0 %v922
  %1662 = vmatpush.msra.mxu0 %v914
  %1663 = vmatpush.msra.mxu0 %v906
  %1664 = vmatpush.msra.mxu0 %v898
  %1665 = vmatpush.msra.mxu0 %v890
  %1666 = vmatpush.msra.mxu0 %v882
  %1667 = vmatpush.msra.mxu0 %v874
  %1668 = vmatpush.msra.mxu0 %v866
  %1669 = vmatpush.msra.mxu0 %v858
  %1670 = vmatpush.msra.mxu0 %v850
  %1671 = vmatpush.msra.mxu0 %v842
  %1672 = vmatpush.msra.mxu0 %v834
  %1673 = vmatmul.f32.gmra.mxu0 %v1226
  %v1674 = vpop.f32.mrf.mxu0
  %v1675 = vadd.f32 %v1655, %v1674
  %1676 = vdwg.mxu0
  %1677 = vmatpush.msra.mxu0 %v1082
  %1678 = vmatpush.msra.mxu0 %v1074
  %1679 = vmatpush.msra.mxu0 %v1066
  %1680 = vmatpush.msra.mxu0 %v1058
  %1681 = vmatpush.msra.mxu0 %v1050
  %1682 = vmatpush.msra.mxu0 %v1042
  %1683 = vmatpush.msra.mxu0 %v1034
  %1684 = vmatpush.msra.mxu0 %v1026
  %1685 = vmatpush.msra.mxu0 %v1018
  %1686 = vmatpush.msra.mxu0 %v1010
  %1687 = vmatpush.msra.mxu0 %v1002
  %1688 = vmatpush.msra.mxu0 %v994
  %1689 = vmatpush.msra.mxu0 %v986
  %1690 = vmatpush.msra.mxu0 %v978
  %1691 = vmatpush.msra.mxu0 %v970
  %1692 = vmatpush.msra.mxu0 %v962
  %1693 = vmatmul.f32.gmra.mxu0 %v1227
  %v1694 = vpop.f32.mrf.mxu0
  %v1695 = vadd.f32 %v1675, %v1694
  %1696 = vdwg.mxu0
  %1697 = vmatpush.msra.mxu0 %v1210
  %1698 = vmatpush.msra.mxu0 %v1202
  %1699 = vmatpush.msra.mxu0 %v1194
  %1700 = vmatpush.msra.mxu0 %v1186
  %1701 = vmatpush.msra.mxu0 %v1178
  %1702 = vmatpush.msra.mxu0 %v1170
  %1703 = vmatpush.msra.mxu0 %v1162
  %1704 = vmatpush.msra.mxu0 %v1154
  %1705 = vmatpush.msra.mxu0 %v1146
  %1706 = vmatpush.msra.mxu0 %v1138
  %1707 = vmatpush.msra.mxu0 %v1130
  %1708 = vmatpush.msra.mxu0 %v1122
  %1709 = vmatpush.msra.mxu0 %v1114
  %1710 = vmatpush.msra.mxu0 %v1106
  %1711 = vmatpush.msra.mxu0 %v1098
  %1712 = vmatpush.msra.mxu0 %v1090
  %1713 = vmatmul.f32.gmra.mxu0 %v1228
  %v1714 = vpop.f32.mrf.mxu0
  %v1715 = vadd.f32 %v1695, %v1714
  %1716 = vdwg.mxu0
  %1717 = vmatpush.msra.mxu0 %v315
  %1718 = vmatpush.msra.mxu0 %v307
  %1719 = vmatpush.msra.mxu0 %v299
  %1720 = vmatpush.msra.mxu0 %v291
  %1721 = vmatpush.msra.mxu0 %v283
  %1722 = vmatpush.msra.mxu0 %v275
  %1723 = vmatpush.msra.mxu0 %v267
  %1724 = vmatpush.msra.mxu0 %v259
  %1725 = vmatpush.msra.mxu0 %v251
  %1726 = vmatpush.msra.mxu0 %v243
  %1727 = vmatpush.msra.mxu0 %v235
  %1728 = vmatpush.msra.mxu0 %v227
  %1729 = vmatpush.msra.mxu0 %v219
  %1730 = vmatpush.msra.mxu0 %v211
  %1731 = vmatpush.msra.mxu0 %v203
  %1732 = vmatpush.msra.mxu0 %v195
  %1733 = vmatmul.f32.gmra.mxu0 %v1221
  %v1734 = vpop.f32.mrf.mxu0
  %v1735 = vadd.f32 0.0, %v1734
  %1736 = vdwg.mxu0
  %1737 = vmatpush.msra.mxu0 %v443
  %1738 = vmatpush.msra.mxu0 %v435
  %1739 = vmatpush.msra.mxu0 %v427
  %1740 = vmatpush.msra.mxu0 %v419
  %1741 = vmatpush.msra.mxu0 %v411
  %1742 = vmatpush.msra.mxu0 %v403
  %1743 = vmatpush.msra.mxu0 %v395
  %1744 = vmatpush.msra.mxu0 %v387
  %1745 = vmatpush.msra.mxu0 %v379
  %1746 = vmatpush.msra.mxu0 %v371
  %1747 = vmatpush.msra.mxu0 %v363
  %1748 = vmatpush.msra.mxu0 %v355
  %1749 = vmatpush.msra.mxu0 %v347
  %1750 = vmatpush.msra.mxu0 %v339
  %1751 = vmatpush.msra.mxu0 %v331
  %1752 = vmatpush.msra.mxu0 %v323
  %1753 = vmatmul.f32.gmra.mxu0 %v1222
  %v1754 = vpop.f32.mrf.mxu0
  %v1755 = vadd.f32 %v1735, %v1754
  %1756 = vdwg.mxu0
  %1757 = vmatpush.msra.mxu0 %v571
  %1758 = vmatpush.msra.mxu0 %v563
  %1759 = vmatpush.msra.mxu0 %v555
  %1760 = vmatpush.msra.mxu0 %v547
  %1761 = vmatpush.msra.mxu0 %v539
  %1762 = vmatpush.msra.mxu0 %v531
  %1763 = vmatpush.msra.mxu0 %v523
  %1764 = vmatpush.msra.mxu0 %v515
  %1765 = vmatpush.msra.mxu0 %v507
  %1766 = vmatpush.msra.mxu0 %v499
  %1767 = vmatpush.msra.mxu0 %v491
  %1768 = vmatpush.msra.mxu0 %v483
  %1769 = vmatpush.msra.mxu0 %v475
  %1770 = vmatpush.msra.mxu0 %v467
  %1771 = vmatpush.msra.mxu0 %v459
  %1772 = vmatpush.msra.mxu0 %v451
  %1773 = vmatmul.f32.gmra.mxu0 %v1223
  %v1774 = vpop.f32.mrf.mxu0
  %v1775 = vadd.f32 %v1755, %v1774
  %1776 = vdwg.mxu0
  %1777 = vmatpush.msra.mxu0 %v699
  %1778 = vmatpush.msra.mxu0 %v691
  %1779 = vmatpush.msra.mxu0 %v683
  %1780 = vmatpush.msra.mxu0 %v675
  %1781 = vmatpush.msra.mxu0 %v667
  %1782 = vmatpush.msra.mxu0 %v659
  %1783 = vmatpush.msra.mxu0 %v651
  %1784 = vmatpush.msra.mxu0 %v643
  %1785 = vmatpush.msra.mxu0 %v635
  %1786 = vmatpush.msra.mxu0 %v627
  %1787 = vmatpush.msra.mxu0 %v619
  %1788 = vmatpush.msra.mxu0 %v611
  %1789 = vmatpush.msra.mxu0 %v603
  %1790 = vmatpush.msra.mxu0 %v595
  %1791 = vmatpush.msra.mxu0 %v587
  %1792 = vmatpush.msra.mxu0 %v579
  %1793 = vmatmul.f32.gmra.mxu0 %v1224
  %v1794 = vpop.f32.mrf.mxu0
  %v1795 = vadd.f32 %v1775, %v1794
  %1796 = vdwg.mxu0
  %1797 = vmatpush.msra.mxu0 %v827
  %1798 = vmatpush.msra.mxu0 %v819
  %1799 = vmatpush.msra.mxu0 %v811
  %1800 = vmatpush.msra.mxu0 %v803
  %1801 = vmatpush.msra.mxu0 %v795
  %1802 = vmatpush.msra.mxu0 %v787
  %1803 = vmatpush.msra.mxu0 %v779
  %1804 = vmatpush.msra.mxu0 %v771
  %1805 = vmatpush.msra.mxu0 %v763
  %1806 = vmatpush.msra.mxu0 %v755
  %1807 = vmatpush.msra.mxu0 %v747
  %1808 = vmatpush.msra.mxu0 %v739
  %1809 = vmatpush.msra.mxu0 %v731
  %1810 = vmatpush.msra.mxu0 %v723
  %1811 = vmatpush.msra.mxu0 %v715
  %1812 = vmatpush.msra.mxu0 %v707
  %1813 = vmatmul.f32.gmra.mxu0 %v1225
  %v1814 = vpop.f32.mrf.mxu0
  %v1815 = vadd.f32 %v1795, %v1814
  %1816 = vdwg.mxu0
  %1817 = vmatpush.msra.mxu0 %v955
  %1818 = vmatpush.msra.mxu0 %v947
  %1819 = vmatpush.msra.mxu0 %v939
  %1820 = vmatpush.msra.mxu0 %v931
  %1821 = vmatpush.msra.mxu0 %v923
  %1822 = vmatpush.msra.mxu0 %v915
  %1823 = vmatpush.msra.mxu0 %v907
  %1824 = vmatpush.msra.mxu0 %v899
  %1825 = vmatpush.msra.mxu0 %v891
  %1826 = vmatpush.msra.mxu0 %v883
  %1827 = vmatpush.msra.mxu0 %v875
  %1828 = vmatpush.msra.mxu0 %v867
  %1829 = vmatpush.msra.mxu0 %v859
  %1830 = vmatpush.msra.mxu0 %v851
  %1831 = vmatpush.msra.mxu0 %v843
  %1832 = vmatpush.msra.mxu0 %v835
  %1833 = vmatmul.f32.gmra.mxu0 %v1226
  %v1834 = vpop.f32.mrf.mxu0
  %v1835 = vadd.f32 %v1815, %v1834
  %1836 = vdwg.mxu0
  %1837 = vmatpush.msra.mxu0 %v1083
  %1838 = vmatpush.msra.mxu0 %v1075
  %1839 = vmatpush.msra.mxu0 %v1067
  %1840 = vmatpush.msra.mxu0 %v1059
  %1841 = vmatpush.msra.mxu0 %v1051
  %1842 = vmatpush.msra.mxu0 %v1043
  %1843 = vmatpush.msra.mxu0 %v1035
  %1844 = vmatpush.msra.mxu0 %v1027
  %1845 = vmatpush.msra.mxu0 %v1019
  %1846 = vmatpush.msra.mxu0 %v1011
  %1847 = vmatpush.msra.mxu0 %v1003
  %1848 = vmatpush.msra.mxu0 %v995
  %1849 = vmatpush.msra.mxu0 %v987
  %1850 = vmatpush.msra.mxu0 %v979
  %1851 = vmatpush.msra.mxu0 %v971
  %1852 = vmatpush.msra.mxu0 %v963
  %1853 = vmatmul.f32.gmra.mxu0 %v1227
  %v1854 = vpop.f32.mrf.mxu0
  %v1855 = vadd.f32 %v1835, %v1854
  %1856 = vdwg.mxu0
  %1857 = vmatpush.msra.mxu0 %v1211
  %1858 = vmatpush.msra.mxu0 %v1203
  %1859 = vmatpush.msra.mxu0 %v1195
  %1860 = vmatpush.msra.mxu0 %v1187
  %1861 = vmatpush.msra.mxu0 %v1179
  %1862 = vmatpush.msra.mxu0 %v1171
  %1863 = vmatpush.msra.mxu0 %v1163
  %1864 = vmatpush.msra.mxu0 %v1155
  %1865 = vmatpush.msra.mxu0 %v1147
  %1866 = vmatpush.msra.mxu0 %v1139
  %1867 = vmatpush.msra.mxu0 %v1131
  %1868 = vmatpush.msra.mxu0 %v1123
  %1869 = vmatpush.msra.mxu0 %v1115
  %1870 = vmatpush.msra.mxu0 %v1107
  %1871 = vmatpush.msra.mxu0 %v1099
  %1872 = vmatpush.msra.mxu0 %v1091
  %1873 = vmatmul.f32.gmra.mxu0 %v1228
  %v1874 = vpop.f32.mrf.mxu0
  %v1875 = vadd.f32 %v1855, %v1874
  %1876 = vdwg.mxu0
  %1877 = vmatpush.msra.mxu0 %v316
  %1878 = vmatpush.msra.mxu0 %v308
  %1879 = vmatpush.msra.mxu0 %v300
  %1880 = vmatpush.msra.mxu0 %v292
  %1881 = vmatpush.msra.mxu0 %v284
  %1882 = vmatpush.msra.mxu0 %v276
  %1883 = vmatpush.msra.mxu0 %v268
  %1884 = vmatpush.msra.mxu0 %v260
  %1885 = vmatpush.msra.mxu0 %v252
  %1886 = vmatpush.msra.mxu0 %v244
  %1887 = vmatpush.msra.mxu0 %v236
  %1888 = vmatpush.msra.mxu0 %v228
  %1889 = vmatpush.msra.mxu0 %v220
  %1890 = vmatpush.msra.mxu0 %v212
  %1891 = vmatpush.msra.mxu0 %v204
  %1892 = vmatpush.msra.mxu0 %v196
  %1893 = vmatmul.f32.gmra.mxu0 %v1221
  %v1894 = vpop.f32.mrf.mxu0
  %v1895 = vadd.f32 0.0, %v1894
  %1896 = vdwg.mxu0
  %1897 = vmatpush.msra.mxu0 %v444
  %1898 = vmatpush.msra.mxu0 %v436
  %1899 = vmatpush.msra.mxu0 %v428
  %1900 = vmatpush.msra.mxu0 %v420
  %1901 = vmatpush.msra.mxu0 %v412
  %1902 = vmatpush.msra.mxu0 %v404
  %1903 = vmatpush.msra.mxu0 %v396
  %1904 = vmatpush.msra.mxu0 %v388
  %1905 = vmatpush.msra.mxu0 %v380
  %1906 = vmatpush.msra.mxu0 %v372
  %1907 = vmatpush.msra.mxu0 %v364
  %1908 = vmatpush.msra.mxu0 %v356
  %1909 = vmatpush.msra.mxu0 %v348
  %1910 = vmatpush.msra.mxu0 %v340
  %1911 = vmatpush.msra.mxu0 %v332
  %1912 = vmatpush.msra.mxu0 %v324
  %1913 = vmatmul.f32.gmra.mxu0 %v1222
  %v1914 = vpop.f32.mrf.mxu0
  %v1915 = vadd.f32 %v1895, %v1914
  %1916 = vdwg.mxu0
  %1917 = vmatpush.msra.mxu0 %v572
  %1918 = vmatpush.msra.mxu0 %v564
  %1919 = vmatpush.msra.mxu0 %v556
  %1920 = vmatpush.msra.mxu0 %v548
  %1921 = vmatpush.msra.mxu0 %v540
  %1922 = vmatpush.msra.mxu0 %v532
  %1923 = vmatpush.msra.mxu0 %v524
  %1924 = vmatpush.msra.mxu0 %v516
  %1925 = vmatpush.msra.mxu0 %v508
  %1926 = vmatpush.msra.mxu0 %v500
  %1927 = vmatpush.msra.mxu0 %v492
  %1928 = vmatpush.msra.mxu0 %v484
  %1929 = vmatpush.msra.mxu0 %v476
  %1930 = vmatpush.msra.mxu0 %v468
  %1931 = vmatpush.msra.mxu0 %v460
  %1932 = vmatpush.msra.mxu0 %v452
  %1933 = vmatmul.f32.gmra.mxu0 %v1223
  %v1934 = vpop.f32.mrf.mxu0
  %v1935 = vadd.f32 %v1915, %v1934
  %1936 = vdwg.mxu0
  %1937 = vmatpush.msra.mxu0 %v700
  %1938 = vmatpush.msra.mxu0 %v692
  %1939 = vmatpush.msra.mxu0 %v684
  %1940 = vmatpush.msra.mxu0 %v676
  %1941 = vmatpush.msra.mxu0 %v668
  %1942 = vmatpush.msra.mxu0 %v660
  %1943 = vmatpush.msra.mxu0 %v652
  %1944 = vmatpush.msra.mxu0 %v644
  %1945 = vmatpush.msra.mxu0 %v636
  %1946 = vmatpush.msra.mxu0 %v628
  %1947 = vmatpush.msra.mxu0 %v620
  %1948 = vmatpush.msra.mxu0 %v612
  %1949 = vmatpush.msra.mxu0 %v604
  %1950 = vmatpush.msra.mxu0 %v596
  %1951 = vmatpush.msra.mxu0 %v588
  %1952 = vmatpush.msra.mxu0 %v580
  %1953 = vmatmul.f32.gmra.mxu0 %v1224
  %v1954 = vpop.f32.mrf.mxu0
  %v1955 = vadd.f32 %v1935, %v1954
  %1956 = vdwg.mxu0
  %1957 = vmatpush.msra.mxu0 %v828
  %1958 = vmatpush.msra.mxu0 %v820
  %1959 = vmatpush.msra.mxu0 %v812
  %1960 = vmatpush.msra.mxu0 %v804
  %1961 = vmatpush.msra.mxu0 %v796
  %1962 = vmatpush.msra.mxu0 %v788
  %1963 = vmatpush.msra.mxu0 %v780
  %1964 = vmatpush.msra.mxu0 %v772
  %1965 = vmatpush.msra.mxu0 %v764
  %1966 = vmatpush.msra.mxu0 %v756
  %1967 = vmatpush.msra.mxu0 %v748
  %1968 = vmatpush.msra.mxu0 %v740
  %1969 = vmatpush.msra.mxu0 %v732
  %1970 = vmatpush.msra.mxu0 %v724
  %1971 = vmatpush.msra.mxu0 %v716
  %1972 = vmatpush.msra.mxu0 %v708
  %1973 = vmatmul.f32.gmra.mxu0 %v1225
  %v1974 = vpop.f32.mrf.mxu0
  %v1975 = vadd.f32 %v1955, %v1974
  %1976 = vdwg.mxu0
  %1977 = vmatpush.msra.mxu0 %v956
  %1978 = vmatpush.msra.mxu0 %v948
  %1979 = vmatpush.msra.mxu0 %v940
  %1980 = vmatpush.msra.mxu0 %v932
  %1981 = vmatpush.msra.mxu0 %v924
  %1982 = vmatpush.msra.mxu0 %v916
  %1983 = vmatpush.msra.mxu0 %v908
  %1984 = vmatpush.msra.mxu0 %v900
  %1985 = vmatpush.msra.mxu0 %v892
  %1986 = vmatpush.msra.mxu0 %v884
  %1987 = vmatpush.msra.mxu0 %v876
  %1988 = vmatpush.msra.mxu0 %v868
  %1989 = vmatpush.msra.mxu0 %v860
  %1990 = vmatpush.msra.mxu0 %v852
  %1991 = vmatpush.msra.mxu0 %v844
  %1992 = vmatpush.msra.mxu0 %v836
  %1993 = vmatmul.f32.gmra.mxu0 %v1226
  %v1994 = vpop.f32.mrf.mxu0
  %v1995 = vadd.f32 %v1975, %v1994
  %1996 = vdwg.mxu0
  %1997 = vmatpush.msra.mxu0 %v1084
  %1998 = vmatpush.msra.mxu0 %v1076
  %1999 = vmatpush.msra.mxu0 %v1068
  %2000 = vmatpush.msra.mxu0 %v1060
  %2001 = vmatpush.msra.mxu0 %v1052
  %2002 = vmatpush.msra.mxu0 %v1044
  %2003 = vmatpush.msra.mxu0 %v1036
  %2004 = vmatpush.msra.mxu0 %v1028
  %2005 = vmatpush.msra.mxu0 %v1020
  %2006 = vmatpush.msra.mxu0 %v1012
  %2007 = vmatpush.msra.mxu0 %v1004
  %2008 = vmatpush.msra.mxu0 %v996
  %2009 = vmatpush.msra.mxu0 %v988
  %2010 = vmatpush.msra.mxu0 %v980
  %2011 = vmatpush.msra.mxu0 %v972
  %2012 = vmatpush.msra.mxu0 %v964
  %2013 = vmatmul.f32.gmra.mxu0 %v1227
  %v2014 = vpop.f32.mrf.mxu0
  %v2015 = vadd.f32 %v1995, %v2014
  %2016 = vdwg.mxu0
  %2017 = vmatpush.msra.mxu0 %v1212
  %2018 = vmatpush.msra.mxu0 %v1204
  %2019 = vmatpush.msra.mxu0 %v1196
  %2020 = vmatpush.msra.mxu0 %v1188
  %2021 = vmatpush.msra.mxu0 %v1180
  %2022 = vmatpush.msra.mxu0 %v1172
  %2023 = vmatpush.msra.mxu0 %v1164
  %2024 = vmatpush.msra.mxu0 %v1156
  %2025 = vmatpush.msra.mxu0 %v1148
  %2026 = vmatpush.msra.mxu0 %v1140
  %2027 = vmatpush.msra.mxu0 %v1132
  %2028 = vmatpush.msra.mxu0 %v1124
  %2029 = vmatpush.msra.mxu0 %v1116
  %2030 = vmatpush.msra.mxu0 %v1108
  %2031 = vmatpush.msra.mxu0 %v1100
  %2032 = vmatpush.msra.mxu0 %v1092
  %2033 = vmatmul.f32.gmra.mxu0 %v1228
  %v2034 = vpop.f32.mrf.mxu0
  %v2035 = vadd.f32 %v2015, %v2034
  %2036 = vdwg.mxu0
  %2037 = vmatpush.msra.mxu0 %v317
  %2038 = vmatpush.msra.mxu0 %v309
  %2039 = vmatpush.msra.mxu0 %v301
  %2040 = vmatpush.msra.mxu0 %v293
  %2041 = vmatpush.msra.mxu0 %v285
  %2042 = vmatpush.msra.mxu0 %v277
  %2043 = vmatpush.msra.mxu0 %v269
  %2044 = vmatpush.msra.mxu0 %v261
  %2045 = vmatpush.msra.mxu0 %v253
  %2046 = vmatpush.msra.mxu0 %v245
  %2047 = vmatpush.msra.mxu0 %v237
  %2048 = vmatpush.msra.mxu0 %v229
  %2049 = vmatpush.msra.mxu0 %v221
  %2050 = vmatpush.msra.mxu0 %v213
  %2051 = vmatpush.msra.mxu0 %v205
  %2052 = vmatpush.msra.mxu0 %v197
  %2053 = vmatmul.f32.gmra.mxu0 %v1221
  %v2054 = vpop.f32.mrf.mxu0
  %v2055 = vadd.f32 0.0, %v2054
  %2056 = vdwg.mxu0
  %2057 = vmatpush.msra.mxu0 %v445
  %2058 = vmatpush.msra.mxu0 %v437
  %2059 = vmatpush.msra.mxu0 %v429
  %2060 = vmatpush.msra.mxu0 %v421
  %2061 = vmatpush.msra.mxu0 %v413
  %2062 = vmatpush.msra.mxu0 %v405
  %2063 = vmatpush.msra.mxu0 %v397
  %2064 = vmatpush.msra.mxu0 %v389
  %2065 = vmatpush.msra.mxu0 %v381
  %2066 = vmatpush.msra.mxu0 %v373
  %2067 = vmatpush.msra.mxu0 %v365
  %2068 = vmatpush.msra.mxu0 %v357
  %2069 = vmatpush.msra.mxu0 %v349
  %2070 = vmatpush.msra.mxu0 %v341
  %2071 = vmatpush.msra.mxu0 %v333
  %2072 = vmatpush.msra.mxu0 %v325
  %2073 = vmatmul.f32.gmra.mxu0 %v1222
  %v2074 = vpop.f32.mrf.mxu0
  %v2075 = vadd.f32 %v2055, %v2074
  %2076 = vdwg.mxu0
  %2077 = vmatpush.msra.mxu0 %v573
  %2078 = vmatpush.msra.mxu0 %v565
  %2079 = vmatpush.msra.mxu0 %v557
  %2080 = vmatpush.msra.mxu0 %v549
  %2081 = vmatpush.msra.mxu0 %v541
  %2082 = vmatpush.msra.mxu0 %v533
  %2083 = vmatpush.msra.mxu0 %v525
  %2084 = vmatpush.msra.mxu0 %v517
  %2085 = vmatpush.msra.mxu0 %v509
  %2086 = vmatpush.msra.mxu0 %v501
  %2087 = vmatpush.msra.mxu0 %v493
  %2088 = vmatpush.msra.mxu0 %v485
  %2089 = vmatpush.msra.mxu0 %v477
  %2090 = vmatpush.msra.mxu0 %v469
  %2091 = vmatpush.msra.mxu0 %v461
  %2092 = vmatpush.msra.mxu0 %v453
  %2093 = vmatmul.f32.gmra.mxu0 %v1223
  %v2094 = vpop.f32.mrf.mxu0
  %v2095 = vadd.f32 %v2075, %v2094
  %2096 = vdwg.mxu0
  %2097 = vmatpush.msra.mxu0 %v701
  %2098 = vmatpush.msra.mxu0 %v693
  %2099 = vmatpush.msra.mxu0 %v685
  %2100 = vmatpush.msra.mxu0 %v677
  %2101 = vmatpush.msra.mxu0 %v669
  %2102 = vmatpush.msra.mxu0 %v661
  %2103 = vmatpush.msra.mxu0 %v653
  %2104 = vmatpush.msra.mxu0 %v645
  %2105 = vmatpush.msra.mxu0 %v637
  %2106 = vmatpush.msra.mxu0 %v629
  %2107 = vmatpush.msra.mxu0 %v621
  %2108 = vmatpush.msra.mxu0 %v613
  %2109 = vmatpush.msra.mxu0 %v605
  %2110 = vmatpush.msra.mxu0 %v597
  %2111 = vmatpush.msra.mxu0 %v589
  %2112 = vmatpush.msra.mxu0 %v581
  %2113 = vmatmul.f32.gmra.mxu0 %v1224
  %v2114 = vpop.f32.mrf.mxu0
  %v2115 = vadd.f32 %v2095, %v2114
  %2116 = vdwg.mxu0
  %2117 = vmatpush.msra.mxu0 %v829
  %2118 = vmatpush.msra.mxu0 %v821
  %2119 = vmatpush.msra.mxu0 %v813
  %2120 = vmatpush.msra.mxu0 %v805
  %2121 = vmatpush.msra.mxu0 %v797
  %2122 = vmatpush.msra.mxu0 %v789
  %2123 = vmatpush.msra.mxu0 %v781
  %2124 = vmatpush.msra.mxu0 %v773
  %2125 = vmatpush.msra.mxu0 %v765
  %2126 = vmatpush.msra.mxu0 %v757
  %2127 = vmatpush.msra.mxu0 %v749
  %2128 = vmatpush.msra.mxu0 %v741
  %2129 = vmatpush.msra.mxu0 %v733
  %2130 = vmatpush.msra.mxu0 %v725
  %2131 = vmatpush.msra.mxu0 %v717
  %2132 = vmatpush.msra.mxu0 %v709
  %2133 = vmatmul.f32.gmra.mxu0 %v1225
  %v2134 = vpop.f32.mrf.mxu0
  %v2135 = vadd.f32 %v2115, %v2134
  %2136 = vdwg.mxu0
  %2137 = vmatpush.msra.mxu0 %v957
  %2138 = vmatpush.msra.mxu0 %v949
  %2139 = vmatpush.msra.mxu0 %v941
  %2140 = vmatpush.msra.mxu0 %v933
  %2141 = vmatpush.msra.mxu0 %v925
  %2142 = vmatpush.msra.mxu0 %v917
  %2143 = vmatpush.msra.mxu0 %v909
  %2144 = vmatpush.msra.mxu0 %v901
  %2145 = vmatpush.msra.mxu0 %v893
  %2146 = vmatpush.msra.mxu0 %v885
  %2147 = vmatpush.msra.mxu0 %v877
  %2148 = vmatpush.msra.mxu0 %v869
  %2149 = vmatpush.msra.mxu0 %v861
  %2150 = vmatpush.msra.mxu0 %v853
  %2151 = vmatpush.msra.mxu0 %v845
  %2152 = vmatpush.msra.mxu0 %v837
  %2153 = vmatmul.f32.gmra.mxu0 %v1226
  %v2154 = vpop.f32.mrf.mxu0
  %v2155 = vadd.f32 %v2135, %v2154
  %2156 = vdwg.mxu0
  %2157 = vmatpush.msra.mxu0 %v1085
  %2158 = vmatpush.msra.mxu0 %v1077
  %2159 = vmatpush.msra.mxu0 %v1069
  %2160 = vmatpush.msra.mxu0 %v1061
  %2161 = vmatpush.msra.mxu0 %v1053
  %2162 = vmatpush.msra.mxu0 %v1045
  %2163 = vmatpush.msra.mxu0 %v1037
  %2164 = vmatpush.msra.mxu0 %v1029
  %2165 = vmatpush.msra.mxu0 %v1021
  %2166 = vmatpush.msra.mxu0 %v1013
  %2167 = vmatpush.msra.mxu0 %v1005
  %2168 = vmatpush.msra.mxu0 %v997
  %2169 = vmatpush.msra.mxu0 %v989
  %2170 = vmatpush.msra.mxu0 %v981
  %2171 = vmatpush.msra.mxu0 %v973
  %2172 = vmatpush.msra.mxu0 %v965
  %2173 = vmatmul.f32.gmra.mxu0 %v1227
  %v2174 = vpop.f32.mrf.mxu0
  %v2175 = vadd.f32 %v2155, %v2174
  %2176 = vdwg.mxu0
  %2177 = vmatpush.msra.mxu0 %v1213
  %2178 = vmatpush.msra.mxu0 %v1205
  %2179 = vmatpush.msra.mxu0 %v1197
  %2180 = vmatpush.msra.mxu0 %v1189
  %2181 = vmatpush.msra.mxu0 %v1181
  %2182 = vmatpush.msra.mxu0 %v1173
  %2183 = vmatpush.msra.mxu0 %v1165
  %2184 = vmatpush.msra.mxu0 %v1157
  %2185 = vmatpush.msra.mxu0 %v1149
  %2186 = vmatpush.msra.mxu0 %v1141
  %2187 = vmatpush.msra.mxu0 %v1133
  %2188 = vmatpush.msra.mxu0 %v1125
  %2189 = vmatpush.msra.mxu0 %v1117
  %2190 = vmatpush.msra.mxu0 %v1109
  %2191 = vmatpush.msra.mxu0 %v1101
  %2192 = vmatpush.msra.mxu0 %v1093
  %2193 = vmatmul.f32.gmra.mxu0 %v1228
  %v2194 = vpop.f32.mrf.mxu0
  %v2195 = vadd.f32 %v2175, %v2194
  %2196 = vdwg.mxu0
  %2197 = vmatpush.msra.mxu0 %v318
  %2198 = vmatpush.msra.mxu0 %v310
  %2199 = vmatpush.msra.mxu0 %v302
  %2200 = vmatpush.msra.mxu0 %v294
  %2201 = vmatpush.msra.mxu0 %v286
  %2202 = vmatpush.msra.mxu0 %v278
  %2203 = vmatpush.msra.mxu0 %v270
  %2204 = vmatpush.msra.mxu0 %v262
  %2205 = vmatpush.msra.mxu0 %v254
  %2206 = vmatpush.msra.mxu0 %v246
  %2207 = vmatpush.msra.mxu0 %v238
  %2208 = vmatpush.msra.mxu0 %v230
  %2209 = vmatpush.msra.mxu0 %v222
  %2210 = vmatpush.msra.mxu0 %v214
  %2211 = vmatpush.msra.mxu0 %v206
  %2212 = vmatpush.msra.mxu0 %v198
  %2213 = vmatmul.f32.gmra.mxu0 %v1221
  %v2214 = vpop.f32.mrf.mxu0
  %v2215 = vadd.f32 0.0, %v2214
  %2216 = vdwg.mxu0
  %2217 = vmatpush.msra.mxu0 %v446
  %2218 = vmatpush.msra.mxu0 %v438
  %2219 = vmatpush.msra.mxu0 %v430
  %2220 = vmatpush.msra.mxu0 %v422
  %2221 = vmatpush.msra.mxu0 %v414
  %2222 = vmatpush.msra.mxu0 %v406
  %2223 = vmatpush.msra.mxu0 %v398
  %2224 = vmatpush.msra.mxu0 %v390
  %2225 = vmatpush.msra.mxu0 %v382
  %2226 = vmatpush.msra.mxu0 %v374
  %2227 = vmatpush.msra.mxu0 %v366
  %2228 = vmatpush.msra.mxu0 %v358
  %2229 = vmatpush.msra.mxu0 %v350
  %2230 = vmatpush.msra.mxu0 %v342
  %2231 = vmatpush.msra.mxu0 %v334
  %2232 = vmatpush.msra.mxu0 %v326
  %2233 = vmatmul.f32.gmra.mxu0 %v1222
  %v2234 = vpop.f32.mrf.mxu0
  %v2235 = vadd.f32 %v2215, %v2234
  %2236 = vdwg.mxu0
  %2237 = vmatpush.msra.mxu0 %v574
  %2238 = vmatpush.msra.mxu0 %v566
  %2239 = vmatpush.msra.mxu0 %v558
  %2240 = vmatpush.msra.mxu0 %v550
  %2241 = vmatpush.msra.mxu0 %v542
  %2242 = vmatpush.msra.mxu0 %v534
  %2243 = vmatpush.msra.mxu0 %v526
  %2244 = vmatpush.msra.mxu0 %v518
  %2245 = vmatpush.msra.mxu0 %v510
  %2246 = vmatpush.msra.mxu0 %v502
  %2247 = vmatpush.msra.mxu0 %v494
  %2248 = vmatpush.msra.mxu0 %v486
  %2249 = vmatpush.msra.mxu0 %v478
  %2250 = vmatpush.msra.mxu0 %v470
  %2251 = vmatpush.msra.mxu0 %v462
  %2252 = vmatpush.msra.mxu0 %v454
  %2253 = vmatmul.f32.gmra.mxu0 %v1223
  %v2254 = vpop.f32.mrf.mxu0
  %v2255 = vadd.f32 %v2235, %v2254
  %2256 = vdwg.mxu0
  %2257 = vmatpush.msra.mxu0 %v702
  %2258 = vmatpush.msra.mxu0 %v694
  %2259 = vmatpush.msra.mxu0 %v686
  %2260 = vmatpush.msra.mxu0 %v678
  %2261 = vmatpush.msra.mxu0 %v670
  %2262 = vmatpush.msra.mxu0 %v662
  %2263 = vmatpush.msra.mxu0 %v654
  %2264 = vmatpush.msra.mxu0 %v646
  %2265 = vmatpush.msra.mxu0 %v638
  %2266 = vmatpush.msra.mxu0 %v630
  %2267 = vmatpush.msra.mxu0 %v622
  %2268 = vmatpush.msra.mxu0 %v614
  %2269 = vmatpush.msra.mxu0 %v606
  %2270 = vmatpush.msra.mxu0 %v598
  %2271 = vmatpush.msra.mxu0 %v590
  %2272 = vmatpush.msra.mxu0 %v582
  %2273 = vmatmul.f32.gmra.mxu0 %v1224
  %v2274 = vpop.f32.mrf.mxu0
  %v2275 = vadd.f32 %v2255, %v2274
  %2276 = vdwg.mxu0
  %2277 = vmatpush.msra.mxu0 %v830
  %2278 = vmatpush.msra.mxu0 %v822
  %2279 = vmatpush.msra.mxu0 %v814
  %2280 = vmatpush.msra.mxu0 %v806
  %2281 = vmatpush.msra.mxu0 %v798
  %2282 = vmatpush.msra.mxu0 %v790
  %2283 = vmatpush.msra.mxu0 %v782
  %2284 = vmatpush.msra.mxu0 %v774
  %2285 = vmatpush.msra.mxu0 %v766
  %2286 = vmatpush.msra.mxu0 %v758
  %2287 = vmatpush.msra.mxu0 %v750
  %2288 = vmatpush.msra.mxu0 %v742
  %2289 = vmatpush.msra.mxu0 %v734
  %2290 = vmatpush.msra.mxu0 %v726
  %2291 = vmatpush.msra.mxu0 %v718
  %2292 = vmatpush.msra.mxu0 %v710
  %2293 = vmatmul.f32.gmra.mxu0 %v1225
  %v2294 = vpop.f32.mrf.mxu0
  %v2295 = vadd.f32 %v2275, %v2294
  %2296 = vdwg.mxu0
  %2297 = vmatpush.msra.mxu0 %v958
  %2298 = vmatpush.msra.mxu0 %v950
  %2299 = vmatpush.msra.mxu0 %v942
  %2300 = vmatpush.msra.mxu0 %v934
  %2301 = vmatpush.msra.mxu0 %v926
  %2302 = vmatpush.msra.mxu0 %v918
  %2303 = vmatpush.msra.mxu0 %v910
  %2304 = vmatpush.msra.mxu0 %v902
  %2305 = vmatpush.msra.mxu0 %v894
  %2306 = vmatpush.msra.mxu0 %v886
  %2307 = vmatpush.msra.mxu0 %v878
  %2308 = vmatpush.msra.mxu0 %v870
  %2309 = vmatpush.msra.mxu0 %v862
  %2310 = vmatpush.msra.mxu0 %v854
  %2311 = vmatpush.msra.mxu0 %v846
  %2312 = vmatpush.msra.mxu0 %v838
  %2313 = vmatmul.f32.gmra.mxu0 %v1226
  %v2314 = vpop.f32.mrf.mxu0
  %v2315 = vadd.f32 %v2295, %v2314
  %2316 = vdwg.mxu0
  %2317 = vmatpush.msra.mxu0 %v1086
  %2318 = vmatpush.msra.mxu0 %v1078
  %2319 = vmatpush.msra.mxu0 %v1070
  %2320 = vmatpush.msra.mxu0 %v1062
  %2321 = vmatpush.msra.mxu0 %v1054
  %2322 = vmatpush.msra.mxu0 %v1046
  %2323 = vmatpush.msra.mxu0 %v1038
  %2324 = vmatpush.msra.mxu0 %v1030
  %2325 = vmatpush.msra.mxu0 %v1022
  %2326 = vmatpush.msra.mxu0 %v1014
  %2327 = vmatpush.msra.mxu0 %v1006
  %2328 = vmatpush.msra.mxu0 %v998
  %2329 = vmatpush.msra.mxu0 %v990
  %2330 = vmatpush.msra.mxu0 %v982
  %2331 = vmatpush.msra.mxu0 %v974
  %2332 = vmatpush.msra.mxu0 %v966
  %2333 = vmatmul.f32.gmra.mxu0 %v1227
  %v2334 = vpop.f32.mrf.mxu0
  %v2335 = vadd.f32 %v2315, %v2334
  %2336 = vdwg.mxu0
  %2337 = vmatpush.msra.mxu0 %v1214
  %2338 = vmatpush.msra.mxu0 %v1206
  %2339 = vmatpush.msra.mxu0 %v1198
  %2340 = vmatpush.msra.mxu0 %v1190
  %2341 = vmatpush.msra.mxu0 %v1182
  %2342 = vmatpush.msra.mxu0 %v1174
  %2343 = vmatpush.msra.mxu0 %v1166
  %2344 = vmatpush.msra.mxu0 %v1158
  %2345 = vmatpush.msra.mxu0 %v1150
  %2346 = vmatpush.msra.mxu0 %v1142
  %2347 = vmatpush.msra.mxu0 %v1134
  %2348 = vmatpush.msra.mxu0 %v1126
  %2349 = vmatpush.msra.mxu0 %v1118
  %2350 = vmatpush.msra.mxu0 %v1110
  %2351 = vmatpush.msra.mxu0 %v1102
  %2352 = vmatpush.msra.mxu0 %v1094
  %2353 = vmatmul.f32.gmra.mxu0 %v1228
  %v2354 = vpop.f32.mrf.mxu0
  %v2355 = vadd.f32 %v2335, %v2354
  %2356 = vdwg.mxu0
  %2357 = vmatpush.msra.mxu0 %v319
  %2358 = vmatpush.msra.mxu0 %v311
  %2359 = vmatpush.msra.mxu0 %v303
  %2360 = vmatpush.msra.mxu0 %v295
  %2361 = vmatpush.msra.mxu0 %v287
  %2362 = vmatpush.msra.mxu0 %v279
  %2363 = vmatpush.msra.mxu0 %v271
  %2364 = vmatpush.msra.mxu0 %v263
  %2365 = vmatpush.msra.mxu0 %v255
  %2366 = vmatpush.msra.mxu0 %v247
  %2367 = vmatpush.msra.mxu0 %v239
  %2368 = vmatpush.msra.mxu0 %v231
  %2369 = vmatpush.msra.mxu0 %v223
  %2370 = vmatpush.msra.mxu0 %v215
  %2371 = vmatpush.msra.mxu0 %v207
  %2372 = vmatpush.msra.mxu0 %v199
  %2373 = vmatmul.f32.gmra.mxu0 %v1221
  %v2374 = vpop.f32.mrf.mxu0
  %v2375 = vadd.f32 0.0, %v2374
  %2376 = vdwg.mxu0
  %2377 = vmatpush.msra.mxu0 %v447
  %2378 = vmatpush.msra.mxu0 %v439
  %2379 = vmatpush.msra.mxu0 %v431
  %2380 = vmatpush.msra.mxu0 %v423
  %2381 = vmatpush.msra.mxu0 %v415
  %2382 = vmatpush.msra.mxu0 %v407
  %2383 = vmatpush.msra.mxu0 %v399
  %2384 = vmatpush.msra.mxu0 %v391
  %2385 = vmatpush.msra.mxu0 %v383
  %2386 = vmatpush.msra.mxu0 %v375
  %2387 = vmatpush.msra.mxu0 %v367
  %2388 = vmatpush.msra.mxu0 %v359
  %2389 = vmatpush.msra.mxu0 %v351
  %2390 = vmatpush.msra.mxu0 %v343
  %2391 = vmatpush.msra.mxu0 %v335
  %2392 = vmatpush.msra.mxu0 %v327
  %2393 = vmatmul.f32.gmra.mxu0 %v1222
  %v2394 = vpop.f32.mrf.mxu0
  %v2395 = vadd.f32 %v2375, %v2394
  %2396 = vdwg.mxu0
  %2397 = vmatpush.msra.mxu0 %v575
  %2398 = vmatpush.msra.mxu0 %v567
  %2399 = vmatpush.msra.mxu0 %v559
  %2400 = vmatpush.msra.mxu0 %v551
  %2401 = vmatpush.msra.mxu0 %v543
  %2402 = vmatpush.msra.mxu0 %v535
  %2403 = vmatpush.msra.mxu0 %v527
  %2404 = vmatpush.msra.mxu0 %v519
  %2405 = vmatpush.msra.mxu0 %v511
  %2406 = vmatpush.msra.mxu0 %v503
  %2407 = vmatpush.msra.mxu0 %v495
  %2408 = vmatpush.msra.mxu0 %v487
  %2409 = vmatpush.msra.mxu0 %v479
  %2410 = vmatpush.msra.mxu0 %v471
  %2411 = vmatpush.msra.mxu0 %v463
  %2412 = vmatpush.msra.mxu0 %v455
  %2413 = vmatmul.f32.gmra.mxu0 %v1223
  %v2414 = vpop.f32.mrf.mxu0
  %v2415 = vadd.f32 %v2395, %v2414
  %2416 = vdwg.mxu0
  %2417 = vmatpush.msra.mxu0 %v703
  %2418 = vmatpush.msra.mxu0 %v695
  %2419 = vmatpush.msra.mxu0 %v687
  %2420 = vmatpush.msra.mxu0 %v679
  %2421 = vmatpush.msra.mxu0 %v671
  %2422 = vmatpush.msra.mxu0 %v663
  %2423 = vmatpush.msra.mxu0 %v655
  %2424 = vmatpush.msra.mxu0 %v647
  %2425 = vmatpush.msra.mxu0 %v639
  %2426 = vmatpush.msra.mxu0 %v631
  %2427 = vmatpush.msra.mxu0 %v623
  %2428 = vmatpush.msra.mxu0 %v615
  %2429 = vmatpush.msra.mxu0 %v607
  %2430 = vmatpush.msra.mxu0 %v599
  %2431 = vmatpush.msra.mxu0 %v591
  %2432 = vmatpush.msra.mxu0 %v583
  %2433 = vmatmul.f32.gmra.mxu0 %v1224
  %v2434 = vpop.f32.mrf.mxu0
  %v2435 = vadd.f32 %v2415, %v2434
  %2436 = vdwg.mxu0
  %2437 = vmatpush.msra.mxu0 %v831
  %2438 = vmatpush.msra.mxu0 %v823
  %2439 = vmatpush.msra.mxu0 %v815
  %2440 = vmatpush.msra.mxu0 %v807
  %2441 = vmatpush.msra.mxu0 %v799
  %2442 = vmatpush.msra.mxu0 %v791
  %2443 = vmatpush.msra.mxu0 %v783
  %2444 = vmatpush.msra.mxu0 %v775
  %2445 = vmatpush.msra.mxu0 %v767
  %2446 = vmatpush.msra.mxu0 %v759
  %2447 = vmatpush.msra.mxu0 %v751
  %2448 = vmatpush.msra.mxu0 %v743
  %2449 = vmatpush.msra.mxu0 %v735
  %2450 = vmatpush.msra.mxu0 %v727
  %2451 = vmatpush.msra.mxu0 %v719
  %2452 = vmatpush.msra.mxu0 %v711
  %2453 = vmatmul.f32.gmra.mxu0 %v1225
  %v2454 = vpop.f32.mrf.mxu0
  %v2455 = vadd.f32 %v2435, %v2454
  %2456 = vdwg.mxu0
  %2457 = vmatpush.msra.mxu0 %v959
  %2458 = vmatpush.msra.mxu0 %v951
  %2459 = vmatpush.msra.mxu0 %v943
  %2460 = vmatpush.msra.mxu0 %v935
  %2461 = vmatpush.msra.mxu0 %v927
  %2462 = vmatpush.msra.mxu0 %v919
  %2463 = vmatpush.msra.mxu0 %v911
  %2464 = vmatpush.msra.mxu0 %v903
  %2465 = vmatpush.msra.mxu0 %v895
  %2466 = vmatpush.msra.mxu0 %v887
  %2467 = vmatpush.msra.mxu0 %v879
  %2468 = vmatpush.msra.mxu0 %v871
  %2469 = vmatpush.msra.mxu0 %v863
  %2470 = vmatpush.msra.mxu0 %v855
  %2471 = vmatpush.msra.mxu0 %v847
  %2472 = vmatpush.msra.mxu0 %v839
  %2473 = vmatmul.f32.gmra.mxu0 %v1226
  %v2474 = vpop.f32.mrf.mxu0
  %v2475 = vadd.f32 %v2455, %v2474
  %2476 = vdwg.mxu0
  %2477 = vmatpush.msra.mxu0 %v1087
  %2478 = vmatpush.msra.mxu0 %v1079
  %2479 = vmatpush.msra.mxu0 %v1071
  %2480 = vmatpush.msra.mxu0 %v1063
  %2481 = vmatpush.msra.mxu0 %v1055
  %2482 = vmatpush.msra.mxu0 %v1047
  %2483 = vmatpush.msra.mxu0 %v1039
  %2484 = vmatpush.msra.mxu0 %v1031
  %2485 = vmatpush.msra.mxu0 %v1023
  %2486 = vmatpush.msra.mxu0 %v1015
  %2487 = vmatpush.msra.mxu0 %v1007
  %2488 = vmatpush.msra.mxu0 %v999
  %2489 = vmatpush.msra.mxu0 %v991
  %2490 = vmatpush.msra.mxu0 %v983
  %2491 = vmatpush.msra.mxu0 %v975
  %2492 = vmatpush.msra.mxu0 %v967
  %2493 = vmatmul.f32.gmra.mxu0 %v1227
  %v2494 = vpop.f32.mrf.mxu0
  %v2495 = vadd.f32 %v2475, %v2494
  %2496 = vdwg.mxu0
  %2497 = vmatpush.msra.mxu0 %v1215
  %2498 = vmatpush.msra.mxu0 %v1207
  %2499 = vmatpush.msra.mxu0 %v1199
  %2500 = vmatpush.msra.mxu0 %v1191
  %2501 = vmatpush.msra.mxu0 %v1183
  %2502 = vmatpush.msra.mxu0 %v1175
  %2503 = vmatpush.msra.mxu0 %v1167
  %2504 = vmatpush.msra.mxu0 %v1159
  %2505 = vmatpush.msra.mxu0 %v1151
  %2506 = vmatpush.msra.mxu0 %v1143
  %2507 = vmatpush.msra.mxu0 %v1135
  %2508 = vmatpush.msra.mxu0 %v1127
  %2509 = vmatpush.msra.mxu0 %v1119
  %2510 = vmatpush.msra.mxu0 %v1111
  %2511 = vmatpush.msra.mxu0 %v1103
  %2512 = vmatpush.msra.mxu0 %v1095
  %2513 = vmatmul.f32.gmra.mxu0 %v1228
  %v2514 = vpop.f32.mrf.mxu0
  %v2515 = vadd.f32 %v2495, %v2514
  %2516 = vdwg.mxu0
  %v2517 = vsub.f32 %v48, %v1395
  %v2518 = vsub.f32 %v68, %v1555
  %v2519 = vsub.f32 %v88, %v1715
  %v2520 = vsub.f32 %v108, %v1875
  %v2521 = vsub.f32 %v128, %v2035
  %v2522 = vsub.f32 %v148, %v2195
  %v2523 = vsub.f32 %v168, %v2355
  %v2524 = vsub.f32 %v188, %v2515
  %v2533 = vrot.slane %v2518, 6
  %v2534 = vrot.slane %v2519, 4
  %v2535 = vrot.slane %v2520, 2
  %v2536 = vrot.slane %v2522, 6
  %v2537 = vrot.slane %v2523, 4
  %v2538 = vrot.slane %v2524, 2
  %vm2539 = vcmask 1041408
  %v2540 = vsel %vm2539, %v2517, %v2533
  %vm2541 = vcmask 1045508
  %v2542 = vsel %vm2541, %v2534, %v2535
  %vm2543 = vcmask 1043456
  %v2544 = vsel %vm2543, %v2540, %v2542
  %v2545 = vsel %vm2539, %v2521, %v2536
  %v2546 = vsel %vm2541, %v2537, %v2538
  %v2547 = vsel %vm2543, %v2545, %v2546
  %2550 = vst [vmem:[%s4] sm:$0xff] %v2544
  %2551 = vst [vmem:[%s4 + $0x8] sm:$0xff] %v2547
  // Predicated region
  $region18: #{pdem_forward.4} parent=0 // pred_check
    _
  $region19: #{pdem_forward.4} parent=0 // pred_check_branch
    %2553 = sbr.rel (0) target = $region21
  $region20: #{pdem_forward.4} parent=0 // pred_region
    _
  $region21: #{pdem_forward.4} parent=0 // pred_fallthru
    _
  // Predicated region
  $region22: #{pdem_forward.4} parent=0 // pred_check
    _
  $region23: #{pdem_forward.4} parent=0 // pred_check_branch
    %2555 = sbr.rel (0) target = $region25
  $region24: #{pdem_forward.4} parent=0 // pred_region
    _
  $region25: #{pdem_forward.4} parent=0 // pred_fallthru
    _

</llo_original>
